<compile_context>
chip_gen: v7x
topology: tpu7x:2x2x1
jax: 0.10.0
libtpu: 0.0.40
codegen_flags: <defaults>
</compile_context>

<pallas_src>
import jax
import jax.numpy as jnp
from jax.experimental import pallas as pl
from jax.experimental.pallas import tpu as pltpu

BN_EPS = 1e-5
ACT_DTYPE = jnp.bfloat16
VMEM_LIMIT = 32 * 1024 * 1024


# ---------------------------------------------------------------------------
# Pass 1a: im2col matmul + BN statistics (7x7 stem conv)
# ---------------------------------------------------------------------------
def _matmul_stats_kernel(p_ref, w_ref, y_ref, s1_ref, s2_ref):
    y = jnp.dot(p_ref[...], w_ref[...], preferred_element_type=jnp.float32)

    @pl.when(pl.program_id(0) == 0)
    def _init():
        s1_ref[...] = jnp.zeros_like(s1_ref)
        s2_ref[...] = jnp.zeros_like(s2_ref)

    s1_ref[...] += jnp.sum(y, axis=0, keepdims=True)
    s2_ref[...] += jnp.sum(y * y, axis=0, keepdims=True)
    y_ref[...] = y.astype(y_ref.dtype)


def matmul_bn_stats(patches, w, *, tile_m=256):
    """patches (M, K) bf16, w (K, C) bf16 -> y (M, C) bf16, sum / sumsq (C,) f32."""
    M, K = patches.shape
    C = w.shape[1]
    Mp = pl.cdiv(M, tile_m) * tile_m
    if Mp != M:
        # zero rows contribute nothing to sum / sum-of-squares (conv has no bias)
        patches = jnp.pad(patches, ((0, Mp - M), (0, 0)))
    y, s1, s2 = pl.pallas_call(
        _matmul_stats_kernel,
        grid=(Mp // tile_m,),
        in_specs=[
            pl.BlockSpec((tile_m, K), lambda i: (i, 0)),
            pl.BlockSpec((K, C), lambda i: (0, 0)),      # weights resident in VMEM
        ],
        out_specs=[
            pl.BlockSpec((tile_m, C), lambda i: (i, 0)),
            pl.BlockSpec((1, C), lambda i: (0, 0)),      # resident stat accumulators
            pl.BlockSpec((1, C), lambda i: (0, 0)),
        ],
        out_shape=[
            jax.ShapeDtypeStruct((Mp, C), ACT_DTYPE),
            jax.ShapeDtypeStruct((1, C), jnp.float32),
            jax.ShapeDtypeStruct((1, C), jnp.float32),
        ],
        compiler_params=pltpu.CompilerParams(
            # stats accumulate across the M grid axis -> must stay "arbitrary"
            dimension_semantics=("arbitrary",),
            vmem_limit_bytes=VMEM_LIMIT),
    )(patches, w)
    return y[:M], s1[0], s2[0]


# ---------------------------------------------------------------------------
# Pass 1b: direct 3x3 / stride-1 / pad-1 conv (no HBM im2col) + BN statistics
# ---------------------------------------------------------------------------
def _conv3x3_stats_kernel_factory(W, WP, RO, Cout):
    def kernel(x_ref, w_ref, y_ref, s1_ref, s2_ref):
        acc = jnp.zeros((RO, Cout), jnp.float32)
        for di in range(3):
            for dj in range(3):
                off = di * WP + dj
                acc = acc + jnp.dot(x_ref[0, off:off + RO, :],
                                    w_ref[di * 3 + dj],
                                    preferred_element_type=jnp.float32)

        @pl.when(pl.program_id(0) == 0)
        def _init():
            s1_ref[...] = jnp.zeros_like(s1_ref)
            s2_ref[...] = jnp.zeros_like(s2_ref)

        # mask the width-wrap "junk" columns so the BN statistics are exact
        q = jax.lax.broadcasted_iota(jnp.int32, (RO, 1), 0)
        valid = (q % WP) < W
        s1_ref[...] += jnp.sum(jnp.where(valid, acc, 0.0), axis=0, keepdims=True)
        s2_ref[...] += jnp.sum(jnp.where(valid, acc * acc, 0.0),
                               axis=0, keepdims=True)
        y_ref[0] = acc.astype(y_ref.dtype)
    return kernel


def conv3x3_bn_stats(x_nhwc, w_taps):
    """x (N,H,W,C) bf16, w_taps (9,C,Cout) bf16.

    Returns y_flat (N, H*(W+2), Cout) bf16 (2 junk columns per row, cropped
    later) plus per-channel sum / sum-of-squares over the valid output pixels.
    """
    N, H, W, C = x_nhwc.shape
    Cout = w_taps.shape[-1]
    WP = W + 2
    RO = H * WP
    # pad 1 top, 2 bottom, 1 left/right.  The extra bottom row is only touched
    # by trailing junk rows and keeps every in-kernel tap slice in bounds.
    xp = jnp.pad(x_nhwc, ((0, 0), (1, 2), (1, 1), (0, 0)))
    FI = (H + 3) * WP
    xp = xp.reshape(N, FI, C)
    y, s1, s2 = pl.pallas_call(
        _conv3x3_stats_kernel_factory(W, WP, RO, Cout),
        grid=(N,),
        in_specs=[
            pl.BlockSpec((1, FI, C), lambda n: (n, 0, 0)),
            pl.BlockSpec((9, C, Cout), lambda n: (0, 0, 0)),   # resident weights
        ],
        out_specs=[
            pl.BlockSpec((1, RO, Cout), lambda n: (n, 0, 0)),
            pl.BlockSpec((1, Cout), lambda n: (0, 0)),
            pl.BlockSpec((1, Cout), lambda n: (0, 0)),
        ],
        out_shape=[
            jax.ShapeDtypeStruct((N, RO, Cout), ACT_DTYPE),
            jax.ShapeDtypeStruct((1, Cout), jnp.float32),
            jax.ShapeDtypeStruct((1, Cout), jnp.float32),
        ],
        compiler_params=pltpu.CompilerParams(
            dimension_semantics=("arbitrary",),   # stats accumulate across images
            vmem_limit_bytes=VMEM_LIMIT),
    )(xp, w_taps)
    return y, s1[0], s2[0]


# ---------------------------------------------------------------------------
# Pass 2: lane-dense BN affine (+ residual) + ReLU
# ---------------------------------------------------------------------------
def _affine_relu_kernel(y_ref, sc_ref, sh_ref, o_ref):
    out = y_ref[...].astype(jnp.float32) * sc_ref[...] + sh_ref[...]
    o_ref[...] = jnp.maximum(out, 0.0).astype(o_ref.dtype)


def _affine_res_relu_kernel(y_ref, sc_ref, sh_ref, r_ref, o_ref):
    out = y_ref[...].astype(jnp.float32) * sc_ref[...] + sh_ref[...]
    out = out + r_ref[...].astype(jnp.float32)
    o_ref[...] = jnp.maximum(out, 0.0).astype(o_ref.dtype)


def bn_act_apply(y_flat, scale, shift, residual=None, *, tile_rows=512):
    """y*scale + shift (+ residual), ReLU, on a lane-dense (rows, 128) view.

    y_flat / residual: (R, C) bf16 with 128 % C == 0; scale / shift: (C,) f32.
    The per-channel vectors are tiled to 128 lanes so the whole pass runs on
    unmasked, 128-lane-wide vregs (f32 math, bf16 load/store).
    """
    R, C = y_flat.shape
    pack = 128 // C
    Rp = pl.cdiv(R, pack) * pack

    def lane_dense(a):
        if Rp != R:
            a = jnp.pad(a, ((0, Rp - R), (0, 0)))
        return a.reshape((Rp * C) // 128, 128)

    rows = (Rp * C) // 128
    tile = min(tile_rows, rows)
    if tile != rows:
        tile = max(8, (tile // 8) * 8)

    args = [lane_dense(y_flat),
            jnp.tile(scale.astype(jnp.float32), pack).reshape(1, 128),
            jnp.tile(shift.astype(jnp.float32), pack).reshape(1, 128)]
    in_specs = [pl.BlockSpec((tile, 128), lambda i: (i, 0)),
                pl.BlockSpec((1, 128), lambda i: (0, 0)),     # resident
                pl.BlockSpec((1, 128), lambda i: (0, 0))]
    kernel = _affine_relu_kernel
    if residual is not None:
        args.append(lane_dense(residual))
        in_specs.append(pl.BlockSpec((tile, 128), lambda i: (i, 0)))
        kernel = _affine_res_relu_kernel

    out = pl.pallas_call(
        kernel,
        grid=(pl.cdiv(rows, tile),),
        in_specs=in_specs,
        out_specs=pl.BlockSpec((tile, 128), lambda i: (i, 0)),
        out_shape=jax.ShapeDtypeStruct((rows, 128), ACT_DTYPE),
        compiler_params=pltpu.CompilerParams(
            dimension_semantics=("parallel",),   # independent tiles (v7x 2 TCs)
            vmem_limit_bytes=VMEM_LIMIT),
    )(*args)
    return out.reshape(Rp, C)[:R]


# ---------------------------------------------------------------------------
# MaxPool2d(kernel=3, stride=2, padding=1)
# ---------------------------------------------------------------------------
def _maxpool3x3_s1_kernel_factory(OH, OW):
    def kernel(x_ref, o_ref):
        m = x_ref[0, 0:OH, 0:OW, :]
        for di in range(3):
            for dj in range(3):
                if di == 0 and dj == 0:
                    continue
                m = jnp.maximum(m, x_ref[0, di:di + OH, dj:dj + OW, :])
        o_ref[0] = m.astype(o_ref.dtype)
    return kernel


def maxpool3x3_s2_p1(x_nhwc):
    """Input must be >= 0 (post-ReLU), so zero padding is equivalent to -inf."""
    N, H, W, C = x_nhwc.shape
    xp = jnp.pad(x_nhwc, ((0, 0), (1, 1), (1, 1), (0, 0)))
    y = pl.pallas_call(
        _maxpool3x3_s1_kernel_factory(H, W),
        grid=(N,),
        in_specs=[pl.BlockSpec((1, H + 2, W + 2, C), lambda n: (n, 0, 0, 0))],
        out_specs=pl.BlockSpec((1, H, W, C), lambda n: (n, 0, 0, 0)),
        out_shape=jax.ShapeDtypeStruct((N, H, W, C), ACT_DTYPE),
        compiler_params=pltpu.CompilerParams(
            dimension_semantics=("parallel",),
            vmem_limit_bytes=VMEM_LIMIT),
    )(xp)
    # stride-2 decimation of the stride-1 pooled map == kernel 3 / stride 2 / pad 1
    return y[:, ::2, ::2, :]


# ---------------------------------------------------------------------------
# Plain-JAX glue
# ---------------------------------------------------------------------------
def _out_size(n, k, s, p):
    return (n + 2 * p - k) // s + 1


def extract_conv_patches(x, kh, kw, stride, pad):
    """x (N,H,W,C) -> (N*OH*OW, kh*kw*C); taps row-major, channel minor."""
    N, H, W, C = x.shape
    xp = jnp.pad(x, ((0, 0), (pad, pad), (pad, pad), (0, 0)))
    OH = _out_size(H, kh, stride, pad)
    OW = _out_size(W, kw, stride, pad)
    taps = []
    for i in range(kh):
        for j in range(kw):
            taps.append(xp[:, i:i + (OH - 1) * stride + 1:stride,
                           j:j + (OW - 1) * stride + 1:stride, :])
    patches = jnp.concatenate(taps, axis=-1)
    return patches.reshape(N * OH * OW, kh * kw * C), OH, OW


def bn_scale_shift(s1, s2, count, gamma, beta, eps=BN_EPS):
    """Train-mode (batch stats, biased variance) BatchNorm folded to scale/shift."""
    mean = s1 / count
    var = jnp.maximum(s2 / count - mean * mean, 0.0)
    scale = gamma * jax.lax.rsqrt(var + eps)
    shift = beta - mean * scale
    return scale, shift


def basic_block(x, params):
    """torchvision BasicBlock, stride 1, no downsample (in_ch == out_ch)."""
    N, H, W, C = x.shape
    WP = W + 2
    count = N * H * W

    y1, s1, s2 = conv3x3_bn_stats(x, params["conv1"])
    sc1, sh1 = bn_scale_shift(s1, s2, count, *params["bn1"])
    h = bn_act_apply(y1.reshape(N * H * WP, C), sc1, sh1)
    h = h.reshape(N, H, WP, C)[:, :, :W, :]          # drop width-wrap junk cols

    y2, t1, t2 = conv3x3_bn_stats(h, params["conv2"])
    sc2, sh2 = bn_scale_shift(t1, t2, count, *params["bn2"])
    res = jnp.pad(x, ((0, 0), (0, 0), (0, 2), (0, 0))).reshape(N * H * WP, C)
    out = bn_act_apply(y2.reshape(N * H * WP, C), sc2, sh2, residual=res)
    return out.reshape(N, H, WP, C)[:, :, :W, :]


def init_params(key):
    """Deterministic synthetic parameters (PyTorch shapes, converted)."""
    ks = jax.random.split(key, 4)

    def stem_w(k):
        # torch (Cout, Cin, KH, KW) -> (KH*KW*Cin, Cout) matching im2col order
        w = jax.random.normal(k, (64, 3, 7, 7), jnp.float32) * 0.05
        return jnp.transpose(w, (2, 3, 1, 0)).reshape(147, 64).astype(ACT_DTYPE)

    def conv3x3_w(k, cin, cout):
        # torch (Cout, Cin, 3, 3) -> (9, Cin, Cout) per-tap matrices
        w = jax.random.normal(k, (cout, cin, 3, 3), jnp.float32) * 0.05
        return jnp.transpose(w, (2, 3, 1, 0)).reshape(9, cin, cout).astype(ACT_DTYPE)

    def bn(c):
        return jnp.ones((c,), jnp.float32), jnp.zeros((c,), jnp.float32)

    params = {"conv1": stem_w(ks[0]), "bn1": bn(64), "layer1": []}
    for bi in range(2):   # blocks_num[0] = 2, BasicBlock (expansion = 1)
        k1, k2 = jax.random.split(ks[1 + bi], 2)
        params["layer1"].append({
            "conv1": conv3x3_w(k1, 64, 64), "bn1": bn(64),
            "conv2": conv3x3_w(k2, 64, 64), "bn2": bn(64),
        })
    return params


def resnet_forward(params, x_nchw):
    x = jnp.transpose(x_nchw, (0, 2, 3, 1)).astype(ACT_DTYPE)   # NCHW -> NHWC bf16
    N = x.shape[0]

    # Stem: conv 7x7 / stride 2 / pad 3 (no bias) -> BN (train stats) -> ReLU
    patches, OH, OW = extract_conv_patches(x, 7, 7, 2, 3)
    y, s1, s2 = matmul_bn_stats(patches, params["conv1"])
    sc, sh = bn_scale_shift(s1, s2, N * OH * OW, *params["bn1"])
    h = bn_act_apply(y, sc, sh).reshape(N, OH, OW, 64)

    # MaxPool2d(kernel=3, stride=2, padding=1)
    h = maxpool3x3_s2_p1(h)

    # layer1: BasicBlocks, stride 1, no downsample (64 -> 64 channels)
    for blk in params["layer1"]:
        h = basic_block(h, blk)

    return jnp.transpose(h, (0, 3, 1, 2)).astype(jnp.float32)   # back to NCHW


if __name__ == "__main__":
    key = jax.random.PRNGKey(0)
    pkey, xkey = jax.random.split(key)
    params = init_params(pkey)
    x = jax.random.normal(xkey, (2, 3, 32, 32), jnp.float32)   # NCHW like PyTorch

    out = jax.jit(resnet_forward)(params, x)
    jax.block_until_ready(out)
    assert out.shape == (2, 64, 8, 8), out.shape
    assert bool(jnp.all(jnp.isfinite(out)))
    print("KERNEL_OK")
</pallas_src>

<mosaic_0001>
module attributes {stable_mosaic.version = 11 : i64} {
  func.func @_matmul_stats_kernel(%arg0: i32, %arg1: memref<256x147xbf16, #tpu.memory_space<vmem>>, %arg2: memref<147x64xbf16, #tpu.memory_space<vmem>>, %arg3: memref<256x64xbf16, #tpu.memory_space<vmem>>, %arg4: memref<1x64xf32, #tpu.memory_space<vmem>>, %arg5: memref<1x64xf32, #tpu.memory_space<vmem>>) attributes {dimension_semantics = [#tpu.dimension_semantics<arbitrary>], iteration_bounds = array<i64: 2>, scalar_prefetch = 0 : i64, scratch_operands = 0 : i64, tpu.core_type = #tpu.core_type<tc>, window_params = [{transform_indices = @transform_0, window_bounds = array<i64: 256, 147>}, {pipeline_mode = #tpu.pipeline_mode<synchronous>, transform_indices = @transform_1, window_bounds = array<i64: 147, 64>}, {transform_indices = @transform_2, window_bounds = array<i64: 256, 64>}, {pipeline_mode = #tpu.pipeline_mode<synchronous>, transform_indices = @transform_3, window_bounds = array<i64: 1, 64>}, {pipeline_mode = #tpu.pipeline_mode<synchronous>, transform_indices = @transform_4, window_bounds = array<i64: 1, 64>}]} {
    %c0 = arith.constant 0 : index
    %c0_0 = arith.constant 0 : index
    %0 = vector.load %arg1[%c0, %c0_0] : memref<256x147xbf16, #tpu.memory_space<vmem>>, vector<256x147xbf16>
    %c0_1 = arith.constant 0 : index
    %c0_2 = arith.constant 0 : index
    %1 = vector.load %arg2[%c0_1, %c0_2] : memref<147x64xbf16, #tpu.memory_space<vmem>>, vector<147x64xbf16>
    %cst = arith.constant dense<0.000000e+00> : vector<256x64xf32>
    %2 = tpu.matmul %0, %1, %cst {dimension_numbers = #tpu.dot_dimension_numbers<[1], [0], [0], [1], [0, 0, 1, 1], [], []>} : vector<256x147xbf16>, vector<147x64xbf16>, vector<256x64xf32> -> vector<256x64xf32>
    %c0_i32 = arith.constant 0 : i32
    %3 = arith.cmpi eq, %arg0, %c0_i32 : i32
    %4 = arith.extui %3 : i1 to i32
    %c0_i32_3 = arith.constant 0 : i32
    %5 = arith.cmpi ne, %4, %c0_i32_3 : i32
    scf.if %5 {
      %cst_16 = arith.constant 0.000000e+00 : f32
      %19 = vector.broadcast %cst_16 : f32 to vector<1x64xf32>
      %c0_17 = arith.constant 0 : index
      %c0_18 = arith.constant 0 : index
      %20 = vector.load %arg4[%c0_17, %c0_18] : memref<1x64xf32, #tpu.memory_space<vmem>>, vector<1x64xf32>
      tpu.vector_store %arg4[%c0_17, %c0_18], %19 {strides = array<i32>} : memref<1x64xf32, #tpu.memory_space<vmem>>, vector<1x64xf32>,
      %cst_19 = arith.constant 0.000000e+00 : f32
      %21 = vector.broadcast %cst_19 : f32 to vector<1x64xf32>
      %c0_20 = arith.constant 0 : index
      %c0_21 = arith.constant 0 : index
      %22 = vector.load %arg5[%c0_20, %c0_21] : memref<1x64xf32, #tpu.memory_space<vmem>>, vector<1x64xf32>
      tpu.vector_store %arg5[%c0_20, %c0_21], %21 {strides = array<i32>} : memref<1x64xf32, #tpu.memory_space<vmem>>, vector<1x64xf32>,
    } else {
    }
    %c0_4 = arith.constant 0 : index
    %c0_5 = arith.constant 0 : index
    %6 = vector.load %arg4[%c0_4, %c0_5] : memref<1x64xf32, #tpu.memory_space<vmem>>, vector<1x64xf32>
    %cst_6 = arith.constant dense<0.000000e+00> : vector<64xf32>
    %7 = vector.multi_reduction <add>, %2, %cst_6 [0] : vector<256x64xf32> to vector<64xf32>
    %8 = vector.shape_cast %7 : vector<64xf32> to vector<1x64xf32>
    %9 = arith.addf %6, %8 : vector<1x64xf32>
    %c0_7 = arith.constant 0 : index
    %c0_8 = arith.constant 0 : index
    %10 = vector.load %arg4[%c0_7, %c0_8] : memref<1x64xf32, #tpu.memory_space<vmem>>, vector<1x64xf32>
    tpu.vector_store %arg4[%c0_7, %c0_8], %9 {strides = array<i32>} : memref<1x64xf32, #tpu.memory_space<vmem>>, vector<1x64xf32>,
    %c0_9 = arith.constant 0 : index
    %c0_10 = arith.constant 0 : index
    %11 = vector.load %arg5[%c0_9, %c0_10] : memref<1x64xf32, #tpu.memory_space<vmem>>, vector<1x64xf32>
    %12 = arith.mulf %2, %2 : vector<256x64xf32>
    %cst_11 = arith.constant dense<0.000000e+00> : vector<64xf32>
    %13 = vector.multi_reduction <add>, %12, %cst_11 [0] : vector<256x64xf32> to vector<64xf32>
    %14 = vector.shape_cast %13 : vector<64xf32> to vector<1x64xf32>
    %15 = arith.addf %11, %14 : vector<1x64xf32>
    %c0_12 = arith.constant 0 : index
    %c0_13 = arith.constant 0 : index
    %16 = vector.load %arg5[%c0_12, %c0_13] : memref<1x64xf32, #tpu.memory_space<vmem>>, vector<1x64xf32>
    tpu.vector_store %arg5[%c0_12, %c0_13], %15 {strides = array<i32>} : memref<1x64xf32, #tpu.memory_space<vmem>>, vector<1x64xf32>,
    %17 = arith.truncf %2 : vector<256x64xf32> to vector<256x64xbf16>
    %c0_14 = arith.constant 0 : index
    %c0_15 = arith.constant 0 : index
    %18 = vector.load %arg3[%c0_14, %c0_15] : memref<256x64xbf16, #tpu.memory_space<vmem>>, vector<256x64xbf16>
    tpu.vector_store %arg3[%c0_14, %c0_15], %17 {strides = array<i32>} : memref<256x64xbf16, #tpu.memory_space<vmem>>, vector<256x64xbf16>,
    return
  }
  func.func @transform_0(%arg0: i32) -> (i32, i32) {
    %c0_i32 = arith.constant 0 : i32
    %c0_i32_0 = arith.constant 0 : i32
    return %arg0, %c0_i32 : i32, i32
  }
  func.func @transform_1(%arg0: i32) -> (i32, i32) {
    %c0_i32 = arith.constant 0 : i32
    %c0_i32_0 = arith.constant 0 : i32
    %c0_i32_1 = arith.constant 0 : i32
    return %c0_i32, %c0_i32_0 : i32, i32
  }
  func.func @transform_2(%arg0: i32) -> (i32, i32) {
    %c0_i32 = arith.constant 0 : i32
    %c0_i32_0 = arith.constant 0 : i32
    return %arg0, %c0_i32 : i32, i32
  }
  func.func @transform_3(%arg0: i32) -> (i32, i32) {
    %c0_i32 = arith.constant 0 : i32
    %c0_i32_0 = arith.constant 0 : i32
    %c0_i32_1 = arith.constant 0 : i32
    return %c0_i32, %c0_i32_0 : i32, i32
  }
  func.func @transform_4(%arg0: i32) -> (i32, i32) {
    %c0_i32 = arith.constant 0 : i32
    %c0_i32_0 = arith.constant 0 : i32
    %c0_i32_1 = arith.constant 0 : i32
    return %c0_i32, %c0_i32_0 : i32, i32
  }
}

module attributes {stable_mosaic.version = 11 : i64} {
  func.func @_affine_relu_kernel(%arg0: i32, %arg1: memref<256x128xbf16, #tpu.memory_space<vmem>>, %arg2: memref<1x128xf32, #tpu.memory_space<vmem>>, %arg3: memref<1x128xf32, #tpu.memory_space<vmem>>, %arg4: memref<256x128xbf16, #tpu.memory_space<vmem>>) attributes {dimension_semantics = [#tpu.dimension_semantics<parallel>], iteration_bounds = array<i64: 1>, scalar_prefetch = 0 : i64, scratch_operands = 0 : i64, tpu.core_type = #tpu.core_type<tc>, window_params = [{transform_indices = @transform_0, window_bounds = array<i64: 256, 128>}, {pipeline_mode = #tpu.pipeline_mode<synchronous>, transform_indices = @transform_1, window_bounds = array<i64: 1, 128>}, {pipeline_mode = #tpu.pipeline_mode<synchronous>, transform_indices = @transform_2, window_bounds = array<i64: 1, 128>}, {transform_indices = @transform_3, window_bounds = array<i64: 256, 128>}]} {
    %c0 = arith.constant 0 : index
    %c0_0 = arith.constant 0 : index
    %0 = vector.load %arg1[%c0, %c0_0] : memref<256x128xbf16, #tpu.memory_space<vmem>>, vector<256x128xbf16>
    %1 = arith.extf %0 : vector<256x128xbf16> to vector<256x128xf32>
    %c0_1 = arith.constant 0 : index
    %c0_2 = arith.constant 0 : index
    %2 = vector.load %arg2[%c0_1, %c0_2] : memref<1x128xf32, #tpu.memory_space<vmem>>, vector<1x128xf32>
    %3 = vector.broadcast %2 : vector<1x128xf32> to vector<256x128xf32>
    %4 = arith.mulf %1, %3 : vector<256x128xf32>
    %c0_3 = arith.constant 0 : index
    %c0_4 = arith.constant 0 : index
    %5 = vector.load %arg3[%c0_3, %c0_4] : memref<1x128xf32, #tpu.memory_space<vmem>>, vector<1x128xf32>
    %6 = vector.broadcast %5 : vector<1x128xf32> to vector<256x128xf32>
    %7 = arith.addf %4, %6 : vector<256x128xf32>
    %cst = arith.constant 0.000000e+00 : f32
    %8 = vector.broadcast %cst : f32 to vector<256x128xf32>
    %9 = arith.maximumf %7, %8 : vector<256x128xf32>
    %10 = arith.truncf %9 : vector<256x128xf32> to vector<256x128xbf16>
    %c0_5 = arith.constant 0 : index
    %c0_6 = arith.constant 0 : index
    %11 = vector.load %arg4[%c0_5, %c0_6] : memref<256x128xbf16, #tpu.memory_space<vmem>>, vector<256x128xbf16>
    tpu.vector_store %arg4[%c0_5, %c0_6], %10 {strides = array<i32>} : memref<256x128xbf16, #tpu.memory_space<vmem>>, vector<256x128xbf16>,
    return
  }
  func.func @transform_0(%arg0: i32) -> (i32, i32) {
    %c0_i32 = arith.constant 0 : i32
    %c0_i32_0 = arith.constant 0 : i32
    return %arg0, %c0_i32 : i32, i32
  }
  func.func @transform_1(%arg0: i32) -> (i32, i32) {
    %c0_i32 = arith.constant 0 : i32
    %c0_i32_0 = arith.constant 0 : i32
    %c0_i32_1 = arith.constant 0 : i32
    return %c0_i32, %c0_i32_0 : i32, i32
  }
  func.func @transform_2(%arg0: i32) -> (i32, i32) {
    %c0_i32 = arith.constant 0 : i32
    %c0_i32_0 = arith.constant 0 : i32
    %c0_i32_1 = arith.constant 0 : i32
    return %c0_i32, %c0_i32_0 : i32, i32
  }
  func.func @transform_3(%arg0: i32) -> (i32, i32) {
    %c0_i32 = arith.constant 0 : i32
    %c0_i32_0 = arith.constant 0 : i32
    return %arg0, %c0_i32 : i32, i32
  }
}

module attributes {stable_mosaic.version = 11 : i64} {
  func.func @kernel(%arg0: i32, %arg1: memref<1x18x18x64xbf16, #tpu.memory_space<vmem>>, %arg2: memref<1x16x16x64xbf16, #tpu.memory_space<vmem>>) attributes {dimension_semantics = [#tpu.dimension_semantics<parallel>], iteration_bounds = array<i64: 2>, scalar_prefetch = 0 : i64, scratch_operands = 0 : i64, tpu.core_type = #tpu.core_type<tc>, window_params = [{transform_indices = @transform_0, window_bounds = array<i64: 1, 18, 18, 64>}, {transform_indices = @transform_1, window_bounds = array<i64: 1, 16, 16, 64>}]} {
    %c0 = arith.constant 0 : index
    %c0_0 = arith.constant 0 : index
    %c0_1 = arith.constant 0 : index
    %c0_2 = arith.constant 0 : index
    %0 = vector.load %arg1[%c0, %c0_0, %c0_1, %c0_2] : memref<1x18x18x64xbf16, #tpu.memory_space<vmem>>, vector<1x16x16x64xbf16>
    %1 = vector.shape_cast %0 : vector<1x16x16x64xbf16> to vector<16x16x64xbf16>
    %c0_3 = arith.constant 0 : index
    %c0_4 = arith.constant 0 : index
    %c1 = arith.constant 1 : index
    %c0_5 = arith.constant 0 : index
    %2 = vector.load %arg1[%c0_3, %c0_4, %c1, %c0_5] : memref<1x18x18x64xbf16, #tpu.memory_space<vmem>>, vector<1x16x16x64xbf16>
    %3 = vector.shape_cast %2 : vector<1x16x16x64xbf16> to vector<16x16x64xbf16>
    %4 = arith.maximumf %1, %3 : vector<16x16x64xbf16>
    %c0_6 = arith.constant 0 : index
    %c0_7 = arith.constant 0 : index
    %c2 = arith.constant 2 : index
    %c0_8 = arith.constant 0 : index
    %5 = vector.load %arg1[%c0_6, %c0_7, %c2, %c0_8] : memref<1x18x18x64xbf16, #tpu.memory_space<vmem>>, vector<1x16x16x64xbf16>
    %6 = vector.shape_cast %5 : vector<1x16x16x64xbf16> to vector<16x16x64xbf16>
    %7 = arith.maximumf %4, %6 : vector<16x16x64xbf16>
    %c0_9 = arith.constant 0 : index
    %c1_10 = arith.constant 1 : index
    %c0_11 = arith.constant 0 : index
    %c0_12 = arith.constant 0 : index
    %8 = vector.load %arg1[%c0_9, %c1_10, %c0_11, %c0_12] : memref<1x18x18x64xbf16, #tpu.memory_space<vmem>>, vector<1x16x16x64xbf16>
    %9 = vector.shape_cast %8 : vector<1x16x16x64xbf16> to vector<16x16x64xbf16>
    %10 = arith.maximumf %7, %9 : vector<16x16x64xbf16>
    %c0_13 = arith.constant 0 : index
    %c1_14 = arith.constant 1 : index
    %c1_15 = arith.constant 1 : index
    %c0_16 = arith.constant 0 : index
    %11 = vector.load %arg1[%c0_13, %c1_14, %c1_15, %c0_16] : memref<1x18x18x64xbf16, #tpu.memory_space<vmem>>, vector<1x16x16x64xbf16>
    %12 = vector.shape_cast %11 : vector<1x16x16x64xbf16> to vector<16x16x64xbf16>
    %13 = arith.maximumf %10, %12 : vector<16x16x64xbf16>
    %c0_17 = arith.constant 0 : index
    %c1_18 = arith.constant 1 : index
    %c2_19 = arith.constant 2 : index
    %c0_20 = arith.constant 0 : index
    %14 = vector.load %arg1[%c0_17, %c1_18, %c2_19, %c0_20] : memref<1x18x18x64xbf16, #tpu.memory_space<vmem>>, vector<1x16x16x64xbf16>
    %15 = vector.shape_cast %14 : vector<1x16x16x64xbf16> to vector<16x16x64xbf16>
    %16 = arith.maximumf %13, %15 : vector<16x16x64xbf16>
    %c0_21 = arith.constant 0 : index
    %c2_22 = arith.constant 2 : index
    %c0_23 = arith.constant 0 : index
    %c0_24 = arith.constant 0 : index
    %17 = vector.load %arg1[%c0_21, %c2_22, %c0_23, %c0_24] : memref<1x18x18x64xbf16, #tpu.memory_space<vmem>>, vector<1x16x16x64xbf16>
    %18 = vector.shape_cast %17 : vector<1x16x16x64xbf16> to vector<16x16x64xbf16>
    %19 = arith.maximumf %16, %18 : vector<16x16x64xbf16>
    %c0_25 = arith.constant 0 : index
    %c2_26 = arith.constant 2 : index
    %c1_27 = arith.constant 1 : index
    %c0_28 = arith.constant 0 : index
    %20 = vector.load %arg1[%c0_25, %c2_26, %c1_27, %c0_28] : memref<1x18x18x64xbf16, #tpu.memory_space<vmem>>, vector<1x16x16x64xbf16>
    %21 = vector.shape_cast %20 : vector<1x16x16x64xbf16> to vector<16x16x64xbf16>
    %22 = arith.maximumf %19, %21 : vector<16x16x64xbf16>
    %c0_29 = arith.constant 0 : index
    %c2_30 = arith.constant 2 : index
    %c2_31 = arith.constant 2 : index
    %c0_32 = arith.constant 0 : index
    %23 = vector.load %arg1[%c0_29, %c2_30, %c2_31, %c0_32] : memref<1x18x18x64xbf16, #tpu.memory_space<vmem>>, vector<1x16x16x64xbf16>
    %24 = vector.shape_cast %23 : vector<1x16x16x64xbf16> to vector<16x16x64xbf16>
    %25 = arith.maximumf %22, %24 : vector<16x16x64xbf16>
    %c0_33 = arith.constant 0 : index
    %c0_34 = arith.constant 0 : index
    %c0_35 = arith.constant 0 : index
    %c0_36 = arith.constant 0 : index
    %26 = vector.load %arg2[%c0_33, %c0_34, %c0_35, %c0_36] : memref<1x16x16x64xbf16, #tpu.memory_space<vmem>>, vector<1x16x16x64xbf16>
    %27 = vector.shape_cast %26 : vector<1x16x16x64xbf16> to vector<16x16x64xbf16>
    %28 = vector.shape_cast %25 : vector<16x16x64xbf16> to vector<1x16x16x64xbf16>
    tpu.vector_store %arg2[%c0_33, %c0_34, %c0_35, %c0_36], %28 {strides = array<i32>} : memref<1x16x16x64xbf16, #tpu.memory_space<vmem>>, vector<1x16x16x64xbf16>,
    return
  }
  func.func @transform_0(%arg0: i32) -> (i32, i32, i32, i32) {
    %c0_i32 = arith.constant 0 : i32
    %c0_i32_0 = arith.constant 0 : i32
    %c0_i32_1 = arith.constant 0 : i32
    %c0_i32_2 = arith.constant 0 : i32
    return %arg0, %c0_i32, %c0_i32_0, %c0_i32_1 : i32, i32, i32, i32
  }
  func.func @transform_1(%arg0: i32) -> (i32, i32, i32, i32) {
    %c0_i32 = arith.constant 0 : i32
    %c0_i32_0 = arith.constant 0 : i32
    %c0_i32_1 = arith.constant 0 : i32
    %c0_i32_2 = arith.constant 0 : i32
    return %arg0, %c0_i32, %c0_i32_0, %c0_i32_1 : i32, i32, i32, i32
  }
}

module attributes {stable_mosaic.version = 11 : i64} {
  func.func @_affine_relu_kernel(%arg0: i32, %arg1: memref<80x128xbf16, #tpu.memory_space<vmem>>, %arg2: memref<1x128xf32, #tpu.memory_space<vmem>>, %arg3: memref<1x128xf32, #tpu.memory_space<vmem>>, %arg4: memref<80x128xbf16, #tpu.memory_space<vmem>>) attributes {dimension_semantics = [#tpu.dimension_semantics<parallel>], iteration_bounds = array<i64: 1>, scalar_prefetch = 0 : i64, scratch_operands = 0 : i64, tpu.core_type = #tpu.core_type<tc>, window_params = [{transform_indices = @transform_0, window_bounds = array<i64: 80, 128>}, {pipeline_mode = #tpu.pipeline_mode<synchronous>, transform_indices = @transform_1, window_bounds = array<i64: 1, 128>}, {pipeline_mode = #tpu.pipeline_mode<synchronous>, transform_indices = @transform_2, window_bounds = array<i64: 1, 128>}, {transform_indices = @transform_3, window_bounds = array<i64: 80, 128>}]} {
    %c0 = arith.constant 0 : index
    %c0_0 = arith.constant 0 : index
    %0 = vector.load %arg1[%c0, %c0_0] : memref<80x128xbf16, #tpu.memory_space<vmem>>, vector<80x128xbf16>
    %1 = arith.extf %0 : vector<80x128xbf16> to vector<80x128xf32>
    %c0_1 = arith.constant 0 : index
    %c0_2 = arith.constant 0 : index
    %2 = vector.load %arg2[%c0_1, %c0_2] : memref<1x128xf32, #tpu.memory_space<vmem>>, vector<1x128xf32>
    %3 = vector.broadcast %2 : vector<1x128xf32> to vector<80x128xf32>
    %4 = arith.mulf %1, %3 : vector<80x128xf32>
    %c0_3 = arith.constant 0 : index
    %c0_4 = arith.constant 0 : index
    %5 = vector.load %arg3[%c0_3, %c0_4] : memref<1x128xf32, #tpu.memory_space<vmem>>, vector<1x128xf32>
    %6 = vector.broadcast %5 : vector<1x128xf32> to vector<80x128xf32>
    %7 = arith.addf %4, %6 : vector<80x128xf32>
    %cst = arith.constant 0.000000e+00 : f32
    %8 = vector.broadcast %cst : f32 to vector<80x128xf32>
    %9 = arith.maximumf %7, %8 : vector<80x128xf32>
    %10 = arith.truncf %9 : vector<80x128xf32> to vector<80x128xbf16>
    %c0_5 = arith.constant 0 : index
    %c0_6 = arith.constant 0 : index
    %11 = vector.load %arg4[%c0_5, %c0_6] : memref<80x128xbf16, #tpu.memory_space<vmem>>, vector<80x128xbf16>
    tpu.vector_store %arg4[%c0_5, %c0_6], %10 {strides = array<i32>} : memref<80x128xbf16, #tpu.memory_space<vmem>>, vector<80x128xbf16>,
    return
  }
  func.func @transform_0(%arg0: i32) -> (i32, i32) {
    %c0_i32 = arith.constant 0 : i32
    %c0_i32_0 = arith.constant 0 : i32
    return %arg0, %c0_i32 : i32, i32
  }
  func.func @transform_1(%arg0: i32) -> (i32, i32) {
    %c0_i32 = arith.constant 0 : i32
    %c0_i32_0 = arith.constant 0 : i32
    %c0_i32_1 = arith.constant 0 : i32
    return %c0_i32, %c0_i32_0 : i32, i32
  }
  func.func @transform_2(%arg0: i32) -> (i32, i32) {
    %c0_i32 = arith.constant 0 : i32
    %c0_i32_0 = arith.constant 0 : i32
    %c0_i32_1 = arith.constant 0 : i32
    return %c0_i32, %c0_i32_0 : i32, i32
  }
  func.func @transform_3(%arg0: i32) -> (i32, i32) {
    %c0_i32 = arith.constant 0 : i32
    %c0_i32_0 = arith.constant 0 : i32
    return %arg0, %c0_i32 : i32, i32
  }
}

module attributes {stable_mosaic.version = 11 : i64} {
  func.func @kernel(%arg0: i32, %arg1: memref<1x110x64xbf16, #tpu.memory_space<vmem>>, %arg2: memref<9x64x64xbf16, #tpu.memory_space<vmem>>, %arg3: memref<1x80x64xbf16, #tpu.memory_space<vmem>>, %arg4: memref<1x64xf32, #tpu.memory_space<vmem>>, %arg5: memref<1x64xf32, #tpu.memory_space<vmem>>) attributes {dimension_semantics = [#tpu.dimension_semantics<arbitrary>], iteration_bounds = array<i64: 2>, scalar_prefetch = 0 : i64, scratch_operands = 0 : i64, tpu.core_type = #tpu.core_type<tc>, window_params = [{transform_indices = @transform_0, window_bounds = array<i64: 1, 110, 64>}, {pipeline_mode = #tpu.pipeline_mode<synchronous>, transform_indices = @transform_1, window_bounds = array<i64: 9, 64, 64>}, {transform_indices = @transform_2, window_bounds = array<i64: 1, 80, 64>}, {pipeline_mode = #tpu.pipeline_mode<synchronous>, transform_indices = @transform_3, window_bounds = array<i64: 1, 64>}, {pipeline_mode = #tpu.pipeline_mode<synchronous>, transform_indices = @transform_4, window_bounds = array<i64: 1, 64>}]} {
    %cst = arith.constant 0.000000e+00 : f32
    %0 = vector.broadcast %cst : f32 to vector<80x64xf32>
    %c0 = arith.constant 0 : index
    %c0_0 = arith.constant 0 : index
    %c0_1 = arith.constant 0 : index
    %1 = vector.load %arg1[%c0, %c0_0, %c0_1] : memref<1x110x64xbf16, #tpu.memory_space<vmem>>, vector<1x80x64xbf16>
    %2 = vector.shape_cast %1 : vector<1x80x64xbf16> to vector<80x64xbf16>
    %c0_2 = arith.constant 0 : index
    %c0_3 = arith.constant 0 : index
    %c0_4 = arith.constant 0 : index
    %3 = vector.load %arg2[%c0_2, %c0_3, %c0_4] : memref<9x64x64xbf16, #tpu.memory_space<vmem>>, vector<1x64x64xbf16>
    %4 = vector.shape_cast %3 : vector<1x64x64xbf16> to vector<64x64xbf16>
    %cst_5 = arith.constant dense<0.000000e+00> : vector<80x64xf32>
    %5 = tpu.matmul %2, %4, %cst_5 {dimension_numbers = #tpu.dot_dimension_numbers<[1], [0], [0], [1], [0, 0, 1, 1], [], []>} : vector<80x64xbf16>, vector<64x64xbf16>, vector<80x64xf32> -> vector<80x64xf32>
    %6 = arith.addf %0, %5 : vector<80x64xf32>
    %c0_6 = arith.constant 0 : index
    %c1 = arith.constant 1 : index
    %c0_7 = arith.constant 0 : index
    %7 = vector.load %arg1[%c0_6, %c1, %c0_7] : memref<1x110x64xbf16, #tpu.memory_space<vmem>>, vector<1x80x64xbf16>
    %8 = vector.shape_cast %7 : vector<1x80x64xbf16> to vector<80x64xbf16>
    %c1_8 = arith.constant 1 : index
    %c0_9 = arith.constant 0 : index
    %c0_10 = arith.constant 0 : index
    %9 = vector.load %arg2[%c1_8, %c0_9, %c0_10] : memref<9x64x64xbf16, #tpu.memory_space<vmem>>, vector<1x64x64xbf16>
    %10 = vector.shape_cast %9 : vector<1x64x64xbf16> to vector<64x64xbf16>
    %cst_11 = arith.constant dense<0.000000e+00> : vector<80x64xf32>
    %11 = tpu.matmul %8, %10, %cst_11 {dimension_numbers = #tpu.dot_dimension_numbers<[1], [0], [0], [1], [0, 0, 1, 1], [], []>} : vector<80x64xbf16>, vector<64x64xbf16>, vector<80x64xf32> -> vector<80x64xf32>
    %12 = arith.addf %6, %11 : vector<80x64xf32>
    %c0_12 = arith.constant 0 : index
    %c2 = arith.constant 2 : index
    %c0_13 = arith.constant 0 : index
    %13 = vector.load %arg1[%c0_12, %c2, %c0_13] : memref<1x110x64xbf16, #tpu.memory_space<vmem>>, vector<1x80x64xbf16>
    %14 = vector.shape_cast %13 : vector<1x80x64xbf16> to vector<80x64xbf16>
    %c2_14 = arith.constant 2 : index
    %c0_15 = arith.constant 0 : index
    %c0_16 = arith.constant 0 : index
    %15 = vector.load %arg2[%c2_14, %c0_15, %c0_16] : memref<9x64x64xbf16, #tpu.memory_space<vmem>>, vector<1x64x64xbf16>
    %16 = vector.shape_cast %15 : vector<1x64x64xbf16> to vector<64x64xbf16>
    %cst_17 = arith.constant dense<0.000000e+00> : vector<80x64xf32>
    %17 = tpu.matmul %14, %16, %cst_17 {dimension_numbers = #tpu.dot_dimension_numbers<[1], [0], [0], [1], [0, 0, 1, 1], [], []>} : vector<80x64xbf16>, vector<64x64xbf16>, vector<80x64xf32> -> vector<80x64xf32>
    %18 = arith.addf %12, %17 : vector<80x64xf32>
    %c0_18 = arith.constant 0 : index
    %c10 = arith.constant 10 : index
    %c0_19 = arith.constant 0 : index
    %19 = vector.load %arg1[%c0_18, %c10, %c0_19] : memref<1x110x64xbf16, #tpu.memory_space<vmem>>, vector<1x80x64xbf16>
    %20 = vector.shape_cast %19 : vector<1x80x64xbf16> to vector<80x64xbf16>
    %c3 = arith.constant 3 : index
    %c0_20 = arith.constant 0 : index
    %c0_21 = arith.constant 0 : index
    %21 = vector.load %arg2[%c3, %c0_20, %c0_21] : memref<9x64x64xbf16, #tpu.memory_space<vmem>>, vector<1x64x64xbf16>
    %22 = vector.shape_cast %21 : vector<1x64x64xbf16> to vector<64x64xbf16>
    %cst_22 = arith.constant dense<0.000000e+00> : vector<80x64xf32>
    %23 = tpu.matmul %20, %22, %cst_22 {dimension_numbers = #tpu.dot_dimension_numbers<[1], [0], [0], [1], [0, 0, 1, 1], [], []>} : vector<80x64xbf16>, vector<64x64xbf16>, vector<80x64xf32> -> vector<80x64xf32>
    %24 = arith.addf %18, %23 : vector<80x64xf32>
    %c0_23 = arith.constant 0 : index
    %c11 = arith.constant 11 : index
    %c0_24 = arith.constant 0 : index
    %25 = vector.load %arg1[%c0_23, %c11, %c0_24] : memref<1x110x64xbf16, #tpu.memory_space<vmem>>, vector<1x80x64xbf16>
    %26 = vector.shape_cast %25 : vector<1x80x64xbf16> to vector<80x64xbf16>
    %c4 = arith.constant 4 : index
    %c0_25 = arith.constant 0 : index
    %c0_26 = arith.constant 0 : index
    %27 = vector.load %arg2[%c4, %c0_25, %c0_26] : memref<9x64x64xbf16, #tpu.memory_space<vmem>>, vector<1x64x64xbf16>
    %28 = vector.shape_cast %27 : vector<1x64x64xbf16> to vector<64x64xbf16>
    %cst_27 = arith.constant dense<0.000000e+00> : vector<80x64xf32>
    %29 = tpu.matmul %26, %28, %cst_27 {dimension_numbers = #tpu.dot_dimension_numbers<[1], [0], [0], [1], [0, 0, 1, 1], [], []>} : vector<80x64xbf16>, vector<64x64xbf16>, vector<80x64xf32> -> vector<80x64xf32>
    %30 = arith.addf %24, %29 : vector<80x64xf32>
    %c0_28 = arith.constant 0 : index
    %c12 = arith.constant 12 : index
    %c0_29 = arith.constant 0 : index
    %31 = vector.load %arg1[%c0_28, %c12, %c0_29] : memref<1x110x64xbf16, #tpu.memory_space<vmem>>, vector<1x80x64xbf16>
    %32 = vector.shape_cast %31 : vector<1x80x64xbf16> to vector<80x64xbf16>
    %c5 = arith.constant 5 : index
    %c0_30 = arith.constant 0 : index
    %c0_31 = arith.constant 0 : index
    %33 = vector.load %arg2[%c5, %c0_30, %c0_31] : memref<9x64x64xbf16, #tpu.memory_space<vmem>>, vector<1x64x64xbf16>
    %34 = vector.shape_cast %33 : vector<1x64x64xbf16> to vector<64x64xbf16>
    %cst_32 = arith.constant dense<0.000000e+00> : vector<80x64xf32>
    %35 = tpu.matmul %32, %34, %cst_32 {dimension_numbers = #tpu.dot_dimension_numbers<[1], [0], [0], [1], [0, 0, 1, 1], [], []>} : vector<80x64xbf16>, vector<64x64xbf16>, vector<80x64xf32> -> vector<80x64xf32>
    %36 = arith.addf %30, %35 : vector<80x64xf32>
    %c0_33 = arith.constant 0 : index
    %c20 = arith.constant 20 : index
    %c0_34 = arith.constant 0 : index
    %37 = vector.load %arg1[%c0_33, %c20, %c0_34] : memref<1x110x64xbf16, #tpu.memory_space<vmem>>, vector<1x80x64xbf16>
    %38 = vector.shape_cast %37 : vector<1x80x64xbf16> to vector<80x64xbf16>
    %c6 = arith.constant 6 : index
    %c0_35 = arith.constant 0 : index
    %c0_36 = arith.constant 0 : index
    %39 = vector.load %arg2[%c6, %c0_35, %c0_36] : memref<9x64x64xbf16, #tpu.memory_space<vmem>>, vector<1x64x64xbf16>
    %40 = vector.shape_cast %39 : vector<1x64x64xbf16> to vector<64x64xbf16>
    %cst_37 = arith.constant dense<0.000000e+00> : vector<80x64xf32>
    %41 = tpu.matmul %38, %40, %cst_37 {dimension_numbers = #tpu.dot_dimension_numbers<[1], [0], [0], [1], [0, 0, 1, 1], [], []>} : vector<80x64xbf16>, vector<64x64xbf16>, vector<80x64xf32> -> vector<80x64xf32>
    %42 = arith.addf %36, %41 : vector<80x64xf32>
    %c0_38 = arith.constant 0 : index
    %c21 = arith.constant 21 : index
    %c0_39 = arith.constant 0 : index
    %43 = vector.load %arg1[%c0_38, %c21, %c0_39] : memref<1x110x64xbf16, #tpu.memory_space<vmem>>, vector<1x80x64xbf16>
    %44 = vector.shape_cast %43 : vector<1x80x64xbf16> to vector<80x64xbf16>
    %c7 = arith.constant 7 : index
    %c0_40 = arith.constant 0 : index
    %c0_41 = arith.constant 0 : index
    %45 = vector.load %arg2[%c7, %c0_40, %c0_41] : memref<9x64x64xbf16, #tpu.memory_space<vmem>>, vector<1x64x64xbf16>
    %46 = vector.shape_cast %45 : vector<1x64x64xbf16> to vector<64x64xbf16>
    %cst_42 = arith.constant dense<0.000000e+00> : vector<80x64xf32>
    %47 = tpu.matmul %44, %46, %cst_42 {dimension_numbers = #tpu.dot_dimension_numbers<[1], [0], [0], [1], [0, 0, 1, 1], [], []>} : vector<80x64xbf16>, vector<64x64xbf16>, vector<80x64xf32> -> vector<80x64xf32>
    %48 = arith.addf %42, %47 : vector<80x64xf32>
    %c0_43 = arith.constant 0 : index
    %c22 = arith.constant 22 : index
    %c0_44 = arith.constant 0 : index
    %49 = vector.load %arg1[%c0_43, %c22, %c0_44] : memref<1x110x64xbf16, #tpu.memory_space<vmem>>, vector<1x80x64xbf16>
    %50 = vector.shape_cast %49 : vector<1x80x64xbf16> to vector<80x64xbf16>
    %c8 = arith.constant 8 : index
    %c0_45 = arith.constant 0 : index
    %c0_46 = arith.constant 0 : index
    %51 = vector.load %arg2[%c8, %c0_45, %c0_46] : memref<9x64x64xbf16, #tpu.memory_space<vmem>>, vector<1x64x64xbf16>
    %52 = vector.shape_cast %51 : vector<1x64x64xbf16> to vector<64x64xbf16>
    %cst_47 = arith.constant dense<0.000000e+00> : vector<80x64xf32>
    %53 = tpu.matmul %50, %52, %cst_47 {dimension_numbers = #tpu.dot_dimension_numbers<[1], [0], [0], [1], [0, 0, 1, 1], [], []>} : vector<80x64xbf16>, vector<64x64xbf16>, vector<80x64xf32> -> vector<80x64xf32>
    %54 = arith.addf %48, %53 : vector<80x64xf32>
    %c0_i32 = arith.constant 0 : i32
    %55 = arith.cmpi eq, %arg0, %c0_i32 : i32
    %56 = arith.extui %55 : i1 to i32
    %c0_i32_48 = arith.constant 0 : i32
    %57 = arith.cmpi ne, %56, %c0_i32_48 : i32
    scf.if %57 {
      %cst_68 = arith.constant 0.000000e+00 : f32
      %100 = vector.broadcast %cst_68 : f32 to vector<1x64xf32>
      %c0_69 = arith.constant 0 : index
      %c0_70 = arith.constant 0 : index
      %101 = vector.load %arg4[%c0_69, %c0_70] : memref<1x64xf32, #tpu.memory_space<vmem>>, vector<1x64xf32>
      tpu.vector_store %arg4[%c0_69, %c0_70], %100 {strides = array<i32>} : memref<1x64xf32, #tpu.memory_space<vmem>>, vector<1x64xf32>,
      %cst_71 = arith.constant 0.000000e+00 : f32
      %102 = vector.broadcast %cst_71 : f32 to vector<1x64xf32>
      %c0_72 = arith.constant 0 : index
      %c0_73 = arith.constant 0 : index
      %103 = vector.load %arg5[%c0_72, %c0_73] : memref<1x64xf32, #tpu.memory_space<vmem>>, vector<1x64xf32>
      tpu.vector_store %arg5[%c0_72, %c0_73], %102 {strides = array<i32>} : memref<1x64xf32, #tpu.memory_space<vmem>>, vector<1x64xf32>,
    } else {
    }
    %58 = tpu.iota {dimensions = array<i32: 0>} : vector<80x1xi32>
    %c10_i32 = arith.constant 10 : i32
    %c0_i32_49 = arith.constant 0 : i32
    %59 = arith.cmpi eq, %c10_i32, %c0_i32_49 : i32
    %c1_i32 = arith.constant 1 : i32
    %60 = arith.select %59, %c1_i32, %c10_i32 : i32
    %61 = vector.broadcast %60 : i32 to vector<80x1xi32>
    %62 = arith.remsi %58, %61 : vector<80x1xi32>
    %c0_i32_50 = arith.constant 0 : i32
    %63 = vector.broadcast %c0_i32_50 : i32 to vector<80x1xi32>
    %64 = arith.cmpi ne, %62, %63 : vector<80x1xi32>
    %c0_i32_51 = arith.constant 0 : i32
    %65 = vector.broadcast %c0_i32_51 : i32 to vector<80x1xi32>
    %66 = arith.cmpi slt, %62, %65 : vector<80x1xi32>
    %c0_i32_52 = arith.constant 0 : i32
    %67 = arith.cmpi slt, %60, %c0_i32_52 : i32
    %68 = vector.broadcast %67 : i1 to vector<80x1xi1>
    %69 = vector.broadcast %68 : vector<80x1xi1> to vector<80x1xi1>
    %70 = arith.xori %66, %69 : vector<80x1xi1>
    %71 = arith.andi %70, %64 : vector<80x1xi1>
    %72 = vector.broadcast %60 : i32 to vector<80x1xi32>
    %73 = arith.addi %62, %72 : vector<80x1xi32>
    %74 = arith.select %71, %73, %62 : vector<80x1xi1>, vector<80x1xi32>
    %c8_i32 = arith.constant 8 : i32
    %75 = vector.broadcast %c8_i32 : i32 to vector<80x1xi32>
    %76 = arith.cmpi slt, %74, %75 : vector<80x1xi32>
    %c0_53 = arith.constant 0 : index
    %c0_54 = arith.constant 0 : index
    %77 = vector.load %arg4[%c0_53, %c0_54] : memref<1x64xf32, #tpu.memory_space<vmem>>, vector<1x64xf32>
    %cst_55 = arith.constant 0.000000e+00 : f32
    %78 = vector.shape_cast %76 : vector<80x1xi1> to vector<80x1xi1>
    %79 = vector.broadcast %78 : vector<80x1xi1> to vector<80x64xi1>
    %80 = vector.broadcast %cst_55 : f32 to vector<80x64xf32>
    %81 = arith.select %79, %54, %80 : vector<80x64xi1>, vector<80x64xf32>
    %cst_56 = arith.constant dense<0.000000e+00> : vector<64xf32>
    %82 = vector.multi_reduction <add>, %81, %cst_56 [0] : vector<80x64xf32> to vector<64xf32>
    %83 = vector.shape_cast %82 : vector<64xf32> to vector<1x64xf32>
    %84 = arith.addf %77, %83 : vector<1x64xf32>
    %c0_57 = arith.constant 0 : index
    %c0_58 = arith.constant 0 : index
    %85 = vector.load %arg4[%c0_57, %c0_58] : memref<1x64xf32, #tpu.memory_space<vmem>>, vector<1x64xf32>
    tpu.vector_store %arg4[%c0_57, %c0_58], %84 {strides = array<i32>} : memref<1x64xf32, #tpu.memory_space<vmem>>, vector<1x64xf32>,
    %c0_59 = arith.constant 0 : index
    %c0_60 = arith.constant 0 : index
    %86 = vector.load %arg5[%c0_59, %c0_60] : memref<1x64xf32, #tpu.memory_space<vmem>>, vector<1x64xf32>
    %87 = arith.mulf %54, %54 : vector<80x64xf32>
    %cst_61 = arith.constant 0.000000e+00 : f32
    %88 = vector.shape_cast %76 : vector<80x1xi1> to vector<80x1xi1>
    %89 = vector.broadcast %88 : vector<80x1xi1> to vector<80x64xi1>
    %90 = vector.broadcast %cst_61 : f32 to vector<80x64xf32>
    %91 = arith.select %89, %87, %90 : vector<80x64xi1>, vector<80x64xf32>
    %cst_62 = arith.constant dense<0.000000e+00> : vector<64xf32>
    %92 = vector.multi_reduction <add>, %91, %cst_62 [0] : vector<80x64xf32> to vector<64xf32>
    %93 = vector.shape_cast %92 : vector<64xf32> to vector<1x64xf32>
    %94 = arith.addf %86, %93 : vector<1x64xf32>
    %c0_63 = arith.constant 0 : index
    %c0_64 = arith.constant 0 : index
    %95 = vector.load %arg5[%c0_63, %c0_64] : memref<1x64xf32, #tpu.memory_space<vmem>>, vector<1x64xf32>
    tpu.vector_store %arg5[%c0_63, %c0_64], %94 {strides = array<i32>} : memref<1x64xf32, #tpu.memory_space<vmem>>, vector<1x64xf32>,
    %96 = arith.truncf %54 : vector<80x64xf32> to vector<80x64xbf16>
    %c0_65 = arith.constant 0 : index
    %c0_66 = arith.constant 0 : index
    %c0_67 = arith.constant 0 : index
    %97 = vector.load %arg3[%c0_65, %c0_66, %c0_67] : memref<1x80x64xbf16, #tpu.memory_space<vmem>>, vector<1x80x64xbf16>
    %98 = vector.shape_cast %97 : vector<1x80x64xbf16> to vector<80x64xbf16>
    %99 = vector.shape_cast %96 : vector<80x64xbf16> to vector<1x80x64xbf16>
    tpu.vector_store %arg3[%c0_65, %c0_66, %c0_67], %99 {strides = array<i32>} : memref<1x80x64xbf16, #tpu.memory_space<vmem>>, vector<1x80x64xbf16>,
    return
  }
  func.func @transform_0(%arg0: i32) -> (i32, i32, i32) {
    %c0_i32 = arith.constant 0 : i32
    %c0_i32_0 = arith.constant 0 : i32
    %c0_i32_1 = arith.constant 0 : i32
    return %arg0, %c0_i32, %c0_i32_0 : i32, i32, i32
  }
  func.func @transform_1(%arg0: i32) -> (i32, i32, i32) {
    %c0_i32 = arith.constant 0 : i32
    %c0_i32_0 = arith.constant 0 : i32
    %c0_i32_1 = arith.constant 0 : i32
    %c0_i32_2 = arith.constant 0 : i32
    return %c0_i32, %c0_i32_0, %c0_i32_1 : i32, i32, i32
  }
  func.func @transform_2(%arg0: i32) -> (i32, i32, i32) {
    %c0_i32 = arith.constant 0 : i32
    %c0_i32_0 = arith.constant 0 : i32
    %c0_i32_1 = arith.constant 0 : i32
    return %arg0, %c0_i32, %c0_i32_0 : i32, i32, i32
  }
  func.func @transform_3(%arg0: i32) -> (i32, i32) {
    %c0_i32 = arith.constant 0 : i32
    %c0_i32_0 = arith.constant 0 : i32
    %c0_i32_1 = arith.constant 0 : i32
    return %c0_i32, %c0_i32_0 : i32, i32
  }
  func.func @transform_4(%arg0: i32) -> (i32, i32) {
    %c0_i32 = arith.constant 0 : i32
    %c0_i32_0 = arith.constant 0 : i32
    %c0_i32_1 = arith.constant 0 : i32
    return %c0_i32, %c0_i32_0 : i32, i32
  }
}

module attributes {stable_mosaic.version = 11 : i64} {
  func.func @_affine_res_relu_kernel(%arg0: i32, %arg1: memref<80x128xbf16, #tpu.memory_space<vmem>>, %arg2: memref<1x128xf32, #tpu.memory_space<vmem>>, %arg3: memref<1x128xf32, #tpu.memory_space<vmem>>, %arg4: memref<80x128xbf16, #tpu.memory_space<vmem>>, %arg5: memref<80x128xbf16, #tpu.memory_space<vmem>>) attributes {dimension_semantics = [#tpu.dimension_semantics<parallel>], iteration_bounds = array<i64: 1>, scalar_prefetch = 0 : i64, scratch_operands = 0 : i64, tpu.core_type = #tpu.core_type<tc>, window_params = [{transform_indices = @transform_0, window_bounds = array<i64: 80, 128>}, {pipeline_mode = #tpu.pipeline_mode<synchronous>, transform_indices = @transform_1, window_bounds = array<i64: 1, 128>}, {pipeline_mode = #tpu.pipeline_mode<synchronous>, transform_indices = @transform_2, window_bounds = array<i64: 1, 128>}, {transform_indices = @transform_3, window_bounds = array<i64: 80, 128>}, {transform_indices = @transform_4, window_bounds = array<i64: 80, 128>}]} {
    %c0 = arith.constant 0 : index
    %c0_0 = arith.constant 0 : index
    %0 = vector.load %arg1[%c0, %c0_0] : memref<80x128xbf16, #tpu.memory_space<vmem>>, vector<80x128xbf16>
    %1 = arith.extf %0 : vector<80x128xbf16> to vector<80x128xf32>
    %c0_1 = arith.constant 0 : index
    %c0_2 = arith.constant 0 : index
    %2 = vector.load %arg2[%c0_1, %c0_2] : memref<1x128xf32, #tpu.memory_space<vmem>>, vector<1x128xf32>
    %3 = vector.broadcast %2 : vector<1x128xf32> to vector<80x128xf32>
    %4 = arith.mulf %1, %3 : vector<80x128xf32>
    %c0_3 = arith.constant 0 : index
    %c0_4 = arith.constant 0 : index
    %5 = vector.load %arg3[%c0_3, %c0_4] : memref<1x128xf32, #tpu.memory_space<vmem>>, vector<1x128xf32>
    %6 = vector.broadcast %5 : vector<1x128xf32> to vector<80x128xf32>
    %7 = arith.addf %4, %6 : vector<80x128xf32>
    %c0_5 = arith.constant 0 : index
    %c0_6 = arith.constant 0 : index
    %8 = vector.load %arg4[%c0_5, %c0_6] : memref<80x128xbf16, #tpu.memory_space<vmem>>, vector<80x128xbf16>
    %9 = arith.extf %8 : vector<80x128xbf16> to vector<80x128xf32>
    %10 = arith.addf %7, %9 : vector<80x128xf32>
    %cst = arith.constant 0.000000e+00 : f32
    %11 = vector.broadcast %cst : f32 to vector<80x128xf32>
    %12 = arith.maximumf %10, %11 : vector<80x128xf32>
    %13 = arith.truncf %12 : vector<80x128xf32> to vector<80x128xbf16>
    %c0_7 = arith.constant 0 : index
    %c0_8 = arith.constant 0 : index
    %14 = vector.load %arg5[%c0_7, %c0_8] : memref<80x128xbf16, #tpu.memory_space<vmem>>, vector<80x128xbf16>
    tpu.vector_store %arg5[%c0_7, %c0_8], %13 {strides = array<i32>} : memref<80x128xbf16, #tpu.memory_space<vmem>>, vector<80x128xbf16>,
    return
  }
  func.func @transform_0(%arg0: i32) -> (i32, i32) {
    %c0_i32 = arith.constant 0 : i32
    %c0_i32_0 = arith.constant 0 : i32
    return %arg0, %c0_i32 : i32, i32
  }
  func.func @transform_1(%arg0: i32) -> (i32, i32) {
    %c0_i32 = arith.constant 0 : i32
    %c0_i32_0 = arith.constant 0 : i32
    %c0_i32_1 = arith.constant 0 : i32
    return %c0_i32, %c0_i32_0 : i32, i32
  }
  func.func @transform_2(%arg0: i32) -> (i32, i32) {
    %c0_i32 = arith.constant 0 : i32
    %c0_i32_0 = arith.constant 0 : i32
    %c0_i32_1 = arith.constant 0 : i32
    return %c0_i32, %c0_i32_0 : i32, i32
  }
  func.func @transform_3(%arg0: i32) -> (i32, i32) {
    %c0_i32 = arith.constant 0 : i32
    %c0_i32_0 = arith.constant 0 : i32
    return %arg0, %c0_i32 : i32, i32
  }
  func.func @transform_4(%arg0: i32) -> (i32, i32) {
    %c0_i32 = arith.constant 0 : i32
    %c0_i32_0 = arith.constant 0 : i32
    return %arg0, %c0_i32 : i32, i32
  }
}

</mosaic_0001>

<llo_original>
// kernel: tile.53
$region0: #{tile.53}
  #allocation0 [shape = 's32[1]{0}', space=sflag, size = 0x4, scoped, tag = 'scoped memory for tile.53']
  %s0 = inlined_call_operand.vmem [shape: f32[64], index: 0, kind: input, shape index: {}]
  %s1 = inlined_call_operand.vmem [shape: f32[2,64], index: 1, kind: output, shape index: {}]
  // Predicated region
  $region2: #{tile.53} parent=0 // pred_check
    _
  $region3: #{tile.53} parent=0 // pred_check_branch
    %3 = sbr.rel (0) target = $region5
  $region4: #{tile.53} parent=0 // pred_region
    _
  $region5: #{tile.53} parent=0 // pred_fallthru
    _
  %v4 = vld [vmem:[%s0] ss:$0 sm:$0xff]
  %5 = vst [vmem:[%s1] sm:$0x3] %v4

// kernel: tile.54
$region0: #{tile.54}
  %s0 = inlined_call_operand.vmem [shape: f32[2,64], index: 0, kind: input, shape index: {}]
  %s1 = inlined_call_operand.vmem [shape: f32[1,128], index: 1, kind: output, shape index: {}]
  $region1: #{tile.54} parent=0
    #allocation0 [shape = 'u8[4096]{0}', space=vmem, size = 0x1000, scoped, tag = 'scoped mem for output reshape']
    #allocation1 [shape = 'u8[4096]{0}', space=vmem, size = 0x1000, scoped, tag = 'scoped mem for input reshape']
    %s3 = sshllo.u32 0, 2
    %v4 = vld [vmem:[%s0] sm:%s3]
    %5 = vst [vmem:[#allocation1] sm:%s3] %v4
    %v6 = vld [vmem:[#allocation1] sm:$0x1]
    %vm7 = vcmask 523264
    %8 = vst.msk [vmem:[#allocation0] sm:$0x1] %vm7, %v6
    %s9 = scalar_lea.vmem [#allocation1], 1
    %v10 = vld [vmem:[%s9] sm:$0x1]
    %11 = vrot.lane.b32.xlu0 %v10, 64
    %v12 = vpop.permute.xlu0 %11
    %vm13 = vcmask 1048064
    %14 = vst.msk [vmem:[#allocation0] sm:$0x1] %vm13, %v12
    %s16 = sshllo.u32 0, 1
    %v18 = vld [vmem:[#allocation0] sm:%s16]
    %s19 = sshllo.u32 0, 1
    %20 = vst [vmem:[%s1] sm:%s19] %v18

// kernel: resnet_forward.12
$region0: #{resnet_forward.12}
  #allocation0 [shape = 'u32[]', space=smem, size = 0x4, offset = 0x4, fixed_abs, tag = 'smem constant byte address 0x4 - core index']
  #allocation1 [shape = 'u32[144,128]{1,0:T(1,128)}', space=vmem, size = 0x12000, scoped, tag = 'internal scratch']
  %s0 = inlined_call_operand.vmem [shape: bf16[256,128], index: 0, kind: input, shape index: {}]
  %s1 = inlined_call_operand.vmem [shape: f32[1,128], index: 1, kind: input, shape index: {}]
  %s2 = inlined_call_operand.vmem [shape: f32[1,128], index: 2, kind: input, shape index: {}]
  %s3 = inlined_call_operand.vmem [shape: bf16[256,128], index: 3, kind: output, shape index: {}]
  %s4 = sld [smem:[#allocation0]]
  $region22: #{resnet_forward.12} parent=0
    _
  %s6 = ssub.s32 1, %s4
  %s7 = scalar_select 0, %s6, %s4
  // Predicated region
  $region2: #{resnet_forward.12} parent=0 // pred_check
    _
  $region3: #{resnet_forward.12} parent=0 // pred_check_branch
    %9 = sbr.rel (0) target = $region5
  $region4: #{resnet_forward.12} parent=0 // pred_region
    _
  $region5: #{resnet_forward.12} parent=0 // pred_fallthru
    _
  // Predicated region
  $region6: #{resnet_forward.12} parent=0 // pred_check
    _
  $region7: #{resnet_forward.12} parent=0 // pred_check_branch
    %11 = sbr.rel (0) target = $region9
  $region8: #{resnet_forward.12} parent=0 // pred_region
    _
  $region9: #{resnet_forward.12} parent=0 // pred_fallthru
    _
  // Predicated region
  $region10: #{resnet_forward.12} parent=0 // pred_check
    _
  $region11: #{resnet_forward.12} parent=0 // pred_check_branch
    %13 = sbr.rel (0) target = $region13
  $region12: #{resnet_forward.12} parent=0 // pred_region
    _
  $region13: #{resnet_forward.12} parent=0 // pred_fallthru
    _
  %v14 = vld [vmem:[%s0] sm:$0xf]
  %v15 = vld [vmem:[%s0 + $0x4] sm:$0xf]
  %v16 = vld [vmem:[%s0 + $0x8] sm:$0xf]
  %v17 = vld [vmem:[%s0 + $0xc] sm:$0xf]
  %v18 = vld [vmem:[%s0 + $0x10] sm:$0xf]
  %v19 = vld [vmem:[%s0 + $0x14] sm:$0xf]
  %v20 = vld [vmem:[%s0 + $0x18] sm:$0xf]
  %v21 = vld [vmem:[%s0 + $0x1c] sm:$0xf]
  %v22 = vld [vmem:[%s0 + $0x20] sm:$0xf]
  %v23 = vld [vmem:[%s0 + $0x24] sm:$0xf]
  %v24 = vld [vmem:[%s0 + $0x28] sm:$0xf]
  %v25 = vld [vmem:[%s0 + $0x2c] sm:$0xf]
  %v26 = vld [vmem:[%s0 + $0x30] sm:$0xf]
  %v27 = vld [vmem:[%s0 + $0x34] sm:$0xf]
  %v28 = vld [vmem:[%s0 + $0x38] sm:$0xf]
  %v29 = vld [vmem:[%s0 + $0x3c] sm:$0xf]
  %v30 = vld [vmem:[%s0 + $0x40] sm:$0xf]
  %v31 = vld [vmem:[%s0 + $0x44] sm:$0xf]
  %v32 = vld [vmem:[%s0 + $0x48] sm:$0xf]
  %v33 = vld [vmem:[%s0 + $0x4c] sm:$0xf]
  %v34 = vld [vmem:[%s0 + $0x50] sm:$0xf]
  %v35 = vld [vmem:[%s0 + $0x54] sm:$0xf]
  %v36 = vld [vmem:[%s0 + $0x58] sm:$0xf]
  %v37 = vld [vmem:[%s0 + $0x5c] sm:$0xf]
  %v38 = vld [vmem:[%s0 + $0x60] sm:$0xf]
  %v39 = vld [vmem:[%s0 + $0x64] sm:$0xf]
  %v40 = vld [vmem:[%s0 + $0x68] sm:$0xf]
  %v41 = vld [vmem:[%s0 + $0x6c] sm:$0xf]
  %v42 = vld [vmem:[%s0 + $0x70] sm:$0xf]
  %v43 = vld [vmem:[%s0 + $0x74] sm:$0xf]
  %v44 = vld [vmem:[%s0 + $0x78] sm:$0xf]
  %v45 = vld [vmem:[%s0 + $0x7c] sm:$0xf]
  %v46 = vunpack.c.l.bf16 %v14
  %v47 = vunpack.c.l.bf16 %v15
  %v48 = vunpack.c.l.bf16 %v16
  %v49 = vunpack.c.l.bf16 %v17
  %v50 = vunpack.c.l.bf16 %v18
  %v51 = vunpack.c.l.bf16 %v19
  %v52 = vunpack.c.l.bf16 %v20
  %v53 = vunpack.c.l.bf16 %v21
  %v54 = vunpack.c.l.bf16 %v22
  %v55 = vunpack.c.l.bf16 %v23
  %v56 = vunpack.c.l.bf16 %v24
  %v57 = vunpack.c.l.bf16 %v25
  %v58 = vunpack.c.l.bf16 %v26
  %v59 = vunpack.c.l.bf16 %v27
  %v60 = vunpack.c.l.bf16 %v28
  %v61 = vunpack.c.l.bf16 %v29
  %v62 = vunpack.c.l.bf16 %v30
  %v63 = vunpack.c.l.bf16 %v31
  %v64 = vunpack.c.l.bf16 %v32
  %v65 = vunpack.c.l.bf16 %v33
  %v66 = vunpack.c.l.bf16 %v34
  %v67 = vunpack.c.l.bf16 %v35
  %v68 = vunpack.c.l.bf16 %v36
  %v69 = vunpack.c.l.bf16 %v37
  %v70 = vunpack.c.l.bf16 %v38
  %v71 = vunpack.c.l.bf16 %v39
  %v72 = vunpack.c.l.bf16 %v40
  %v73 = vunpack.c.l.bf16 %v41
  %v74 = vunpack.c.l.bf16 %v42
  %v75 = vunpack.c.l.bf16 %v43
  %v76 = vunpack.c.l.bf16 %v44
  %v77 = vunpack.c.l.bf16 %v45
  %v78 = vld [vmem:[%s1] sm:$0x1]
  %v80 = vlaneseq
  %v81 = vshrl.u32 %v80, 7
  %v82 = vsub.s32 0, %v81
  %v83 = vrot.slane %v78, %v82
  %v85 = vmul.f32 %v46, %v83
  %v86 = vmul.f32 %v47, %v83
  %v87 = vmul.f32 %v48, %v83
  %v88 = vmul.f32 %v49, %v83
  %v89 = vmul.f32 %v50, %v83
  %v90 = vmul.f32 %v51, %v83
  %v91 = vmul.f32 %v52, %v83
  %v92 = vmul.f32 %v53, %v83
  %v93 = vmul.f32 %v54, %v83
  %v94 = vmul.f32 %v55, %v83
  %v95 = vmul.f32 %v56, %v83
  %v96 = vmul.f32 %v57, %v83
  %v97 = vmul.f32 %v58, %v83
  %v98 = vmul.f32 %v59, %v83
  %v99 = vmul.f32 %v60, %v83
  %v100 = vmul.f32 %v61, %v83
  %v101 = vmul.f32 %v62, %v83
  %v102 = vmul.f32 %v63, %v83
  %v103 = vmul.f32 %v64, %v83
  %v104 = vmul.f32 %v65, %v83
  %v105 = vmul.f32 %v66, %v83
  %v106 = vmul.f32 %v67, %v83
  %v107 = vmul.f32 %v68, %v83
  %v108 = vmul.f32 %v69, %v83
  %v109 = vmul.f32 %v70, %v83
  %v110 = vmul.f32 %v71, %v83
  %v111 = vmul.f32 %v72, %v83
  %v112 = vmul.f32 %v73, %v83
  %v113 = vmul.f32 %v74, %v83
  %v114 = vmul.f32 %v75, %v83
  %v115 = vmul.f32 %v76, %v83
  %v116 = vmul.f32 %v77, %v83
  %v117 = vld [vmem:[%s2] sm:$0x1]
  %v119 = vlaneseq
  %v120 = vshrl.u32 %v119, 7
  %v121 = vsub.s32 0, %v120
  %v122 = vrot.slane %v117, %v121
  %v124 = vadd.f32 %v85, %v122
  %v125 = vadd.f32 %v86, %v122
  %v126 = vadd.f32 %v87, %v122
  %v127 = vadd.f32 %v88, %v122
  %v128 = vadd.f32 %v89, %v122
  %v129 = vadd.f32 %v90, %v122
  %v130 = vadd.f32 %v91, %v122
  %v131 = vadd.f32 %v92, %v122
  %v132 = vadd.f32 %v93, %v122
  %v133 = vadd.f32 %v94, %v122
  %v134 = vadd.f32 %v95, %v122
  %v135 = vadd.f32 %v96, %v122
  %v136 = vadd.f32 %v97, %v122
  %v137 = vadd.f32 %v98, %v122
  %v138 = vadd.f32 %v99, %v122
  %v139 = vadd.f32 %v100, %v122
  %v140 = vadd.f32 %v101, %v122
  %v141 = vadd.f32 %v102, %v122
  %v142 = vadd.f32 %v103, %v122
  %v143 = vadd.f32 %v104, %v122
  %v144 = vadd.f32 %v105, %v122
  %v145 = vadd.f32 %v106, %v122
  %v146 = vadd.f32 %v107, %v122
  %v147 = vadd.f32 %v108, %v122
  %v148 = vadd.f32 %v109, %v122
  %v149 = vadd.f32 %v110, %v122
  %v150 = vadd.f32 %v111, %v122
  %v151 = vadd.f32 %v112, %v122
  %v152 = vadd.f32 %v113, %v122
  %v153 = vadd.f32 %v114, %v122
  %v154 = vadd.f32 %v115, %v122
  %v155 = vadd.f32 %v116, %v122
  %v156 = vmax.f32 %v124, 0.0
  %v157 = vmax.f32 %v125, 0.0
  %v158 = vmax.f32 %v126, 0.0
  %v159 = vmax.f32 %v127, 0.0
  %v160 = vmax.f32 %v128, 0.0
  %v161 = vmax.f32 %v129, 0.0
  %v162 = vmax.f32 %v130, 0.0
  %v163 = vmax.f32 %v131, 0.0
  %v164 = vmax.f32 %v132, 0.0
  %v165 = vmax.f32 %v133, 0.0
  %v166 = vmax.f32 %v134, 0.0
  %v167 = vmax.f32 %v135, 0.0
  %v168 = vmax.f32 %v136, 0.0
  %v169 = vmax.f32 %v137, 0.0
  %v170 = vmax.f32 %v138, 0.0
  %v171 = vmax.f32 %v139, 0.0
  %v172 = vmax.f32 %v140, 0.0
  %v173 = vmax.f32 %v141, 0.0
  %v174 = vmax.f32 %v142, 0.0
  %v175 = vmax.f32 %v143, 0.0
  %v176 = vmax.f32 %v144, 0.0
  %v177 = vmax.f32 %v145, 0.0
  %v178 = vmax.f32 %v146, 0.0
  %v179 = vmax.f32 %v147, 0.0
  %v180 = vmax.f32 %v148, 0.0
  %v181 = vmax.f32 %v149, 0.0
  %v182 = vmax.f32 %v150, 0.0
  %v183 = vmax.f32 %v151, 0.0
  %v184 = vmax.f32 %v152, 0.0
  %v185 = vmax.f32 %v153, 0.0
  %v186 = vmax.f32 %v154, 0.0
  %v187 = vmax.f32 %v155, 0.0
  %v188 = vpack.c.bf16 %v157, %v156
  %v189 = vpack.c.bf16 %v159, %v158
  %v190 = vpack.c.bf16 %v161, %v160
  %v191 = vpack.c.bf16 %v163, %v162
  %v192 = vpack.c.bf16 %v165, %v164
  %v193 = vpack.c.bf16 %v167, %v166
  %v194 = vpack.c.bf16 %v169, %v168
  %v195 = vpack.c.bf16 %v171, %v170
  %v196 = vpack.c.bf16 %v173, %v172
  %v197 = vpack.c.bf16 %v175, %v174
  %v198 = vpack.c.bf16 %v177, %v176
  %v199 = vpack.c.bf16 %v179, %v178
  %v200 = vpack.c.bf16 %v181, %v180
  %v201 = vpack.c.bf16 %v183, %v182
  %v202 = vpack.c.bf16 %v185, %v184
  %v203 = vpack.c.bf16 %v187, %v186
  %v220 = vunpack.c.l.b16 %v188
  %v221 = vunpack.c.h.b16 %v188
  %v222 = vunpack.c.l.b16 %v189
  %v223 = vunpack.c.h.b16 %v189
  %v224 = vunpack.c.l.b16 %v190
  %v225 = vunpack.c.h.b16 %v190
  %v226 = vunpack.c.l.b16 %v191
  %v227 = vunpack.c.h.b16 %v191
  %v228 = vunpack.c.l.b16 %v192
  %v229 = vunpack.c.h.b16 %v192
  %v230 = vunpack.c.l.b16 %v193
  %v231 = vunpack.c.h.b16 %v193
  %v232 = vunpack.c.l.b16 %v194
  %v233 = vunpack.c.h.b16 %v194
  %v234 = vunpack.c.l.b16 %v195
  %v235 = vunpack.c.h.b16 %v195
  %v236 = vunpack.c.l.b16 %v196
  %v237 = vunpack.c.h.b16 %v196
  %v238 = vunpack.c.l.b16 %v197
  %v239 = vunpack.c.h.b16 %v197
  %v240 = vunpack.c.l.b16 %v198
  %v241 = vunpack.c.h.b16 %v198
  %v242 = vunpack.c.l.b16 %v199
  %v243 = vunpack.c.h.b16 %v199
  %v244 = vunpack.c.l.b16 %v200
  %v245 = vunpack.c.h.b16 %v200
  %v246 = vunpack.c.l.b16 %v201
  %v247 = vunpack.c.h.b16 %v201
  %v248 = vunpack.c.l.b16 %v202
  %v249 = vunpack.c.h.b16 %v202
  %v250 = vunpack.c.l.b16 %v203
  %v251 = vunpack.c.h.b16 %v203
  %v252 = vpack.c.b16 %v220, %v220
  %v253 = vpack.c.b16 %v221, %v221
  %v254 = vpack.c.b16 %v222, %v222
  %v255 = vpack.c.b16 %v223, %v223
  %v256 = vpack.c.b16 %v224, %v224
  %v257 = vpack.c.b16 %v225, %v225
  %v258 = vpack.c.b16 %v226, %v226
  %v259 = vpack.c.b16 %v227, %v227
  %v260 = vpack.c.b16 %v228, %v228
  %v261 = vpack.c.b16 %v229, %v229
  %v262 = vpack.c.b16 %v230, %v230
  %v263 = vpack.c.b16 %v231, %v231
  %v264 = vpack.c.b16 %v232, %v232
  %v265 = vpack.c.b16 %v233, %v233
  %v266 = vpack.c.b16 %v234, %v234
  %v267 = vpack.c.b16 %v235, %v235
  %v268 = vpack.c.b16 %v236, %v236
  %v269 = vpack.c.b16 %v237, %v237
  %v270 = vpack.c.b16 %v238, %v238
  %v271 = vpack.c.b16 %v239, %v239
  %v272 = vpack.c.b16 %v240, %v240
  %v273 = vpack.c.b16 %v241, %v241
  %v274 = vpack.c.b16 %v242, %v242
  %v275 = vpack.c.b16 %v243, %v243
  %v276 = vpack.c.b16 %v244, %v244
  %v277 = vpack.c.b16 %v245, %v245
  %v278 = vpack.c.b16 %v246, %v246
  %v279 = vpack.c.b16 %v247, %v247
  %v280 = vpack.c.b16 %v248, %v248
  %v281 = vpack.c.b16 %v249, %v249
  %v282 = vpack.c.b16 %v250, %v250
  %v283 = vpack.c.b16 %v251, %v251
  %316 = vst [vmem:[%s3] sm:$0xf] %v252
  %317 = vst [vmem:[%s3 + $0x4] sm:$0xf] %v253
  %318 = vst [vmem:[%s3 + $0x8] sm:$0xf] %v254
  %319 = vst [vmem:[%s3 + $0xc] sm:$0xf] %v255
  %320 = vst [vmem:[%s3 + $0x10] sm:$0xf] %v256
  %321 = vst [vmem:[%s3 + $0x14] sm:$0xf] %v257
  %322 = vst [vmem:[%s3 + $0x18] sm:$0xf] %v258
  %323 = vst [vmem:[%s3 + $0x1c] sm:$0xf] %v259
  %324 = vst [vmem:[%s3 + $0x20] sm:$0xf] %v260
  %325 = vst [vmem:[%s3 + $0x24] sm:$0xf] %v261
  %326 = vst [vmem:[%s3 + $0x28] sm:$0xf] %v262
  %327 = vst [vmem:[%s3 + $0x2c] sm:$0xf] %v263
  %328 = vst [vmem:[%s3 + $0x30] sm:$0xf] %v264
  %329 = vst [vmem:[%s3 + $0x34] sm:$0xf] %v265
  %330 = vst [vmem:[%s3 + $0x38] sm:$0xf] %v266
  %331 = vst [vmem:[%s3 + $0x3c] sm:$0xf] %v267
  %332 = vst [vmem:[%s3 + $0x40] sm:$0xf] %v268
  %333 = vst [vmem:[%s3 + $0x44] sm:$0xf] %v269
  %334 = vst [vmem:[%s3 + $0x48] sm:$0xf] %v270
  %335 = vst [vmem:[%s3 + $0x4c] sm:$0xf] %v271
  %336 = vst [vmem:[%s3 + $0x50] sm:$0xf] %v272
  %337 = vst [vmem:[%s3 + $0x54] sm:$0xf] %v273
  %338 = vst [vmem:[%s3 + $0x58] sm:$0xf] %v274
  %339 = vst [vmem:[%s3 + $0x5c] sm:$0xf] %v275
  %340 = vst [vmem:[%s3 + $0x60] sm:$0xf] %v276
  %341 = vst [vmem:[%s3 + $0x64] sm:$0xf] %v277
  %342 = vst [vmem:[%s3 + $0x68] sm:$0xf] %v278
  %343 = vst [vmem:[%s3 + $0x6c] sm:$0xf] %v279
  %344 = vst [vmem:[%s3 + $0x70] sm:$0xf] %v280
  %345 = vst [vmem:[%s3 + $0x74] sm:$0xf] %v281
  %346 = vst [vmem:[%s3 + $0x78] sm:$0xf] %v282
  %347 = vst [vmem:[%s3 + $0x7c] sm:$0xf] %v283
  // Predicated region
  $region14: #{resnet_forward.12} parent=0 // pred_check
    _
  $region15: #{resnet_forward.12} parent=0 // pred_check_branch
    %349 = sbr.rel (0) target = $region17
  $region16: #{resnet_forward.12} parent=0 // pred_region
    _
  $region17: #{resnet_forward.12} parent=0 // pred_fallthru
    _
  // Predicated region
  $region18: #{resnet_forward.12} parent=0 // pred_check
    _
  $region19: #{resnet_forward.12} parent=0 // pred_check_branch
    %351 = sbr.rel (0) target = $region21
  $region20: #{resnet_forward.12} parent=0 // pred_region
    _
  $region21: #{resnet_forward.12} parent=0 // pred_fallthru
    _

// kernel: resnet_forward.11
$region0: #{resnet_forward.11}
  #allocation0 [shape = 'u32[]', space=smem, size = 0x4, offset = 0x4, fixed_abs, tag = 'smem constant byte address 0x4 - core index']
  #allocation1 [shape = 'u32[144,128]{1,0:T(1,128)}', space=vmem, size = 0x12000, scoped, tag = 'internal scratch']
  %s0 = inlined_call_operand.vmem [shape: bf16[512,147], index: 0, kind: input, shape index: {}]
  %s1 = inlined_call_operand.vmem [shape: bf16[147,64], index: 1, kind: input, shape index: {}]
  %s2 = inlined_call_operand.vmem [shape: bf16[512,64], index: 2, kind: output, shape index: {0}]
  %s3 = inlined_call_operand.vmem [shape: f32[1,64], index: 3, kind: output, shape index: {1}]
  %s4 = inlined_call_operand.vmem [shape: f32[1,64], index: 4, kind: output, shape index: {2}]
  %5 = xla_tuple %s2, %s3, %s4
  %s6 = sld [smem:[#allocation0]]
  $region61: #{resnet_forward.11} parent=0
    _
  %s8 = ssub.s32 1, %s6
  %s9 = scalar_select 0, %s8, %s6
  loop: start=0, step=1, limit=4
  $region2: #{resnet_forward.11} parent=0 // loop_pre_header
    _
  $region3: #{resnet_forward.11} parent=0 // loop_header
    %s11 = sphi 0, %s15
    %p12 = scmp.ge.s32.totalorder %s11, 4
    %s21 = sphi 0, %s23
    %s24 = sphi 0, %s21
    %s25 = sphi 0, %s24
    %s41 = sphi 0, %s25
    %s45 = sphi 0, %s45
    %s47 = sphi 0, %s45
    %s48 = sphi 0, %s47
    %s62 = sphi 0, %s48
    %s68 = sphi 0, %s70
    %s71 = sphi 0, %s68
    %s72 = sphi 0, %s71
    %s88 = sphi 0, %s72
    %s92 = sphi 0, %s92
    %s94 = sphi 0, %s92
    %s95 = sphi 0, %s94
    %s109 = sphi 0, %s95
    %s113 = sphi 0, %s113
    %s115 = sphi 0, %s113
    %s116 = sphi 0, %s115
    %s130 = sphi 0, %s116
  $region4: #{resnet_forward.11} parent=0 // loop_header_branch
    %14 = sbr.rel (%p12) target = $region8
  $region5: #{resnet_forward.11} parent=0 // loop_body
    %s16 = ssub.s32 %s11, 1
    %s17 = ssub.s32 %s11, 2
    %s18 = sadd.s32 %s11, 1
    %s19 = ssub.s32 %s11, %s18
    %p20 = scmp.eq.s32.totalorder %s19, 0
    %s22 = sadd.s32 %s21, 1
    %s23 = scalar_select %p20, %s21, %s22
    %p26 = pneg %p20
    %p27 = scmp.eq.s32.totalorder %s11, 1
    %p28 = por %p26, %p27
    %p29 = scmp.ne.s32.totalorder %s21, %s24
    %p30 = scmp.eq.s32.totalorder %s11, 0
    %p31 = por %p29, %p30
    %p32 = scmp.ne.s32.totalorder %s21, %s24
    %p33 = scmp.eq.s32.totalorder %s16, 1
    %p34 = por %p32, %p33
    %p35 = scmp.ne.s32.totalorder %s24, %s25
    %p36 = scmp.eq.s32.totalorder %s16, 0
    %p37 = por %p35, %p36
    %p38 = scmp.ne.s32.totalorder %s24, %s25
    %p39 = scmp.eq.s32.totalorder %s17, 1
    %p40 = por %p38, %p39
    %p42 = scmp.ne.s32.totalorder %s25, %s41
    %p43 = scmp.eq.s32.totalorder %s17, 0
    %p44 = por %p42, %p43
    %s46 = sadd.s32 %s45, 1
    %p49 = scmp.eq.s32.totalorder %s11, 1
    %p50 = scmp.ne.s32.totalorder %s45, %s47
    %p51 = scmp.eq.s32.totalorder %s11, 0
    %p52 = por %p50, %p51
    %p53 = scmp.ne.s32.totalorder %s45, %s47
    %p54 = scmp.eq.s32.totalorder %s16, 1
    %p55 = por %p53, %p54
    %p56 = scmp.ne.s32.totalorder %s47, %s48
    %p57 = scmp.eq.s32.totalorder %s16, 0
    %p58 = por %p56, %p57
    %p59 = scmp.ne.s32.totalorder %s47, %s48
    %p60 = scmp.eq.s32.totalorder %s17, 1
    %p61 = por %p59, %p60
    %p63 = scmp.ne.s32.totalorder %s48, %s62
    %p64 = scmp.eq.s32.totalorder %s17, 0
    %p65 = por %p63, %p64
    %s66 = ssub.s32 %s11, %s18
    %p67 = scmp.eq.s32.totalorder %s66, 0
    %s69 = sadd.s32 %s68, 1
    %s70 = scalar_select %p67, %s68, %s69
    %p73 = pneg %p67
    %p74 = scmp.eq.s32.totalorder %s11, 1
    %p75 = por %p73, %p74
    %p76 = scmp.ne.s32.totalorder %s68, %s71
    %p77 = scmp.eq.s32.totalorder %s11, 0
    %p78 = por %p76, %p77
    %p79 = scmp.ne.s32.totalorder %s68, %s71
    %p80 = scmp.eq.s32.totalorder %s16, 1
    %p81 = por %p79, %p80
    %p82 = scmp.ne.s32.totalorder %s71, %s72
    %p83 = scmp.eq.s32.totalorder %s16, 0
    %p84 = por %p82, %p83
    %p85 = scmp.ne.s32.totalorder %s71, %s72
    %p86 = scmp.eq.s32.totalorder %s17, 1
    %p87 = por %p85, %p86
    %p89 = scmp.ne.s32.totalorder %s72, %s88
    %p90 = scmp.eq.s32.totalorder %s17, 0
    %p91 = por %p89, %p90
    %s93 = sadd.s32 %s92, 1
    %p96 = scmp.eq.s32.totalorder %s11, 1
    %p97 = scmp.ne.s32.totalorder %s92, %s94
    %p98 = scmp.eq.s32.totalorder %s11, 0
    %p99 = por %p97, %p98
    %p100 = scmp.ne.s32.totalorder %s92, %s94
    %p101 = scmp.eq.s32.totalorder %s16, 1
    %p102 = por %p100, %p101
    %p103 = scmp.ne.s32.totalorder %s94, %s95
    %p104 = scmp.eq.s32.totalorder %s16, 0
    %p105 = por %p103, %p104
    %p106 = scmp.ne.s32.totalorder %s94, %s95
    %p107 = scmp.eq.s32.totalorder %s17, 1
    %p108 = por %p106, %p107
    %p110 = scmp.ne.s32.totalorder %s95, %s109
    %p111 = scmp.eq.s32.totalorder %s17, 0
    %p112 = por %p110, %p111
    %s114 = sadd.s32 %s113, 1
    %p117 = scmp.eq.s32.totalorder %s11, 1
    %p118 = scmp.ne.s32.totalorder %s113, %s115
    %p119 = scmp.eq.s32.totalorder %s11, 0
    %p120 = por %p118, %p119
    %p121 = scmp.ne.s32.totalorder %s113, %s115
    %p122 = scmp.eq.s32.totalorder %s16, 1
    %p123 = por %p121, %p122
    %p124 = scmp.ne.s32.totalorder %s115, %s116
    %p125 = scmp.eq.s32.totalorder %s16, 0
    %p126 = por %p124, %p125
    %p127 = scmp.ne.s32.totalorder %s115, %s116
    %p128 = scmp.eq.s32.totalorder %s17, 1
    %p129 = por %p127, %p128
    %p131 = scmp.ne.s32.totalorder %s116, %s130
    %p132 = scmp.eq.s32.totalorder %s17, 0
    %p133 = por %p131, %p132
    %p134 = scmp.le.s32.totalorder 1, %s11
    %p135 = scmp.lt.s32.totalorder %s11, 3
    %p136 = pnand %p134, %p135
    %p137 = pneg %p136
    // Predicated region
    $region9: #{resnet_forward.11} parent=5 // pred_check
      _
    $region10: #{resnet_forward.11} parent=5 // pred_check_branch
      %139 = sbr.rel (%p136) target = $region12
    $region11: #{resnet_forward.11} parent=5 // pred_region
      %s140 = ssub.s32 %s11, 1
      // Predicated region
      $region13: #{resnet_forward.11} parent=11 // pred_check
        %p141 = pneg %p58
      $region14: #{resnet_forward.11} parent=11 // pred_check_branch
        %143 = sbr.rel (%p141) target = $region16
      $region15: #{resnet_forward.11} parent=11 // pred_region
        _
      $region16: #{resnet_forward.11} parent=11 // pred_fallthru
        _
    $region12: #{resnet_forward.11} parent=5 // pred_fallthru
      _
    %p144 = scmp.lt.s32.totalorder %s11, 2
    // Predicated region
    $region17: #{resnet_forward.11} parent=5 // pred_check
      %p145 = pneg %p144
    $region18: #{resnet_forward.11} parent=5 // pred_check_branch
      %147 = sbr.rel (%p145) target = $region20
    $region19: #{resnet_forward.11} parent=5 // pred_region
      // Predicated region
      $region21: #{resnet_forward.11} parent=19 // pred_check
        %p148 = pneg %p31
      $region22: #{resnet_forward.11} parent=19 // pred_check_branch
        %150 = sbr.rel (%p148) target = $region24
      $region23: #{resnet_forward.11} parent=19 // pred_region
        %s151 = smul.u32 32, %s11
        %p152 = scmp.lt.s32.totalorder %s151, 63
        %s153 = scalar_select %p152, %s151, 63
        %s154 = smul.addr %s153, 2
        %s155 = smul.addr %s154, 4
        %s156 = scalar_lea.vmem %s0, %s155
        %s157 = smul.u32 32, %s11
      $region24: #{resnet_forward.11} parent=19 // pred_fallthru
        _
    $region20: #{resnet_forward.11} parent=5 // pred_fallthru
      _
    %p158 = scmp.le.s32.totalorder 1, %s11
    %p159 = scmp.lt.s32.totalorder %s11, 3
    %p160 = pnand %p158, %p159
    %p161 = pneg %p160
    // Predicated region
    $region25: #{resnet_forward.11} parent=5 // pred_check
      _
    $region26: #{resnet_forward.11} parent=5 // pred_check_branch
      %163 = sbr.rel (%p160) target = $region28
    $region27: #{resnet_forward.11} parent=5 // pred_region
      %s164 = ssub.s32 %s11, 1
      %s165 = smul.u32 32, %s16
      %p166 = scmp.lt.s32.totalorder %s165, 63
      %s167 = scalar_select %p166, %s165, 63
      %s168 = smul.addr %s167, 2
      %s169 = smul.addr %s168, 4
      %s170 = scalar_lea.vmem %s0, %s169
      %p171 = pneg %p37
      %p172 = pneg %p34
      %p173 = pneg %p58
      %p174 = pneg %p55
      %p175 = pneg %p84
      %p176 = pneg %p81
      %s177 = smul.u32 32, %s16
      %p178 = scmp.lt.s32.totalorder %s177, 63
      %s179 = scalar_select %p178, %s177, 63
      %s180 = smul.addr %s179, 4
      %s181 = scalar_lea.vmem %s2, %s180
      %p182 = pneg %p105
      %p183 = pneg %p102
      %p184 = pneg %p126
      %p185 = pneg %p123
      %s186 = smul.u32 32, %s16
      %p187 = scmp.lt.s32.totalorder %s186, 63
      %s188 = scalar_select %p187, %s186, 63
      %s189 = smul.addr %s188, 2
      %s190 = smul.addr %s189, 4
      %s191 = scalar_lea.vmem %s0, %s190
      %s192 = smul.u32 32, %s16
      %s193 = smul.u32 32, %s16
      %p194 = scmp.lt.s32.totalorder %s193, 63
      %s195 = scalar_select %p194, %s193, 63
      %s196 = smul.addr %s195, 4
      %s197 = scalar_lea.vmem %s2, %s196
      %s198 = smul.u32 32, %s16
      %v200 = vld [vmem:[%s191] sm:$0xff]
      %v201 = vld [vmem:[%s191 + $0x8] sm:$0xff]
      %v202 = vld [vmem:[%s191 + $0x10] sm:$0xff]
      %v203 = vld [vmem:[%s191 + $0x18] sm:$0xff]
      %v204 = vld [vmem:[%s191 + $0x20] sm:$0xff]
      %v205 = vld [vmem:[%s191 + $0x28] sm:$0xff]
      %v206 = vld [vmem:[%s191 + $0x30] sm:$0xff]
      %v207 = vld [vmem:[%s191 + $0x38] sm:$0xff]
      %v208 = vld [vmem:[%s191 + $0x40] sm:$0xff]
      %v209 = vld [vmem:[%s191 + $0x48] sm:$0xff]
      %v210 = vld [vmem:[%s191 + $0x50] sm:$0xff]
      %v211 = vld [vmem:[%s191 + $0x58] sm:$0xff]
      %v212 = vld [vmem:[%s191 + $0x60] sm:$0xff]
      %v213 = vld [vmem:[%s191 + $0x68] sm:$0xff]
      %v214 = vld [vmem:[%s191 + $0x70] sm:$0xff]
      %v215 = vld [vmem:[%s191 + $0x78] sm:$0xff]
      %v216 = vld [vmem:[%s191 + $0x80] sm:$0xff]
      %v217 = vld [vmem:[%s191 + $0x88] sm:$0xff]
      %v218 = vld [vmem:[%s191 + $0x90] sm:$0xff]
      %v219 = vld [vmem:[%s191 + $0x98] sm:$0xff]
      %v220 = vld [vmem:[%s191 + $0xa0] sm:$0xff]
      %v221 = vld [vmem:[%s191 + $0xa8] sm:$0xff]
      %v222 = vld [vmem:[%s191 + $0xb0] sm:$0xff]
      %v223 = vld [vmem:[%s191 + $0xb8] sm:$0xff]
      %v224 = vld [vmem:[%s191 + $0xc0] sm:$0xff]
      %v225 = vld [vmem:[%s191 + $0xc8] sm:$0xff]
      %v226 = vld [vmem:[%s191 + $0xd0] sm:$0xff]
      %v227 = vld [vmem:[%s191 + $0xd8] sm:$0xff]
      %v228 = vld [vmem:[%s191 + $0xe0] sm:$0xff]
      %v229 = vld [vmem:[%s191 + $0xe8] sm:$0xff]
      %v230 = vld [vmem:[%s191 + $0xf0] sm:$0xff]
      %v231 = vld [vmem:[%s191 + $0xf8] sm:$0xff]
      %v232 = vld [vmem:[%s1] sm:$0xf]
      %v233 = vld [vmem:[%s1 + $0x4] sm:$0xf]
      %v234 = vld [vmem:[%s1 + $0x8] sm:$0xf]
      %v235 = vld [vmem:[%s1 + $0xc] sm:$0xf]
      %v236 = vld [vmem:[%s1 + $0x10] sm:$0xf]
      %v237 = vld [vmem:[%s1 + $0x14] sm:$0xf]
      %v238 = vld [vmem:[%s1 + $0x18] sm:$0xf]
      %v239 = vld [vmem:[%s1 + $0x1c] sm:$0xf]
      %v240 = vld [vmem:[%s1 + $0x20] sm:$0xf]
      %v241 = vld [vmem:[%s1 + $0x24] sm:$0xf]
      %v242 = vld [vmem:[%s1 + $0x28] sm:$0xf]
      %v243 = vld [vmem:[%s1 + $0x2c] sm:$0xf]
      %v244 = vld [vmem:[%s1 + $0x30] sm:$0xf]
      %v245 = vld [vmem:[%s1 + $0x34] sm:$0xf]
      %v246 = vld [vmem:[%s1 + $0x38] sm:$0xf]
      %v247 = vld [vmem:[%s1 + $0x3c] sm:$0xf]
      %v248 = vld [vmem:[%s1 + $0x40] sm:$0xf]
      %v249 = vld [vmem:[%s1 + $0x44] sm:$0xf]
      %v250 = vld [vmem:[%s1 + $0x48] sm:$0x3]
      %v283 = vunpack.c.l.b16 %v200
      %v284 = vunpack.c.h.b16 %v200
      %v285 = vunpack.c.l.b16 %v201
      %v286 = vunpack.c.h.b16 %v201
      %v287 = vunpack.c.l.b16 %v202
      %v288 = vunpack.c.h.b16 %v202
      %v289 = vunpack.c.l.b16 %v203
      %v290 = vunpack.c.h.b16 %v203
      %v291 = vunpack.c.l.b16 %v204
      %v292 = vunpack.c.h.b16 %v204
      %v293 = vunpack.c.l.b16 %v205
      %v294 = vunpack.c.h.b16 %v205
      %v295 = vunpack.c.l.b16 %v206
      %v296 = vunpack.c.h.b16 %v206
      %v297 = vunpack.c.l.b16 %v207
      %v298 = vunpack.c.h.b16 %v207
      %v299 = vunpack.c.l.b16 %v208
      %v300 = vunpack.c.h.b16 %v208
      %v301 = vunpack.c.l.b16 %v209
      %v302 = vunpack.c.h.b16 %v209
      %v303 = vunpack.c.l.b16 %v210
      %v304 = vunpack.c.h.b16 %v210
      %v305 = vunpack.c.l.b16 %v211
      %v306 = vunpack.c.h.b16 %v211
      %v307 = vunpack.c.l.b16 %v212
      %v308 = vunpack.c.h.b16 %v212
      %v309 = vunpack.c.l.b16 %v213
      %v310 = vunpack.c.h.b16 %v213
      %v311 = vunpack.c.l.b16 %v214
      %v312 = vunpack.c.h.b16 %v214
      %v313 = vunpack.c.l.b16 %v215
      %v314 = vunpack.c.h.b16 %v215
      %v315 = vunpack.c.l.b16 %v216
      %v316 = vunpack.c.h.b16 %v216
      %v317 = vunpack.c.l.b16 %v217
      %v318 = vunpack.c.h.b16 %v217
      %v319 = vunpack.c.l.b16 %v218
      %v320 = vunpack.c.h.b16 %v218
      %v321 = vunpack.c.l.b16 %v219
      %v322 = vunpack.c.h.b16 %v219
      %v323 = vunpack.c.l.b16 %v220
      %v324 = vunpack.c.h.b16 %v220
      %v325 = vunpack.c.l.b16 %v221
      %v326 = vunpack.c.h.b16 %v221
      %v327 = vunpack.c.l.b16 %v222
      %v328 = vunpack.c.h.b16 %v222
      %v329 = vunpack.c.l.b16 %v223
      %v330 = vunpack.c.h.b16 %v223
      %v331 = vunpack.c.l.b16 %v224
      %v332 = vunpack.c.h.b16 %v224
      %v333 = vunpack.c.l.b16 %v225
      %v334 = vunpack.c.h.b16 %v225
      %v335 = vunpack.c.l.b16 %v226
      %v336 = vunpack.c.h.b16 %v226
      %v337 = vunpack.c.l.b16 %v227
      %v338 = vunpack.c.h.b16 %v227
      %v339 = vunpack.c.l.b16 %v228
      %v340 = vunpack.c.h.b16 %v228
      %v341 = vunpack.c.l.b16 %v229
      %v342 = vunpack.c.h.b16 %v229
      %v343 = vunpack.c.l.b16 %v230
      %v344 = vunpack.c.h.b16 %v230
      %v345 = vunpack.c.l.b16 %v231
      %v346 = vunpack.c.h.b16 %v231
      %v347 = vpack.c.b16 %v285, %v283
      %v348 = vpack.c.b16 %v286, %v284
      %v349 = vpack.c.b16 %v289, %v287
      %v350 = vpack.c.b16 %v290, %v288
      %v351 = vpack.c.b16 %v293, %v291
      %v352 = vpack.c.b16 %v294, %v292
      %v353 = vpack.c.b16 %v297, %v295
      %v354 = vpack.c.b16 %v298, %v296
      %v355 = vpack.c.b16 %v301, %v299
      %v356 = vpack.c.b16 %v302, %v300
      %v357 = vpack.c.b16 %v305, %v303
      %v358 = vpack.c.b16 %v306, %v304
      %v359 = vpack.c.b16 %v309, %v307
      %v360 = vpack.c.b16 %v310, %v308
      %v361 = vpack.c.b16 %v313, %v311
      %v362 = vpack.c.b16 %v314, %v312
      %v363 = vpack.c.b16 %v317, %v315
      %v364 = vpack.c.b16 %v318, %v316
      %v365 = vpack.c.b16 %v321, %v319
      %v366 = vpack.c.b16 %v322, %v320
      %v367 = vpack.c.b16 %v325, %v323
      %v368 = vpack.c.b16 %v326, %v324
      %v369 = vpack.c.b16 %v329, %v327
      %v370 = vpack.c.b16 %v330, %v328
      %v371 = vpack.c.b16 %v333, %v331
      %v372 = vpack.c.b16 %v334, %v332
      %v373 = vpack.c.b16 %v337, %v335
      %v374 = vpack.c.b16 %v338, %v336
      %v375 = vpack.c.b16 %v341, %v339
      %v376 = vpack.c.b16 %v342, %v340
      %v377 = vpack.c.b16 %v345, %v343
      %v378 = vpack.c.b16 %v346, %v344
      %v414 = vunpack.c.l.b16 %v232
      %v415 = vunpack.c.l.b16 %v233
      %v416 = vunpack.c.l.b16 %v234
      %v417 = vunpack.c.l.b16 %v235
      %v418 = vunpack.c.l.b16 %v236
      %v419 = vunpack.c.l.b16 %v237
      %v420 = vunpack.c.l.b16 %v238
      %v421 = vunpack.c.l.b16 %v239
      %v422 = vunpack.c.l.b16 %v240
      %v423 = vunpack.c.l.b16 %v241
      %v424 = vunpack.c.l.b16 %v242
      %v425 = vunpack.c.l.b16 %v243
      %v426 = vunpack.c.l.b16 %v244
      %v427 = vunpack.c.l.b16 %v245
      %v428 = vunpack.c.l.b16 %v246
      %v429 = vunpack.c.l.b16 %v247
      %v430 = vunpack.c.l.b16 %v248
      %v431 = vunpack.c.l.b16 %v249
      %v432 = vunpack.c.l.b16 %v250
      %v433 = vpack.c.b16 %v415, %v414
      %v434 = vpack.c.b16 %v417, %v416
      %v435 = vpack.c.b16 %v419, %v418
      %v436 = vpack.c.b16 %v421, %v420
      %v437 = vpack.c.b16 %v423, %v422
      %v438 = vpack.c.b16 %v425, %v424
      %v439 = vpack.c.b16 %v427, %v426
      %v440 = vpack.c.b16 %v429, %v428
      %v441 = vpack.c.b16 %v431, %v430
      %v442 = vpack.c.b16 %v432, %v432
      %vm452 = vcmask 154624
      %v454 = vsel %vm452, %v348, 0
      %v457 = vsel %vm452, %v350, 0
      %v460 = vsel %vm452, %v352, 0
      %v463 = vsel %vm452, %v354, 0
      %v466 = vsel %vm452, %v356, 0
      %v469 = vsel %vm452, %v358, 0
      %v472 = vsel %vm452, %v360, 0
      %v475 = vsel %vm452, %v362, 0
      %v478 = vsel %vm452, %v364, 0
      %v481 = vsel %vm452, %v366, 0
      %v484 = vsel %vm452, %v368, 0
      %v487 = vsel %vm452, %v370, 0
      %v490 = vsel %vm452, %v372, 0
      %v493 = vsel %vm452, %v374, 0
      %v496 = vsel %vm452, %v376, 0
      %v499 = vsel %vm452, %v378, 0
      %vm501 = vcmask 1040384
      %vm502 = vcmask 1041408
      %v503 = vsel %vm501, 4294967295, 65535
      %v504 = vsel %vm502, %v503, 0
      %v506 = vand.u32 %v442, %v504
      %508 = vmatprep.subr.bf16.mxu0 0
      %509 = vmatpush1.bf16.msra.mxu0 %v433
      %510 = vmatprep.subr.bf16.mxu0 0
      %511 = vmatpush1.bf16.msra.mxu0 %v434
      %512 = vmatprep.subr.bf16.mxu0 0
      %513 = vmatpush1.bf16.msra.mxu0 %v435
      %514 = vmatprep.subr.bf16.mxu0 0
      %515 = vmatpush1.bf16.msra.mxu0 %v436
      %516 = vmatprep.subr.bf16.mxu0 0
      %517 = vmatpush1.bf16.msra.mxu0 %v437
      %518 = vmatprep.subr.bf16.mxu0 0
      %519 = vmatpush1.bf16.msra.mxu0 %v438
      %520 = vmatprep.subr.bf16.mxu0 0
      %521 = vmatpush1.bf16.msra.mxu0 %v439
      %522 = vmatprep.subr.bf16.mxu0 0
      %523 = vmatpush1.bf16.msra.mxu0 %v440
      %524 = vmatprep.subr.bf16.mxu0 0
      %525 = vmatpush1.bf16.msra.mxu0 %v441
      %526 = vmatprep.subr.bf16.mxu0 0
      %527 = vmatpush1.bf16.msra.mxu0 %v506
      %528 = vmatprep.subr.bf16.mxu0 0
      %529 = vmatpush1.bf16.msra.mxu0 0
      %530 = vmatprep.subr.bf16.mxu0 0
      %531 = vmatpush1.bf16.msra.mxu0 0
      %532 = vmatprep.subr.bf16.mxu0 0
      %533 = vmatpush1.bf16.msra.mxu0 0
      %534 = vmatprep.subr.bf16.mxu0 0
      %535 = vmatpush1.bf16.msra.mxu0 0
      %536 = vmatprep.subr.bf16.mxu0 0
      %537 = vmatpush1.bf16.msra.mxu0 0
      %538 = vmatprep.subr.bf16.mxu0 0
      %539 = vmatpush1.bf16.msra.mxu0 0
      %540 = vmatprep.mubr.bf16.mxu0 %v454
      %541 = vmatmul.mubr.bf16.gmra.mrb[0].mxu0 %v347
      %v542 = vpop.f32.mrb[0].mxu0
      %v543 = vadd.f32 0.0, %v542
      %v544 = vpop.f32.mrb[0].mxu0
      %v545 = vpop.f32.mrb[0].mxu0
      %v546 = vadd.f32 0.0, %v545
      %v547 = vpop.f32.mrb[0].mxu0
      %548 = vmatprep.mubr.bf16.mxu0 %v457
      %549 = vmatmul.mubr.bf16.gmra.mrb[0].mxu0 %v349
      %v550 = vpop.f32.mrb[0].mxu0
      %v551 = vadd.f32 0.0, %v550
      %v552 = vpop.f32.mrb[0].mxu0
      %v553 = vpop.f32.mrb[0].mxu0
      %v554 = vadd.f32 0.0, %v553
      %v555 = vpop.f32.mrb[0].mxu0
      %556 = vmatprep.mubr.bf16.mxu0 %v460
      %557 = vmatmul.mubr.bf16.gmra.mrb[0].mxu0 %v351
      %v558 = vpop.f32.mrb[0].mxu0
      %v559 = vadd.f32 0.0, %v558
      %v560 = vpop.f32.mrb[0].mxu0
      %v561 = vpop.f32.mrb[0].mxu0
      %v562 = vadd.f32 0.0, %v561
      %v563 = vpop.f32.mrb[0].mxu0
      %564 = vmatprep.mubr.bf16.mxu0 %v463
      %565 = vmatmul.mubr.bf16.gmra.mrb[0].mxu0 %v353
      %v566 = vpop.f32.mrb[0].mxu0
      %v567 = vadd.f32 0.0, %v566
      %v568 = vpop.f32.mrb[0].mxu0
      %v569 = vpop.f32.mrb[0].mxu0
      %v570 = vadd.f32 0.0, %v569
      %v571 = vpop.f32.mrb[0].mxu0
      %572 = vmatprep.mubr.bf16.mxu0 %v466
      %573 = vmatmul.mubr.bf16.gmra.mrb[0].mxu0 %v355
      %v574 = vpop.f32.mrb[0].mxu0
      %v575 = vadd.f32 0.0, %v574
      %v576 = vpop.f32.mrb[0].mxu0
      %v577 = vpop.f32.mrb[0].mxu0
      %v578 = vadd.f32 0.0, %v577
      %v579 = vpop.f32.mrb[0].mxu0
      %580 = vmatprep.mubr.bf16.mxu0 %v469
      %581 = vmatmul.mubr.bf16.gmra.mrb[0].mxu0 %v357
      %v582 = vpop.f32.mrb[0].mxu0
      %v583 = vadd.f32 0.0, %v582
      %v584 = vpop.f32.mrb[0].mxu0
      %v585 = vpop.f32.mrb[0].mxu0
      %v586 = vadd.f32 0.0, %v585
      %v587 = vpop.f32.mrb[0].mxu0
      %588 = vmatprep.mubr.bf16.mxu0 %v472
      %589 = vmatmul.mubr.bf16.gmra.mrb[0].mxu0 %v359
      %v590 = vpop.f32.mrb[0].mxu0
      %v591 = vadd.f32 0.0, %v590
      %v592 = vpop.f32.mrb[0].mxu0
      %v593 = vpop.f32.mrb[0].mxu0
      %v594 = vadd.f32 0.0, %v593
      %v595 = vpop.f32.mrb[0].mxu0
      %596 = vmatprep.mubr.bf16.mxu0 %v475
      %597 = vmatmul.mubr.bf16.gmra.mrb[0].mxu0 %v361
      %v598 = vpop.f32.mrb[0].mxu0
      %v599 = vadd.f32 0.0, %v598
      %v600 = vpop.f32.mrb[0].mxu0
      %v601 = vpop.f32.mrb[0].mxu0
      %v602 = vadd.f32 0.0, %v601
      %v603 = vpop.f32.mrb[0].mxu0
      %604 = vmatprep.mubr.bf16.mxu0 %v478
      %605 = vmatmul.mubr.bf16.gmra.mrb[0].mxu0 %v363
      %v606 = vpop.f32.mrb[0].mxu0
      %v607 = vadd.f32 0.0, %v606
      %v608 = vpop.f32.mrb[0].mxu0
      %v609 = vpop.f32.mrb[0].mxu0
      %v610 = vadd.f32 0.0, %v609
      %v611 = vpop.f32.mrb[0].mxu0
      %612 = vmatprep.mubr.bf16.mxu0 %v481
      %613 = vmatmul.mubr.bf16.gmra.mrb[0].mxu0 %v365
      %v614 = vpop.f32.mrb[0].mxu0
      %v615 = vadd.f32 0.0, %v614
      %v616 = vpop.f32.mrb[0].mxu0
      %v617 = vpop.f32.mrb[0].mxu0
      %v618 = vadd.f32 0.0, %v617
      %v619 = vpop.f32.mrb[0].mxu0
      %620 = vmatprep.mubr.bf16.mxu0 %v484
      %621 = vmatmul.mubr.bf16.gmra.mrb[0].mxu0 %v367
      %v622 = vpop.f32.mrb[0].mxu0
      %v623 = vadd.f32 0.0, %v622
      %v624 = vpop.f32.mrb[0].mxu0
      %v625 = vpop.f32.mrb[0].mxu0
      %v626 = vadd.f32 0.0, %v625
      %v627 = vpop.f32.mrb[0].mxu0
      %628 = vmatprep.mubr.bf16.mxu0 %v487
      %629 = vmatmul.mubr.bf16.gmra.mrb[0].mxu0 %v369
      %v630 = vpop.f32.mrb[0].mxu0
      %v631 = vadd.f32 0.0, %v630
      %v632 = vpop.f32.mrb[0].mxu0
      %v633 = vpop.f32.mrb[0].mxu0
      %v634 = vadd.f32 0.0, %v633
      %v635 = vpop.f32.mrb[0].mxu0
      %636 = vmatprep.mubr.bf16.mxu0 %v490
      %637 = vmatmul.mubr.bf16.gmra.mrb[0].mxu0 %v371
      %v638 = vpop.f32.mrb[0].mxu0
      %v639 = vadd.f32 0.0, %v638
      %v640 = vpop.f32.mrb[0].mxu0
      %v641 = vpop.f32.mrb[0].mxu0
      %v642 = vadd.f32 0.0, %v641
      %v643 = vpop.f32.mrb[0].mxu0
      %644 = vmatprep.mubr.bf16.mxu0 %v493
      %645 = vmatmul.mubr.bf16.gmra.mrb[0].mxu0 %v373
      %v646 = vpop.f32.mrb[0].mxu0
      %v647 = vadd.f32 0.0, %v646
      %v648 = vpop.f32.mrb[0].mxu0
      %v649 = vpop.f32.mrb[0].mxu0
      %v650 = vadd.f32 0.0, %v649
      %v651 = vpop.f32.mrb[0].mxu0
      %652 = vmatprep.mubr.bf16.mxu0 %v496
      %653 = vmatmul.mubr.bf16.gmra.mrb[0].mxu0 %v375
      %v654 = vpop.f32.mrb[0].mxu0
      %v655 = vadd.f32 0.0, %v654
      %v656 = vpop.f32.mrb[0].mxu0
      %v657 = vpop.f32.mrb[0].mxu0
      %v658 = vadd.f32 0.0, %v657
      %v659 = vpop.f32.mrb[0].mxu0
      %660 = vmatprep.mubr.bf16.mxu0 %v499
      %661 = vmatmul.mubr.bf16.gmra.mrb[0].mxu0 %v377
      %v662 = vpop.f32.mrb[0].mxu0
      %v663 = vadd.f32 0.0, %v662
      %v664 = vpop.f32.mrb[0].mxu0
      %v665 = vpop.f32.mrb[0].mxu0
      %v666 = vadd.f32 0.0, %v665
      %v667 = vpop.f32.mrb[0].mxu0
      %668 = vdwg.mxu0
      %p669 = scmp.eq.s32.totalorder %s16, 0
      // Predicated region
      $region29: #{resnet_forward.11} parent=27 // pred_check
        %p670 = pneg %p669
      $region30: #{resnet_forward.11} parent=27 // pred_check_branch
        %672 = sbr.rel (%p670) target = $region32
      $region31: #{resnet_forward.11} parent=27 // pred_region
        %vm673 = vcmask 516096
        %674 = vst.msk [vmem:[%s3] sm:$0x1] %vm673, 0.0
        %675 = vst.msk [vmem:[%s4] sm:$0x1] %vm673, 0.0
      $region32: #{resnet_forward.11} parent=27 // pred_fallthru
        _
      %v676 = vld [vmem:[%s3] sm:$0x1]
      %vm677 = vcmask 523264
      %v678 = vsel %vm677, %v543, 0.0
      %v679 = vsel %vm677, %v546, 0.0
      %v680 = vadd.f32 %v678, %v679
      %v681 = vsel %vm677, %v551, 0.0
      %v682 = vadd.f32 %v680, %v681
      %v683 = vsel %vm677, %v554, 0.0
      %v684 = vadd.f32 %v682, %v683
      %v685 = vsel %vm677, %v559, 0.0
      %v686 = vadd.f32 %v684, %v685
      %v687 = vsel %vm677, %v562, 0.0
      %v688 = vadd.f32 %v686, %v687
      %v689 = vsel %vm677, %v567, 0.0
      %v690 = vadd.f32 %v688, %v689
      %v691 = vsel %vm677, %v570, 0.0
      %v692 = vadd.f32 %v690, %v691
      %v693 = vsel %vm677, %v575, 0.0
      %v694 = vadd.f32 %v692, %v693
      %v695 = vsel %vm677, %v578, 0.0
      %v696 = vadd.f32 %v694, %v695
      %v697 = vsel %vm677, %v583, 0.0
      %v698 = vadd.f32 %v696, %v697
      %v699 = vsel %vm677, %v586, 0.0
      %v700 = vadd.f32 %v698, %v699
      %v701 = vsel %vm677, %v591, 0.0
      %v702 = vadd.f32 %v700, %v701
      %v703 = vsel %vm677, %v594, 0.0
      %v704 = vadd.f32 %v702, %v703
      %v705 = vsel %vm677, %v599, 0.0
      %v706 = vadd.f32 %v704, %v705
      %v707 = vsel %vm677, %v602, 0.0
      %v708 = vadd.f32 %v706, %v707
      %v709 = vsel %vm677, %v607, 0.0
      %v710 = vadd.f32 %v708, %v709
      %v711 = vsel %vm677, %v610, 0.0
      %v712 = vadd.f32 %v710, %v711
      %v713 = vsel %vm677, %v615, 0.0
      %v714 = vadd.f32 %v712, %v713
      %v715 = vsel %vm677, %v618, 0.0
      %v716 = vadd.f32 %v714, %v715
      %v717 = vsel %vm677, %v623, 0.0
      %v718 = vadd.f32 %v716, %v717
      %v719 = vsel %vm677, %v626, 0.0
      %v720 = vadd.f32 %v718, %v719
      %v721 = vsel %vm677, %v631, 0.0
      %v722 = vadd.f32 %v720, %v721
      %v723 = vsel %vm677, %v634, 0.0
      %v724 = vadd.f32 %v722, %v723
      %v725 = vsel %vm677, %v639, 0.0
      %v726 = vadd.f32 %v724, %v725
      %v727 = vsel %vm677, %v642, 0.0
      %v728 = vadd.f32 %v726, %v727
      %v729 = vsel %vm677, %v647, 0.0
      %v730 = vadd.f32 %v728, %v729
      %v731 = vsel %vm677, %v650, 0.0
      %v732 = vadd.f32 %v730, %v731
      %v733 = vsel %vm677, %v655, 0.0
      %v734 = vadd.f32 %v732, %v733
      %v735 = vsel %vm677, %v658, 0.0
      %v736 = vadd.f32 %v734, %v735
      %v737 = vsel %vm677, %v663, 0.0
      %v738 = vadd.f32 %v736, %v737
      %v739 = vsel %vm677, %v666, 0.0
      %v740 = vadd.f32 %v738, %v739
      %v741 = vrot.slane %v740, 4
      %v742 = vadd.f32 %v740, %v741
      %v743 = vrot.slane %v742, 2
      %v744 = vadd.f32 %v742, %v743
      %v745 = vrot.slane %v744, 1
      %v746 = vadd.f32 %v744, %v745
      %v747 = vadd.f32 %v676, %v746
      %vm748 = vcmask 516096
      %749 = vst.msk [vmem:[%s3] sm:$0x1] %vm748, %v747
      %v750 = vld [vmem:[%s4] sm:$0x1]
      %v751 = vmul.f32 %v543, %v543
      %v752 = vmul.f32 %v546, %v546
      %v753 = vmul.f32 %v551, %v551
      %v754 = vmul.f32 %v554, %v554
      %v755 = vmul.f32 %v559, %v559
      %v756 = vmul.f32 %v562, %v562
      %v757 = vmul.f32 %v567, %v567
      %v758 = vmul.f32 %v570, %v570
      %v759 = vmul.f32 %v575, %v575
      %v760 = vmul.f32 %v578, %v578
      %v761 = vmul.f32 %v583, %v583
      %v762 = vmul.f32 %v586, %v586
      %v763 = vmul.f32 %v591, %v591
      %v764 = vmul.f32 %v594, %v594
      %v765 = vmul.f32 %v599, %v599
      %v766 = vmul.f32 %v602, %v602
      %v767 = vmul.f32 %v607, %v607
      %v768 = vmul.f32 %v610, %v610
      %v769 = vmul.f32 %v615, %v615
      %v770 = vmul.f32 %v618, %v618
      %v771 = vmul.f32 %v623, %v623
      %v772 = vmul.f32 %v626, %v626
      %v773 = vmul.f32 %v631, %v631
      %v774 = vmul.f32 %v634, %v634
      %v775 = vmul.f32 %v639, %v639
      %v776 = vmul.f32 %v642, %v642
      %v777 = vmul.f32 %v647, %v647
      %v778 = vmul.f32 %v650, %v650
      %v779 = vmul.f32 %v655, %v655
      %v780 = vmul.f32 %v658, %v658
      %v781 = vmul.f32 %v663, %v663
      %v782 = vmul.f32 %v666, %v666
      %v783 = vsel %vm677, %v751, 0.0
      %v784 = vsel %vm677, %v752, 0.0
      %v785 = vadd.f32 %v783, %v784
      %v786 = vsel %vm677, %v753, 0.0
      %v787 = vadd.f32 %v785, %v786
      %v788 = vsel %vm677, %v754, 0.0
      %v789 = vadd.f32 %v787, %v788
      %v790 = vsel %vm677, %v755, 0.0
      %v791 = vadd.f32 %v789, %v790
      %v792 = vsel %vm677, %v756, 0.0
      %v793 = vadd.f32 %v791, %v792
      %v794 = vsel %vm677, %v757, 0.0
      %v795 = vadd.f32 %v793, %v794
      %v796 = vsel %vm677, %v758, 0.0
      %v797 = vadd.f32 %v795, %v796
      %v798 = vsel %vm677, %v759, 0.0
      %v799 = vadd.f32 %v797, %v798
      %v800 = vsel %vm677, %v760, 0.0
      %v801 = vadd.f32 %v799, %v800
      %v802 = vsel %vm677, %v761, 0.0
      %v803 = vadd.f32 %v801, %v802
      %v804 = vsel %vm677, %v762, 0.0
      %v805 = vadd.f32 %v803, %v804
      %v806 = vsel %vm677, %v763, 0.0
      %v807 = vadd.f32 %v805, %v806
      %v808 = vsel %vm677, %v764, 0.0
      %v809 = vadd.f32 %v807, %v808
      %v810 = vsel %vm677, %v765, 0.0
      %v811 = vadd.f32 %v809, %v810
      %v812 = vsel %vm677, %v766, 0.0
      %v813 = vadd.f32 %v811, %v812
      %v814 = vsel %vm677, %v767, 0.0
      %v815 = vadd.f32 %v813, %v814
      %v816 = vsel %vm677, %v768, 0.0
      %v817 = vadd.f32 %v815, %v816
      %v818 = vsel %vm677, %v769, 0.0
      %v819 = vadd.f32 %v817, %v818
      %v820 = vsel %vm677, %v770, 0.0
      %v821 = vadd.f32 %v819, %v820
      %v822 = vsel %vm677, %v771, 0.0
      %v823 = vadd.f32 %v821, %v822
      %v824 = vsel %vm677, %v772, 0.0
      %v825 = vadd.f32 %v823, %v824
      %v826 = vsel %vm677, %v773, 0.0
      %v827 = vadd.f32 %v825, %v826
      %v828 = vsel %vm677, %v774, 0.0
      %v829 = vadd.f32 %v827, %v828
      %v830 = vsel %vm677, %v775, 0.0
      %v831 = vadd.f32 %v829, %v830
      %v832 = vsel %vm677, %v776, 0.0
      %v833 = vadd.f32 %v831, %v832
      %v834 = vsel %vm677, %v777, 0.0
      %v835 = vadd.f32 %v833, %v834
      %v836 = vsel %vm677, %v778, 0.0
      %v837 = vadd.f32 %v835, %v836
      %v838 = vsel %vm677, %v779, 0.0
      %v839 = vadd.f32 %v837, %v838
      %v840 = vsel %vm677, %v780, 0.0
      %v841 = vadd.f32 %v839, %v840
      %v842 = vsel %vm677, %v781, 0.0
      %v843 = vadd.f32 %v841, %v842
      %v844 = vsel %vm677, %v782, 0.0
      %v845 = vadd.f32 %v843, %v844
      %v846 = vrot.slane %v845, 4
      %v847 = vadd.f32 %v845, %v846
      %v848 = vrot.slane %v847, 2
      %v849 = vadd.f32 %v847, %v848
      %v850 = vrot.slane %v849, 1
      %v851 = vadd.f32 %v849, %v850
      %v852 = vadd.f32 %v750, %v851
      %853 = vst.msk [vmem:[%s4] sm:$0x1] %vm748, %v852
      %v854 = vpack.c.bf16 %v546, %v543
      %v855 = vpack.c.bf16 %v554, %v551
      %v856 = vpack.c.bf16 %v562, %v559
      %v857 = vpack.c.bf16 %v570, %v567
      %v858 = vpack.c.bf16 %v578, %v575
      %v859 = vpack.c.bf16 %v586, %v583
      %v860 = vpack.c.bf16 %v594, %v591
      %v861 = vpack.c.bf16 %v602, %v599
      %v862 = vpack.c.bf16 %v610, %v607
      %v863 = vpack.c.bf16 %v618, %v615
      %v864 = vpack.c.bf16 %v626, %v623
      %v865 = vpack.c.bf16 %v634, %v631
      %v866 = vpack.c.bf16 %v642, %v639
      %v867 = vpack.c.bf16 %v650, %v647
      %v868 = vpack.c.bf16 %v658, %v655
      %v869 = vpack.c.bf16 %v666, %v663
      %v886 = vunpack.c.l.b16 %v854
      %v887 = vunpack.c.h.b16 %v854
      %v888 = vunpack.c.l.b16 %v855
      %v889 = vunpack.c.h.b16 %v855
      %v890 = vunpack.c.l.b16 %v856
      %v891 = vunpack.c.h.b16 %v856
      %v892 = vunpack.c.l.b16 %v857
      %v893 = vunpack.c.h.b16 %v857
      %v894 = vunpack.c.l.b16 %v858
      %v895 = vunpack.c.h.b16 %v858
      %v896 = vunpack.c.l.b16 %v859
      %v897 = vunpack.c.h.b16 %v859
      %v898 = vunpack.c.l.b16 %v860
      %v899 = vunpack.c.h.b16 %v860
      %v900 = vunpack.c.l.b16 %v861
      %v901 = vunpack.c.h.b16 %v861
      %v902 = vunpack.c.l.b16 %v862
      %v903 = vunpack.c.h.b16 %v862
      %v904 = vunpack.c.l.b16 %v863
      %v905 = vunpack.c.h.b16 %v863
      %v906 = vunpack.c.l.b16 %v864
      %v907 = vunpack.c.h.b16 %v864
      %v908 = vunpack.c.l.b16 %v865
      %v909 = vunpack.c.h.b16 %v865
      %v910 = vunpack.c.l.b16 %v866
      %v911 = vunpack.c.h.b16 %v866
      %v912 = vunpack.c.l.b16 %v867
      %v913 = vunpack.c.h.b16 %v867
      %v914 = vunpack.c.l.b16 %v868
      %v915 = vunpack.c.h.b16 %v868
      %v916 = vunpack.c.l.b16 %v869
      %v917 = vunpack.c.h.b16 %v869
      %v918 = vpack.c.b16 %v886, %v886
      %v919 = vpack.c.b16 %v887, %v887
      %v920 = vpack.c.b16 %v888, %v888
      %v921 = vpack.c.b16 %v889, %v889
      %v922 = vpack.c.b16 %v890, %v890
      %v923 = vpack.c.b16 %v891, %v891
      %v924 = vpack.c.b16 %v892, %v892
      %v925 = vpack.c.b16 %v893, %v893
      %v926 = vpack.c.b16 %v894, %v894
      %v927 = vpack.c.b16 %v895, %v895
      %v928 = vpack.c.b16 %v896, %v896
      %v929 = vpack.c.b16 %v897, %v897
      %v930 = vpack.c.b16 %v898, %v898
      %v931 = vpack.c.b16 %v899, %v899
      %v932 = vpack.c.b16 %v900, %v900
      %v933 = vpack.c.b16 %v901, %v901
      %v934 = vpack.c.b16 %v902, %v902
      %v935 = vpack.c.b16 %v903, %v903
      %v936 = vpack.c.b16 %v904, %v904
      %v937 = vpack.c.b16 %v905, %v905
      %v938 = vpack.c.b16 %v906, %v906
      %v939 = vpack.c.b16 %v907, %v907
      %v940 = vpack.c.b16 %v908, %v908
      %v941 = vpack.c.b16 %v909, %v909
      %v942 = vpack.c.b16 %v910, %v910
      %v943 = vpack.c.b16 %v911, %v911
      %v944 = vpack.c.b16 %v912, %v912
      %v945 = vpack.c.b16 %v913, %v913
      %v946 = vpack.c.b16 %v914, %v914
      %v947 = vpack.c.b16 %v915, %v915
      %v948 = vpack.c.b16 %v916, %v916
      %v949 = vpack.c.b16 %v917, %v917
      %vm982 = vcmask 519168
      %983 = vst.msk [vmem:[%s197] sm:$0xf] %vm982, %v918
      %984 = vst.msk [vmem:[%s197 + $0x4] sm:$0xf] %vm982, %v919
      %985 = vst.msk [vmem:[%s197 + $0x8] sm:$0xf] %vm982, %v920
      %986 = vst.msk [vmem:[%s197 + $0xc] sm:$0xf] %vm982, %v921
      %987 = vst.msk [vmem:[%s197 + $0x10] sm:$0xf] %vm982, %v922
      %988 = vst.msk [vmem:[%s197 + $0x14] sm:$0xf] %vm982, %v923
      %989 = vst.msk [vmem:[%s197 + $0x18] sm:$0xf] %vm982, %v924
      %990 = vst.msk [vmem:[%s197 + $0x1c] sm:$0xf] %vm982, %v925
      %991 = vst.msk [vmem:[%s197 + $0x20] sm:$0xf] %vm982, %v926
      %992 = vst.msk [vmem:[%s197 + $0x24] sm:$0xf] %vm982, %v927
      %993 = vst.msk [vmem:[%s197 + $0x28] sm:$0xf] %vm982, %v928
      %994 = vst.msk [vmem:[%s197 + $0x2c] sm:$0xf] %vm982, %v929
      %995 = vst.msk [vmem:[%s197 + $0x30] sm:$0xf] %vm982, %v930
      %996 = vst.msk [vmem:[%s197 + $0x34] sm:$0xf] %vm982, %v931
      %997 = vst.msk [vmem:[%s197 + $0x38] sm:$0xf] %vm982, %v932
      %998 = vst.msk [vmem:[%s197 + $0x3c] sm:$0xf] %vm982, %v933
      %999 = vst.msk [vmem:[%s197 + $0x40] sm:$0xf] %vm982, %v934
      %1000 = vst.msk [vmem:[%s197 + $0x44] sm:$0xf] %vm982, %v935
      %1001 = vst.msk [vmem:[%s197 + $0x48] sm:$0xf] %vm982, %v936
      %1002 = vst.msk [vmem:[%s197 + $0x4c] sm:$0xf] %vm982, %v937
      %1003 = vst.msk [vmem:[%s197 + $0x50] sm:$0xf] %vm982, %v938
      %1004 = vst.msk [vmem:[%s197 + $0x54] sm:$0xf] %vm982, %v939
      %1005 = vst.msk [vmem:[%s197 + $0x58] sm:$0xf] %vm982, %v940
      %1006 = vst.msk [vmem:[%s197 + $0x5c] sm:$0xf] %vm982, %v941
      %1007 = vst.msk [vmem:[%s197 + $0x60] sm:$0xf] %vm982, %v942
      %1008 = vst.msk [vmem:[%s197 + $0x64] sm:$0xf] %vm982, %v943
      %1009 = vst.msk [vmem:[%s197 + $0x68] sm:$0xf] %vm982, %v944
      %1010 = vst.msk [vmem:[%s197 + $0x6c] sm:$0xf] %vm982, %v945
      %1011 = vst.msk [vmem:[%s197 + $0x70] sm:$0xf] %vm982, %v946
      %1012 = vst.msk [vmem:[%s197 + $0x74] sm:$0xf] %vm982, %v947
      %1013 = vst.msk [vmem:[%s197 + $0x78] sm:$0xf] %vm982, %v948
      %1014 = vst.msk [vmem:[%s197 + $0x7c] sm:$0xf] %vm982, %v949
      %s1015 = smul.u32 32, %s16
      %p1016 = scmp.lt.s32.totalorder %s1015, 63
      %s1017 = scalar_select %p1016, %s1015, 63
      %s1018 = smul.addr %s1017, 4
      %s1019 = scalar_lea.vmem %s2, %s1018
      // Predicated region
      $region33: #{resnet_forward.11} parent=27 // pred_check
        %p1020 = pneg %p81
      $region34: #{resnet_forward.11} parent=27 // pred_check_branch
        %1022 = sbr.rel (%p1020) target = $region36
      $region35: #{resnet_forward.11} parent=27 // pred_region
        %s1023 = smul.u32 32, %s16
      $region36: #{resnet_forward.11} parent=27 // pred_fallthru
        _
      // Predicated region
      $region37: #{resnet_forward.11} parent=27 // pred_check
        %p1024 = pneg %p102
      $region38: #{resnet_forward.11} parent=27 // pred_check_branch
        %1026 = sbr.rel (%p1024) target = $region40
      $region39: #{resnet_forward.11} parent=27 // pred_region
        _
      $region40: #{resnet_forward.11} parent=27 // pred_fallthru
        _
      // Predicated region
      $region41: #{resnet_forward.11} parent=27 // pred_check
        %p1027 = pneg %p123
      $region42: #{resnet_forward.11} parent=27 // pred_check_branch
        %1029 = sbr.rel (%p1027) target = $region44
      $region43: #{resnet_forward.11} parent=27 // pred_region
        _
      $region44: #{resnet_forward.11} parent=27 // pred_fallthru
        _
      // Predicated region
      $region45: #{resnet_forward.11} parent=27 // pred_check
        %p1030 = pneg %p102
      $region46: #{resnet_forward.11} parent=27 // pred_check_branch
        %1032 = sbr.rel (%p1030) target = $region48
      $region47: #{resnet_forward.11} parent=27 // pred_region
        _
      $region48: #{resnet_forward.11} parent=27 // pred_fallthru
        _
      // Predicated region
      $region49: #{resnet_forward.11} parent=27 // pred_check
        %p1033 = pneg %p123
      $region50: #{resnet_forward.11} parent=27 // pred_check_branch
        %1035 = sbr.rel (%p1033) target = $region52
      $region51: #{resnet_forward.11} parent=27 // pred_region
        _
      $region52: #{resnet_forward.11} parent=27 // pred_fallthru
        _
    $region28: #{resnet_forward.11} parent=5 // pred_fallthru
      _
    %p1036 = scmp.le.s32.totalorder 2, %s11
    // Predicated region
    $region53: #{resnet_forward.11} parent=5 // pred_check
      %p1037 = pneg %p1036
    $region54: #{resnet_forward.11} parent=5 // pred_check_branch
      %1039 = sbr.rel (%p1037) target = $region56
    $region55: #{resnet_forward.11} parent=5 // pred_region
      %s1040 = ssub.s32 %s11, 2
      // Predicated region
      $region57: #{resnet_forward.11} parent=55 // pred_check
        %p1041 = pneg %p87
      $region58: #{resnet_forward.11} parent=55 // pred_check_branch
        %1043 = sbr.rel (%p1041) target = $region60
      $region59: #{resnet_forward.11} parent=55 // pred_region
        %s1044 = smul.u32 32, %s17
        %p1045 = scmp.lt.s32.totalorder %s1044, 63
        %s1046 = scalar_select %p1045, %s1044, 63
        %s1047 = smul.addr %s1046, 4
        %s1048 = scalar_lea.vmem %s2, %s1047
      $region60: #{resnet_forward.11} parent=55 // pred_fallthru
        _
    $region56: #{resnet_forward.11} parent=5 // pred_fallthru
      _
  $region6: #{resnet_forward.11} parent=0 // loop_footer
    %s15 = sadd.s32 1, %s11
  $region7: #{resnet_forward.11} parent=0 // loop_footer_branch
    %10 = sbr.rel target = $region3
  $region8: #{resnet_forward.11} parent=0 // loop_exit
    _

// kernel: resnet_forward.15
$region0: #{resnet_forward.15}
  #allocation0 [shape = 'u32[]', space=smem, size = 0x4, offset = 0x4, fixed_abs, tag = 'smem constant byte address 0x4 - core index']
  #allocation1 [shape = 'u32[144,128]{1,0:T(1,128)}', space=vmem, size = 0x12000, scoped, tag = 'internal scratch']
  %s0 = inlined_call_operand.vmem [shape: bf16[80,128], index: 0, kind: input, shape index: {}]
  %s1 = inlined_call_operand.vmem [shape: f32[1,128], index: 1, kind: input, shape index: {}]
  %s2 = inlined_call_operand.vmem [shape: f32[1,128], index: 2, kind: input, shape index: {}]
  %s3 = inlined_call_operand.vmem [shape: bf16[80,128], index: 3, kind: output, shape index: {}]
  %s4 = sld [smem:[#allocation0]]
  $region22: #{resnet_forward.15} parent=0
    _
  %s6 = ssub.s32 1, %s4
  %s7 = scalar_select 0, %s6, %s4
  // Predicated region
  $region2: #{resnet_forward.15} parent=0 // pred_check
    _
  $region3: #{resnet_forward.15} parent=0 // pred_check_branch
    %9 = sbr.rel (0) target = $region5
  $region4: #{resnet_forward.15} parent=0 // pred_region
    _
  $region5: #{resnet_forward.15} parent=0 // pred_fallthru
    _
  // Predicated region
  $region6: #{resnet_forward.15} parent=0 // pred_check
    _
  $region7: #{resnet_forward.15} parent=0 // pred_check_branch
    %11 = sbr.rel (0) target = $region9
  $region8: #{resnet_forward.15} parent=0 // pred_region
    _
  $region9: #{resnet_forward.15} parent=0 // pred_fallthru
    _
  // Predicated region
  $region10: #{resnet_forward.15} parent=0 // pred_check
    _
  $region11: #{resnet_forward.15} parent=0 // pred_check_branch
    %13 = sbr.rel (0) target = $region13
  $region12: #{resnet_forward.15} parent=0 // pred_region
    _
  $region13: #{resnet_forward.15} parent=0 // pred_fallthru
    _
  %v14 = vld [vmem:[%s0] sm:$0xf]
  %v15 = vld [vmem:[%s0 + $0x4] sm:$0xf]
  %v16 = vld [vmem:[%s0 + $0x8] sm:$0xf]
  %v17 = vld [vmem:[%s0 + $0xc] sm:$0xf]
  %v18 = vld [vmem:[%s0 + $0x10] sm:$0xf]
  %v19 = vld [vmem:[%s0 + $0x14] sm:$0xf]
  %v20 = vld [vmem:[%s0 + $0x18] sm:$0xf]
  %v21 = vld [vmem:[%s0 + $0x1c] sm:$0xf]
  %v22 = vld [vmem:[%s0 + $0x20] sm:$0xf]
  %v23 = vld [vmem:[%s0 + $0x24] sm:$0xf]
  %v24 = vunpack.c.l.bf16 %v14
  %v25 = vunpack.c.l.bf16 %v15
  %v26 = vunpack.c.l.bf16 %v16
  %v27 = vunpack.c.l.bf16 %v17
  %v28 = vunpack.c.l.bf16 %v18
  %v29 = vunpack.c.l.bf16 %v19
  %v30 = vunpack.c.l.bf16 %v20
  %v31 = vunpack.c.l.bf16 %v21
  %v32 = vunpack.c.l.bf16 %v22
  %v33 = vunpack.c.l.bf16 %v23
  %v34 = vld [vmem:[%s1] sm:$0x1]
  %v36 = vlaneseq
  %v37 = vshrl.u32 %v36, 7
  %v38 = vsub.s32 0, %v37
  %v39 = vrot.slane %v34, %v38
  %v41 = vmul.f32 %v24, %v39
  %v42 = vmul.f32 %v25, %v39
  %v43 = vmul.f32 %v26, %v39
  %v44 = vmul.f32 %v27, %v39
  %v45 = vmul.f32 %v28, %v39
  %v46 = vmul.f32 %v29, %v39
  %v47 = vmul.f32 %v30, %v39
  %v48 = vmul.f32 %v31, %v39
  %v49 = vmul.f32 %v32, %v39
  %v50 = vmul.f32 %v33, %v39
  %v51 = vld [vmem:[%s2] sm:$0x1]
  %v53 = vlaneseq
  %v54 = vshrl.u32 %v53, 7
  %v55 = vsub.s32 0, %v54
  %v56 = vrot.slane %v51, %v55
  %v58 = vadd.f32 %v41, %v56
  %v59 = vadd.f32 %v42, %v56
  %v60 = vadd.f32 %v43, %v56
  %v61 = vadd.f32 %v44, %v56
  %v62 = vadd.f32 %v45, %v56
  %v63 = vadd.f32 %v46, %v56
  %v64 = vadd.f32 %v47, %v56
  %v65 = vadd.f32 %v48, %v56
  %v66 = vadd.f32 %v49, %v56
  %v67 = vadd.f32 %v50, %v56
  %v68 = vmax.f32 %v58, 0.0
  %v69 = vmax.f32 %v59, 0.0
  %v70 = vmax.f32 %v60, 0.0
  %v71 = vmax.f32 %v61, 0.0
  %v72 = vmax.f32 %v62, 0.0
  %v73 = vmax.f32 %v63, 0.0
  %v74 = vmax.f32 %v64, 0.0
  %v75 = vmax.f32 %v65, 0.0
  %v76 = vmax.f32 %v66, 0.0
  %v77 = vmax.f32 %v67, 0.0
  %v78 = vpack.c.bf16 %v69, %v68
  %v79 = vpack.c.bf16 %v71, %v70
  %v80 = vpack.c.bf16 %v73, %v72
  %v81 = vpack.c.bf16 %v75, %v74
  %v82 = vpack.c.bf16 %v77, %v76
  %v88 = vunpack.c.l.b16 %v78
  %v89 = vunpack.c.h.b16 %v78
  %v90 = vunpack.c.l.b16 %v79
  %v91 = vunpack.c.h.b16 %v79
  %v92 = vunpack.c.l.b16 %v80
  %v93 = vunpack.c.h.b16 %v80
  %v94 = vunpack.c.l.b16 %v81
  %v95 = vunpack.c.h.b16 %v81
  %v96 = vunpack.c.l.b16 %v82
  %v97 = vunpack.c.h.b16 %v82
  %v98 = vpack.c.b16 %v88, %v88
  %v99 = vpack.c.b16 %v89, %v89
  %v100 = vpack.c.b16 %v90, %v90
  %v101 = vpack.c.b16 %v91, %v91
  %v102 = vpack.c.b16 %v92, %v92
  %v103 = vpack.c.b16 %v93, %v93
  %v104 = vpack.c.b16 %v94, %v94
  %v105 = vpack.c.b16 %v95, %v95
  %v106 = vpack.c.b16 %v96, %v96
  %v107 = vpack.c.b16 %v97, %v97
  %118 = vst [vmem:[%s3] sm:$0xf] %v98
  %119 = vst [vmem:[%s3 + $0x4] sm:$0xf] %v99
  %120 = vst [vmem:[%s3 + $0x8] sm:$0xf] %v100
  %121 = vst [vmem:[%s3 + $0xc] sm:$0xf] %v101
  %122 = vst [vmem:[%s3 + $0x10] sm:$0xf] %v102
  %123 = vst [vmem:[%s3 + $0x14] sm:$0xf] %v103
  %124 = vst [vmem:[%s3 + $0x18] sm:$0xf] %v104
  %125 = vst [vmem:[%s3 + $0x1c] sm:$0xf] %v105
  %126 = vst [vmem:[%s3 + $0x20] sm:$0xf] %v106
  %127 = vst [vmem:[%s3 + $0x24] sm:$0xf] %v107
  // Predicated region
  $region14: #{resnet_forward.15} parent=0 // pred_check
    _
  $region15: #{resnet_forward.15} parent=0 // pred_check_branch
    %129 = sbr.rel (0) target = $region17
  $region16: #{resnet_forward.15} parent=0 // pred_region
    _
  $region17: #{resnet_forward.15} parent=0 // pred_fallthru
    _
  // Predicated region
  $region18: #{resnet_forward.15} parent=0 // pred_check
    _
  $region19: #{resnet_forward.15} parent=0 // pred_check_branch
    %131 = sbr.rel (0) target = $region21
  $region20: #{resnet_forward.15} parent=0 // pred_region
    _
  $region21: #{resnet_forward.15} parent=0 // pred_fallthru
    _

// kernel: resnet_forward.13
$region0: #{resnet_forward.13}
  #allocation0 [shape = 'u32[]', space=smem, size = 0x4, offset = 0x4, fixed_abs, tag = 'smem constant byte address 0x4 - core index']
  #allocation1 [shape = 'u32[144,128]{1,0:T(1,128)}', space=vmem, size = 0x12000, scoped, tag = 'internal scratch']
  %s0 = inlined_call_operand.vmem [shape: bf16[2,18,18,64], index: 0, kind: input, shape index: {}]
  %s1 = inlined_call_operand.vmem [shape: bf16[2,16,16,64], index: 1, kind: output, shape index: {}]
  %s2 = sld [smem:[#allocation0]]
  $region37: #{resnet_forward.13} parent=0
    _
  %s4 = ssub.s32 1, %s2
  %s5 = scalar_select 0, %s4, %s2
  loop: start=0, step=1, limit=4
  $region2: #{resnet_forward.13} parent=0 // loop_pre_header
    _
  $region3: #{resnet_forward.13} parent=0 // loop_header
    %s7 = sphi 0, %s11
    %p8 = scmp.ge.s32.totalorder %s7, 4
    %s17 = sphi 0, %s19
    %s20 = sphi 0, %s17
    %s21 = sphi 0, %s20
    %s37 = sphi 0, %s21
    %s43 = sphi 0, %s45
    %s46 = sphi 0, %s43
    %s47 = sphi 0, %s46
    %s63 = sphi 0, %s47
  $region4: #{resnet_forward.13} parent=0 // loop_header_branch
    %10 = sbr.rel (%p8) target = $region8
  $region5: #{resnet_forward.13} parent=0 // loop_body
    %s12 = ssub.s32 %s7, 1
    %s13 = ssub.s32 %s7, 2
    %s14 = sadd.s32 %s7, 1
    %s15 = ssub.s32 %s7, %s14
    %p16 = scmp.eq.s32.totalorder %s15, 0
    %s18 = sadd.s32 %s17, 1
    %s19 = scalar_select %p16, %s17, %s18
    %p22 = pneg %p16
    %p23 = scmp.eq.s32.totalorder %s7, 1
    %p24 = por %p22, %p23
    %p25 = scmp.ne.s32.totalorder %s17, %s20
    %p26 = scmp.eq.s32.totalorder %s7, 0
    %p27 = por %p25, %p26
    %p28 = scmp.ne.s32.totalorder %s17, %s20
    %p29 = scmp.eq.s32.totalorder %s12, 1
    %p30 = por %p28, %p29
    %p31 = scmp.ne.s32.totalorder %s20, %s21
    %p32 = scmp.eq.s32.totalorder %s12, 0
    %p33 = por %p31, %p32
    %p34 = scmp.ne.s32.totalorder %s20, %s21
    %p35 = scmp.eq.s32.totalorder %s13, 1
    %p36 = por %p34, %p35
    %p38 = scmp.ne.s32.totalorder %s21, %s37
    %p39 = scmp.eq.s32.totalorder %s13, 0
    %p40 = por %p38, %p39
    %s41 = ssub.s32 %s7, %s14
    %p42 = scmp.eq.s32.totalorder %s41, 0
    %s44 = sadd.s32 %s43, 1
    %s45 = scalar_select %p42, %s43, %s44
    %p48 = pneg %p42
    %p49 = scmp.eq.s32.totalorder %s7, 1
    %p50 = por %p48, %p49
    %p51 = scmp.ne.s32.totalorder %s43, %s46
    %p52 = scmp.eq.s32.totalorder %s7, 0
    %p53 = por %p51, %p52
    %p54 = scmp.ne.s32.totalorder %s43, %s46
    %p55 = scmp.eq.s32.totalorder %s12, 1
    %p56 = por %p54, %p55
    %p57 = scmp.ne.s32.totalorder %s46, %s47
    %p58 = scmp.eq.s32.totalorder %s12, 0
    %p59 = por %p57, %p58
    %p60 = scmp.ne.s32.totalorder %s46, %s47
    %p61 = scmp.eq.s32.totalorder %s13, 1
    %p62 = por %p60, %p61
    %p64 = scmp.ne.s32.totalorder %s47, %s63
    %p65 = scmp.eq.s32.totalorder %s13, 0
    %p66 = por %p64, %p65
    %p67 = scmp.le.s32.totalorder 1, %s7
    %p68 = scmp.lt.s32.totalorder %s7, 3
    %p69 = pnand %p67, %p68
    %p70 = pneg %p69
    // Predicated region
    $region9: #{resnet_forward.13} parent=5 // pred_check
      _
    $region10: #{resnet_forward.13} parent=5 // pred_check_branch
      %72 = sbr.rel (%p69) target = $region12
    $region11: #{resnet_forward.13} parent=5 // pred_region
      %s73 = ssub.s32 %s7, 1
    $region12: #{resnet_forward.13} parent=5 // pred_fallthru
      _
    %p74 = scmp.lt.s32.totalorder %s7, 2
    // Predicated region
    $region13: #{resnet_forward.13} parent=5 // pred_check
      %p75 = pneg %p74
    $region14: #{resnet_forward.13} parent=5 // pred_check_branch
      %77 = sbr.rel (%p75) target = $region16
    $region15: #{resnet_forward.13} parent=5 // pred_region
      // Predicated region
      $region17: #{resnet_forward.13} parent=15 // pred_check
        %p78 = pneg %p27
      $region18: #{resnet_forward.13} parent=15 // pred_check_branch
        %80 = sbr.rel (%p78) target = $region20
      $region19: #{resnet_forward.13} parent=15 // pred_region
        %p81 = scmp.lt.s32.totalorder %s7, 1
        %s82 = scalar_select %p81, %s7, 1
        %s83 = smul.addr %s82, 54
        %s84 = smul.addr %s83, 4
        %s85 = scalar_lea.vmem %s0, %s84
      $region20: #{resnet_forward.13} parent=15 // pred_fallthru
        _
    $region16: #{resnet_forward.13} parent=5 // pred_fallthru
      _
    %p86 = scmp.le.s32.totalorder 1, %s7
    %p87 = scmp.lt.s32.totalorder %s7, 3
    %p88 = pnand %p86, %p87
    %p89 = pneg %p88
    // Predicated region
    $region21: #{resnet_forward.13} parent=5 // pred_check
      _
    $region22: #{resnet_forward.13} parent=5 // pred_check_branch
      %91 = sbr.rel (%p88) target = $region24
    $region23: #{resnet_forward.13} parent=5 // pred_region
      %s92 = ssub.s32 %s7, 1
      %p93 = scmp.lt.s32.totalorder %s12, 1
      %s94 = scalar_select %p93, %s12, 1
      %s95 = smul.addr %s94, 54
      %s96 = smul.addr %s95, 4
      %s97 = scalar_lea.vmem %s0, %s96
      %p98 = pneg %p33
      %p99 = pneg %p30
      %p100 = pneg %p59
      %p101 = pneg %p56
      %p102 = scmp.lt.s32.totalorder %s12, 1
      %s103 = scalar_select %p102, %s12, 1
      %s104 = smul.addr %s103, 32
      %s105 = smul.addr %s104, 4
      %s106 = scalar_lea.vmem %s1, %s105
      %p107 = scmp.lt.s32.totalorder %s12, 1
      %s108 = scalar_select %p107, %s12, 1
      %s109 = smul.addr %s108, 54
      %s110 = smul.addr %s109, 4
      %s111 = scalar_lea.vmem %s0, %s110
      %p112 = scmp.lt.s32.totalorder %s12, 1
      %s113 = scalar_select %p112, %s12, 1
      %s114 = smul.addr %s113, 32
      %s115 = smul.addr %s114, 4
      %s116 = scalar_lea.vmem %s1, %s115
      %v117 = vld [vmem:[%s111] sm:$0xf]
      %v118 = vld [vmem:[%s111 + $0x4] sm:$0xf]
      %v119 = vld [vmem:[%s111 + $0xc] sm:$0xf]
      %v120 = vld [vmem:[%s111 + $0x10] sm:$0xf]
      %v121 = vld [vmem:[%s111 + $0x18] sm:$0xf]
      %v122 = vld [vmem:[%s111 + $0x1c] sm:$0xf]
      %v123 = vld [vmem:[%s111 + $0x24] sm:$0xf]
      %v124 = vld [vmem:[%s111 + $0x28] sm:$0xf]
      %v125 = vld [vmem:[%s111 + $0x30] sm:$0xf]
      %v126 = vld [vmem:[%s111 + $0x34] sm:$0xf]
      %v127 = vld [vmem:[%s111 + $0x3c] sm:$0xf]
      %v128 = vld [vmem:[%s111 + $0x40] sm:$0xf]
      %v129 = vld [vmem:[%s111 + $0x48] sm:$0xf]
      %v130 = vld [vmem:[%s111 + $0x4c] sm:$0xf]
      %v131 = vld [vmem:[%s111 + $0x54] sm:$0xf]
      %v132 = vld [vmem:[%s111 + $0x58] sm:$0xf]
      %v133 = vld [vmem:[%s111 + $0x60] sm:$0xf]
      %v134 = vld [vmem:[%s111 + $0x64] sm:$0xf]
      %v135 = vld [vmem:[%s111 + $0x6c] sm:$0xf]
      %v136 = vld [vmem:[%s111 + $0x70] sm:$0xf]
      %v137 = vld [vmem:[%s111 + $0x78] sm:$0xf]
      %v138 = vld [vmem:[%s111 + $0x7c] sm:$0xf]
      %v139 = vld [vmem:[%s111 + $0x84] sm:$0xf]
      %v140 = vld [vmem:[%s111 + $0x88] sm:$0xf]
      %v141 = vld [vmem:[%s111 + $0x90] sm:$0xf]
      %v142 = vld [vmem:[%s111 + $0x94] sm:$0xf]
      %v143 = vld [vmem:[%s111 + $0x9c] sm:$0xf]
      %v144 = vld [vmem:[%s111 + $0xa0] sm:$0xf]
      %v145 = vld [vmem:[%s111 + $0xa8] sm:$0xf]
      %v146 = vld [vmem:[%s111 + $0xac] sm:$0xf]
      %v147 = vld [vmem:[%s111 + $0xb4] sm:$0xf]
      %v148 = vld [vmem:[%s111 + $0xb8] sm:$0xf]
      %v149 = vld [vmem:[%s111 + $0x8] sm:$0x1]
      %v150 = vld [vmem:[%s111 + $0x14] sm:$0x1]
      %v151 = vld [vmem:[%s111 + $0x20] sm:$0x1]
      %v152 = vld [vmem:[%s111 + $0x2c] sm:$0x1]
      %v153 = vld [vmem:[%s111 + $0x38] sm:$0x1]
      %v154 = vld [vmem:[%s111 + $0x44] sm:$0x1]
      %v155 = vld [vmem:[%s111 + $0x50] sm:$0x1]
      %v156 = vld [vmem:[%s111 + $0x5c] sm:$0x1]
      %v157 = vld [vmem:[%s111 + $0x68] sm:$0x1]
      %v158 = vld [vmem:[%s111 + $0x74] sm:$0x1]
      %v159 = vld [vmem:[%s111 + $0x80] sm:$0x1]
      %v160 = vld [vmem:[%s111 + $0x8c] sm:$0x1]
      %v161 = vld [vmem:[%s111 + $0x98] sm:$0x1]
      %v162 = vld [vmem:[%s111 + $0xa4] sm:$0x1]
      %v163 = vld [vmem:[%s111 + $0xb0] sm:$0x1]
      %v164 = vld [vmem:[%s111 + $0xbc] sm:$0x1]
      %vm165 = vsmask.f32 3328
      %vm166 = vsmask.f32 7440
      %vm167 = vmor %vm165, %vm166
      %v169 = vshrl.u32 %v117, 16
      %v171 = vrot.slane %v169, 4
      %v172 = vshll.u32 %v117, 16
      %v174 = vrot.slane %v172, 5
      %v175 = vor.u32 %v171, %v174
      %v176 = vrot.slane %v175, 4
      %v178 = vshll.u32 %v118, 16
      %v180 = vrot.slane %v178, 5
      %v181 = vsel %vm167, %v176, %v180
      %v182 = vshrl.u32 %v118, 16
      %v184 = vrot.slane %v182, 4
      %v185 = vor.u32 %v184, %v180
      %v186 = vrot.slane %v185, 4
      %v188 = vshll.u32 %v149, 16
      %v190 = vrot.slane %v188, 5
      %v191 = vsel %vm167, %v186, %v190
      %v193 = vshrl.u32 %v119, 16
      %v195 = vrot.slane %v193, 4
      %v196 = vshll.u32 %v119, 16
      %v198 = vrot.slane %v196, 5
      %v199 = vor.u32 %v195, %v198
      %v200 = vrot.slane %v199, 4
      %v202 = vshll.u32 %v120, 16
      %v204 = vrot.slane %v202, 5
      %v205 = vsel %vm167, %v200, %v204
      %v206 = vshrl.u32 %v120, 16
      %v208 = vrot.slane %v206, 4
      %v209 = vor.u32 %v208, %v204
      %v210 = vrot.slane %v209, 4
      %v212 = vshll.u32 %v150, 16
      %v214 = vrot.slane %v212, 5
      %v215 = vsel %vm167, %v210, %v214
      %v217 = vshrl.u32 %v121, 16
      %v219 = vrot.slane %v217, 4
      %v220 = vshll.u32 %v121, 16
      %v222 = vrot.slane %v220, 5
      %v223 = vor.u32 %v219, %v222
      %v224 = vrot.slane %v223, 4
      %v226 = vshll.u32 %v122, 16
      %v228 = vrot.slane %v226, 5
      %v229 = vsel %vm167, %v224, %v228
      %v230 = vshrl.u32 %v122, 16
      %v232 = vrot.slane %v230, 4
      %v233 = vor.u32 %v232, %v228
      %v234 = vrot.slane %v233, 4
      %v236 = vshll.u32 %v151, 16
      %v238 = vrot.slane %v236, 5
      %v239 = vsel %vm167, %v234, %v238
      %v241 = vshrl.u32 %v123, 16
      %v243 = vrot.slane %v241, 4
      %v244 = vshll.u32 %v123, 16
      %v246 = vrot.slane %v244, 5
      %v247 = vor.u32 %v243, %v246
      %v248 = vrot.slane %v247, 4
      %v250 = vshll.u32 %v124, 16
      %v252 = vrot.slane %v250, 5
      %v253 = vsel %vm167, %v248, %v252
      %v254 = vshrl.u32 %v124, 16
      %v256 = vrot.slane %v254, 4
      %v257 = vor.u32 %v256, %v252
      %v258 = vrot.slane %v257, 4
      %v260 = vshll.u32 %v152, 16
      %v262 = vrot.slane %v260, 5
      %v263 = vsel %vm167, %v258, %v262
      %v265 = vshrl.u32 %v125, 16
      %v267 = vrot.slane %v265, 4
      %v268 = vshll.u32 %v125, 16
      %v270 = vrot.slane %v268, 5
      %v271 = vor.u32 %v267, %v270
      %v272 = vrot.slane %v271, 4
      %v274 = vshll.u32 %v126, 16
      %v276 = vrot.slane %v274, 5
      %v277 = vsel %vm167, %v272, %v276
      %v278 = vshrl.u32 %v126, 16
      %v280 = vrot.slane %v278, 4
      %v281 = vor.u32 %v280, %v276
      %v282 = vrot.slane %v281, 4
      %v284 = vshll.u32 %v153, 16
      %v286 = vrot.slane %v284, 5
      %v287 = vsel %vm167, %v282, %v286
      %v289 = vshrl.u32 %v127, 16
      %v291 = vrot.slane %v289, 4
      %v292 = vshll.u32 %v127, 16
      %v294 = vrot.slane %v292, 5
      %v295 = vor.u32 %v291, %v294
      %v296 = vrot.slane %v295, 4
      %v298 = vshll.u32 %v128, 16
      %v300 = vrot.slane %v298, 5
      %v301 = vsel %vm167, %v296, %v300
      %v302 = vshrl.u32 %v128, 16
      %v304 = vrot.slane %v302, 4
      %v305 = vor.u32 %v304, %v300
      %v306 = vrot.slane %v305, 4
      %v308 = vshll.u32 %v154, 16
      %v310 = vrot.slane %v308, 5
      %v311 = vsel %vm167, %v306, %v310
      %v313 = vshrl.u32 %v129, 16
      %v315 = vrot.slane %v313, 4
      %v316 = vshll.u32 %v129, 16
      %v318 = vrot.slane %v316, 5
      %v319 = vor.u32 %v315, %v318
      %v320 = vrot.slane %v319, 4
      %v322 = vshll.u32 %v130, 16
      %v324 = vrot.slane %v322, 5
      %v325 = vsel %vm167, %v320, %v324
      %v326 = vshrl.u32 %v130, 16
      %v328 = vrot.slane %v326, 4
      %v329 = vor.u32 %v328, %v324
      %v330 = vrot.slane %v329, 4
      %v332 = vshll.u32 %v155, 16
      %v334 = vrot.slane %v332, 5
      %v335 = vsel %vm167, %v330, %v334
      %v337 = vshrl.u32 %v131, 16
      %v339 = vrot.slane %v337, 4
      %v340 = vshll.u32 %v131, 16
      %v342 = vrot.slane %v340, 5
      %v343 = vor.u32 %v339, %v342
      %v344 = vrot.slane %v343, 4
      %v346 = vshll.u32 %v132, 16
      %v348 = vrot.slane %v346, 5
      %v349 = vsel %vm167, %v344, %v348
      %v350 = vshrl.u32 %v132, 16
      %v352 = vrot.slane %v350, 4
      %v353 = vor.u32 %v352, %v348
      %v354 = vrot.slane %v353, 4
      %v356 = vshll.u32 %v156, 16
      %v358 = vrot.slane %v356, 5
      %v359 = vsel %vm167, %v354, %v358
      %v361 = vshrl.u32 %v133, 16
      %v363 = vrot.slane %v361, 4
      %v364 = vshll.u32 %v133, 16
      %v366 = vrot.slane %v364, 5
      %v367 = vor.u32 %v363, %v366
      %v368 = vrot.slane %v367, 4
      %v370 = vshll.u32 %v134, 16
      %v372 = vrot.slane %v370, 5
      %v373 = vsel %vm167, %v368, %v372
      %v374 = vshrl.u32 %v134, 16
      %v376 = vrot.slane %v374, 4
      %v377 = vor.u32 %v376, %v372
      %v378 = vrot.slane %v377, 4
      %v380 = vshll.u32 %v157, 16
      %v382 = vrot.slane %v380, 5
      %v383 = vsel %vm167, %v378, %v382
      %v385 = vshrl.u32 %v135, 16
      %v387 = vrot.slane %v385, 4
      %v388 = vshll.u32 %v135, 16
      %v390 = vrot.slane %v388, 5
      %v391 = vor.u32 %v387, %v390
      %v392 = vrot.slane %v391, 4
      %v394 = vshll.u32 %v136, 16
      %v396 = vrot.slane %v394, 5
      %v397 = vsel %vm167, %v392, %v396
      %v398 = vshrl.u32 %v136, 16
      %v400 = vrot.slane %v398, 4
      %v401 = vor.u32 %v400, %v396
      %v402 = vrot.slane %v401, 4
      %v404 = vshll.u32 %v158, 16
      %v406 = vrot.slane %v404, 5
      %v407 = vsel %vm167, %v402, %v406
      %v409 = vshrl.u32 %v137, 16
      %v411 = vrot.slane %v409, 4
      %v412 = vshll.u32 %v137, 16
      %v414 = vrot.slane %v412, 5
      %v415 = vor.u32 %v411, %v414
      %v416 = vrot.slane %v415, 4
      %v418 = vshll.u32 %v138, 16
      %v420 = vrot.slane %v418, 5
      %v421 = vsel %vm167, %v416, %v420
      %v422 = vshrl.u32 %v138, 16
      %v424 = vrot.slane %v422, 4
      %v425 = vor.u32 %v424, %v420
      %v426 = vrot.slane %v425, 4
      %v428 = vshll.u32 %v159, 16
      %v430 = vrot.slane %v428, 5
      %v431 = vsel %vm167, %v426, %v430
      %v433 = vshrl.u32 %v139, 16
      %v435 = vrot.slane %v433, 4
      %v436 = vshll.u32 %v139, 16
      %v438 = vrot.slane %v436, 5
      %v439 = vor.u32 %v435, %v438
      %v440 = vrot.slane %v439, 4
      %v442 = vshll.u32 %v140, 16
      %v444 = vrot.slane %v442, 5
      %v445 = vsel %vm167, %v440, %v444
      %v446 = vshrl.u32 %v140, 16
      %v448 = vrot.slane %v446, 4
      %v449 = vor.u32 %v448, %v444
      %v450 = vrot.slane %v449, 4
      %v452 = vshll.u32 %v160, 16
      %v454 = vrot.slane %v452, 5
      %v455 = vsel %vm167, %v450, %v454
      %v457 = vshrl.u32 %v141, 16
      %v459 = vrot.slane %v457, 4
      %v460 = vshll.u32 %v141, 16
      %v462 = vrot.slane %v460, 5
      %v463 = vor.u32 %v459, %v462
      %v464 = vrot.slane %v463, 4
      %v466 = vshll.u32 %v142, 16
      %v468 = vrot.slane %v466, 5
      %v469 = vsel %vm167, %v464, %v468
      %v470 = vshrl.u32 %v142, 16
      %v472 = vrot.slane %v470, 4
      %v473 = vor.u32 %v472, %v468
      %v474 = vrot.slane %v473, 4
      %v476 = vshll.u32 %v161, 16
      %v478 = vrot.slane %v476, 5
      %v479 = vsel %vm167, %v474, %v478
      %v481 = vshrl.u32 %v143, 16
      %v483 = vrot.slane %v481, 4
      %v484 = vshll.u32 %v143, 16
      %v486 = vrot.slane %v484, 5
      %v487 = vor.u32 %v483, %v486
      %v488 = vrot.slane %v487, 4
      %v490 = vshll.u32 %v144, 16
      %v492 = vrot.slane %v490, 5
      %v493 = vsel %vm167, %v488, %v492
      %v494 = vshrl.u32 %v144, 16
      %v496 = vrot.slane %v494, 4
      %v497 = vor.u32 %v496, %v492
      %v498 = vrot.slane %v497, 4
      %v500 = vshll.u32 %v162, 16
      %v502 = vrot.slane %v500, 5
      %v503 = vsel %vm167, %v498, %v502
      %v505 = vshrl.u32 %v145, 16
      %v507 = vrot.slane %v505, 4
      %v508 = vshll.u32 %v145, 16
      %v510 = vrot.slane %v508, 5
      %v511 = vor.u32 %v507, %v510
      %v512 = vrot.slane %v511, 4
      %v514 = vshll.u32 %v146, 16
      %v516 = vrot.slane %v514, 5
      %v517 = vsel %vm167, %v512, %v516
      %v518 = vshrl.u32 %v146, 16
      %v520 = vrot.slane %v518, 4
      %v521 = vor.u32 %v520, %v516
      %v522 = vrot.slane %v521, 4
      %v524 = vshll.u32 %v163, 16
      %v526 = vrot.slane %v524, 5
      %v527 = vsel %vm167, %v522, %v526
      %v529 = vshrl.u32 %v147, 16
      %v531 = vrot.slane %v529, 4
      %v532 = vshll.u32 %v147, 16
      %v534 = vrot.slane %v532, 5
      %v535 = vor.u32 %v531, %v534
      %v536 = vrot.slane %v535, 4
      %v538 = vshll.u32 %v148, 16
      %v540 = vrot.slane %v538, 5
      %v541 = vsel %vm167, %v536, %v540
      %v542 = vshrl.u32 %v148, 16
      %v544 = vrot.slane %v542, 4
      %v545 = vor.u32 %v544, %v540
      %v546 = vrot.slane %v545, 4
      %v548 = vshll.u32 %v164, 16
      %v550 = vrot.slane %v548, 5
      %v551 = vsel %vm167, %v546, %v550
      %v584 = vmax.bf16 %v117, %v181
      %v585 = vmax.bf16 %v118, %v191
      %v586 = vmax.bf16 %v119, %v205
      %v587 = vmax.bf16 %v120, %v215
      %v588 = vmax.bf16 %v121, %v229
      %v589 = vmax.bf16 %v122, %v239
      %v590 = vmax.bf16 %v123, %v253
      %v591 = vmax.bf16 %v124, %v263
      %v592 = vmax.bf16 %v125, %v277
      %v593 = vmax.bf16 %v126, %v287
      %v594 = vmax.bf16 %v127, %v301
      %v595 = vmax.bf16 %v128, %v311
      %v596 = vmax.bf16 %v129, %v325
      %v597 = vmax.bf16 %v130, %v335
      %v598 = vmax.bf16 %v131, %v349
      %v599 = vmax.bf16 %v132, %v359
      %v600 = vmax.bf16 %v133, %v373
      %v601 = vmax.bf16 %v134, %v383
      %v602 = vmax.bf16 %v135, %v397
      %v603 = vmax.bf16 %v136, %v407
      %v604 = vmax.bf16 %v137, %v421
      %v605 = vmax.bf16 %v138, %v431
      %v606 = vmax.bf16 %v139, %v445
      %v607 = vmax.bf16 %v140, %v455
      %v608 = vmax.bf16 %v141, %v469
      %v609 = vmax.bf16 %v142, %v479
      %v610 = vmax.bf16 %v143, %v493
      %v611 = vmax.bf16 %v144, %v503
      %v612 = vmax.bf16 %v145, %v517
      %v613 = vmax.bf16 %v146, %v527
      %v614 = vmax.bf16 %v147, %v541
      %v615 = vmax.bf16 %v148, %v551
      %v616 = vld [vmem:[%s111] sm:$0xe]
      %v617 = vld [vmem:[%s111 + $0xc] sm:$0xe]
      %v618 = vld [vmem:[%s111 + $0x18] sm:$0xe]
      %v619 = vld [vmem:[%s111 + $0x24] sm:$0xe]
      %v620 = vld [vmem:[%s111 + $0x30] sm:$0xe]
      %v621 = vld [vmem:[%s111 + $0x3c] sm:$0xe]
      %v622 = vld [vmem:[%s111 + $0x48] sm:$0xe]
      %v623 = vld [vmem:[%s111 + $0x54] sm:$0xe]
      %v624 = vld [vmem:[%s111 + $0x60] sm:$0xe]
      %v625 = vld [vmem:[%s111 + $0x6c] sm:$0xe]
      %v626 = vld [vmem:[%s111 + $0x78] sm:$0xe]
      %v627 = vld [vmem:[%s111 + $0x84] sm:$0xe]
      %v628 = vld [vmem:[%s111 + $0x90] sm:$0xe]
      %v629 = vld [vmem:[%s111 + $0x9c] sm:$0xe]
      %v630 = vld [vmem:[%s111 + $0xa8] sm:$0xe]
      %v631 = vld [vmem:[%s111 + $0xb4] sm:$0xe]
      %vm680 = vcmask 1042432
      %vm681 = vcmask 1046532
      %vm682 = vmor %vm680, %vm681
      %v683 = vrot.slane %v616, 5
      %v684 = vrot.slane %v683, 4
      %v685 = vrot.slane %v118, 5
      %v686 = vsel %vm682, %v684, %v685
      %v687 = vrot.slane %v685, 4
      %v688 = vrot.slane %v149, 5
      %v689 = vsel %vm682, %v687, %v688
      %v690 = vrot.slane %v617, 5
      %v691 = vrot.slane %v690, 4
      %v692 = vrot.slane %v120, 5
      %v693 = vsel %vm682, %v691, %v692
      %v694 = vrot.slane %v692, 4
      %v695 = vrot.slane %v150, 5
      %v696 = vsel %vm682, %v694, %v695
      %v697 = vrot.slane %v618, 5
      %v698 = vrot.slane %v697, 4
      %v699 = vrot.slane %v122, 5
      %v700 = vsel %vm682, %v698, %v699
      %v701 = vrot.slane %v699, 4
      %v702 = vrot.slane %v151, 5
      %v703 = vsel %vm682, %v701, %v702
      %v704 = vrot.slane %v619, 5
      %v705 = vrot.slane %v704, 4
      %v706 = vrot.slane %v124, 5
      %v707 = vsel %vm682, %v705, %v706
      %v708 = vrot.slane %v706, 4
      %v709 = vrot.slane %v152, 5
      %v710 = vsel %vm682, %v708, %v709
      %v711 = vrot.slane %v620, 5
      %v712 = vrot.slane %v711, 4
      %v713 = vrot.slane %v126, 5
      %v714 = vsel %vm682, %v712, %v713
      %v715 = vrot.slane %v713, 4
      %v716 = vrot.slane %v153, 5
      %v717 = vsel %vm682, %v715, %v716
      %v718 = vrot.slane %v621, 5
      %v719 = vrot.slane %v718, 4
      %v720 = vrot.slane %v128, 5
      %v721 = vsel %vm682, %v719, %v720
      %v722 = vrot.slane %v720, 4
      %v723 = vrot.slane %v154, 5
      %v724 = vsel %vm682, %v722, %v723
      %v725 = vrot.slane %v622, 5
      %v726 = vrot.slane %v725, 4
      %v727 = vrot.slane %v130, 5
      %v728 = vsel %vm682, %v726, %v727
      %v729 = vrot.slane %v727, 4
      %v730 = vrot.slane %v155, 5
      %v731 = vsel %vm682, %v729, %v730
      %v732 = vrot.slane %v623, 5
      %v733 = vrot.slane %v732, 4
      %v734 = vrot.slane %v132, 5
      %v735 = vsel %vm682, %v733, %v734
      %v736 = vrot.slane %v734, 4
      %v737 = vrot.slane %v156, 5
      %v738 = vsel %vm682, %v736, %v737
      %v739 = vrot.slane %v624, 5
      %v740 = vrot.slane %v739, 4
      %v741 = vrot.slane %v134, 5
      %v742 = vsel %vm682, %v740, %v741
      %v743 = vrot.slane %v741, 4
      %v744 = vrot.slane %v157, 5
      %v745 = vsel %vm682, %v743, %v744
      %v746 = vrot.slane %v625, 5
      %v747 = vrot.slane %v746, 4
      %v748 = vrot.slane %v136, 5
      %v749 = vsel %vm682, %v747, %v748
      %v750 = vrot.slane %v748, 4
      %v751 = vrot.slane %v158, 5
      %v752 = vsel %vm682, %v750, %v751
      %v753 = vrot.slane %v626, 5
      %v754 = vrot.slane %v753, 4
      %v755 = vrot.slane %v138, 5
      %v756 = vsel %vm682, %v754, %v755
      %v757 = vrot.slane %v755, 4
      %v758 = vrot.slane %v159, 5
      %v759 = vsel %vm682, %v757, %v758
      %v760 = vrot.slane %v627, 5
      %v761 = vrot.slane %v760, 4
      %v762 = vrot.slane %v140, 5
      %v763 = vsel %vm682, %v761, %v762
      %v764 = vrot.slane %v762, 4
      %v765 = vrot.slane %v160, 5
      %v766 = vsel %vm682, %v764, %v765
      %v767 = vrot.slane %v628, 5
      %v768 = vrot.slane %v767, 4
      %v769 = vrot.slane %v142, 5
      %v770 = vsel %vm682, %v768, %v769
      %v771 = vrot.slane %v769, 4
      %v772 = vrot.slane %v161, 5
      %v773 = vsel %vm682, %v771, %v772
      %v774 = vrot.slane %v629, 5
      %v775 = vrot.slane %v774, 4
      %v776 = vrot.slane %v144, 5
      %v777 = vsel %vm682, %v775, %v776
      %v778 = vrot.slane %v776, 4
      %v779 = vrot.slane %v162, 5
      %v780 = vsel %vm682, %v778, %v779
      %v781 = vrot.slane %v630, 5
      %v782 = vrot.slane %v781, 4
      %v783 = vrot.slane %v146, 5
      %v784 = vsel %vm682, %v782, %v783
      %v785 = vrot.slane %v783, 4
      %v786 = vrot.slane %v163, 5
      %v787 = vsel %vm682, %v785, %v786
      %v788 = vrot.slane %v631, 5
      %v789 = vrot.slane %v788, 4
      %v790 = vrot.slane %v148, 5
      %v791 = vsel %vm682, %v789, %v790
      %v792 = vrot.slane %v790, 4
      %v793 = vrot.slane %v164, 5
      %v794 = vsel %vm682, %v792, %v793
      %v827 = vmax.bf16 %v584, %v686
      %v828 = vmax.bf16 %v585, %v689
      %v829 = vmax.bf16 %v586, %v693
      %v830 = vmax.bf16 %v587, %v696
      %v831 = vmax.bf16 %v588, %v700
      %v832 = vmax.bf16 %v589, %v703
      %v833 = vmax.bf16 %v590, %v707
      %v834 = vmax.bf16 %v591, %v710
      %v835 = vmax.bf16 %v592, %v714
      %v836 = vmax.bf16 %v593, %v717
      %v837 = vmax.bf16 %v594, %v721
      %v838 = vmax.bf16 %v595, %v724
      %v839 = vmax.bf16 %v596, %v728
      %v840 = vmax.bf16 %v597, %v731
      %v841 = vmax.bf16 %v598, %v735
      %v842 = vmax.bf16 %v599, %v738
      %v843 = vmax.bf16 %v600, %v742
      %v844 = vmax.bf16 %v601, %v745
      %v845 = vmax.bf16 %v602, %v749
      %v846 = vmax.bf16 %v603, %v752
      %v847 = vmax.bf16 %v604, %v756
      %v848 = vmax.bf16 %v605, %v759
      %v849 = vmax.bf16 %v606, %v763
      %v850 = vmax.bf16 %v607, %v766
      %v851 = vmax.bf16 %v608, %v770
      %v852 = vmax.bf16 %v609, %v773
      %v853 = vmax.bf16 %v610, %v777
      %v854 = vmax.bf16 %v611, %v780
      %v855 = vmax.bf16 %v612, %v784
      %v856 = vmax.bf16 %v613, %v787
      %v857 = vmax.bf16 %v614, %v791
      %v858 = vmax.bf16 %v615, %v794
      %s859 = scalar_lea.vmem %s111, 12
      %v860 = vld [vmem:[%s859] sm:$0xf]
      %v861 = vld [vmem:[%s859 + $0x4] sm:$0xf]
      %v862 = vld [vmem:[%s859 + $0xc] sm:$0xf]
      %v863 = vld [vmem:[%s859 + $0x10] sm:$0xf]
      %v864 = vld [vmem:[%s859 + $0x18] sm:$0xf]
      %v865 = vld [vmem:[%s859 + $0x1c] sm:$0xf]
      %v866 = vld [vmem:[%s859 + $0x24] sm:$0xf]
      %v867 = vld [vmem:[%s859 + $0x28] sm:$0xf]
      %v868 = vld [vmem:[%s859 + $0x30] sm:$0xf]
      %v869 = vld [vmem:[%s859 + $0x34] sm:$0xf]
      %v870 = vld [vmem:[%s859 + $0x3c] sm:$0xf]
      %v871 = vld [vmem:[%s859 + $0x40] sm:$0xf]
      %v872 = vld [vmem:[%s859 + $0x48] sm:$0xf]
      %v873 = vld [vmem:[%s859 + $0x4c] sm:$0xf]
      %v874 = vld [vmem:[%s859 + $0x54] sm:$0xf]
      %v875 = vld [vmem:[%s859 + $0x58] sm:$0xf]
      %v876 = vld [vmem:[%s859 + $0x60] sm:$0xf]
      %v877 = vld [vmem:[%s859 + $0x64] sm:$0xf]
      %v878 = vld [vmem:[%s859 + $0x6c] sm:$0xf]
      %v879 = vld [vmem:[%s859 + $0x70] sm:$0xf]
      %v880 = vld [vmem:[%s859 + $0x78] sm:$0xf]
      %v881 = vld [vmem:[%s859 + $0x7c] sm:$0xf]
      %v882 = vld [vmem:[%s859 + $0x84] sm:$0xf]
      %v883 = vld [vmem:[%s859 + $0x88] sm:$0xf]
      %v884 = vld [vmem:[%s859 + $0x90] sm:$0xf]
      %v885 = vld [vmem:[%s859 + $0x94] sm:$0xf]
      %v886 = vld [vmem:[%s859 + $0x9c] sm:$0xf]
      %v887 = vld [vmem:[%s859 + $0xa0] sm:$0xf]
      %v888 = vld [vmem:[%s859 + $0xa8] sm:$0xf]
      %v889 = vld [vmem:[%s859 + $0xac] sm:$0xf]
      %v890 = vld [vmem:[%s859 + $0xb4] sm:$0xf]
      %v891 = vld [vmem:[%s859 + $0xb8] sm:$0xf]
      %v892 = vmax.bf16 %v827, %v860
      %v893 = vmax.bf16 %v828, %v861
      %v894 = vmax.bf16 %v829, %v862
      %v895 = vmax.bf16 %v830, %v863
      %v896 = vmax.bf16 %v831, %v864
      %v897 = vmax.bf16 %v832, %v865
      %v898 = vmax.bf16 %v833, %v866
      %v899 = vmax.bf16 %v834, %v867
      %v900 = vmax.bf16 %v835, %v868
      %v901 = vmax.bf16 %v836, %v869
      %v902 = vmax.bf16 %v837, %v870
      %v903 = vmax.bf16 %v838, %v871
      %v904 = vmax.bf16 %v839, %v872
      %v905 = vmax.bf16 %v840, %v873
      %v906 = vmax.bf16 %v841, %v874
      %v907 = vmax.bf16 %v842, %v875
      %v908 = vmax.bf16 %v843, %v876
      %v909 = vmax.bf16 %v844, %v877
      %v910 = vmax.bf16 %v845, %v878
      %v911 = vmax.bf16 %v846, %v879
      %v912 = vmax.bf16 %v847, %v880
      %v913 = vmax.bf16 %v848, %v881
      %v914 = vmax.bf16 %v849, %v882
      %v915 = vmax.bf16 %v850, %v883
      %v916 = vmax.bf16 %v851, %v884
      %v917 = vmax.bf16 %v852, %v885
      %v918 = vmax.bf16 %v853, %v886
      %v919 = vmax.bf16 %v854, %v887
      %v920 = vmax.bf16 %v855, %v888
      %v921 = vmax.bf16 %v856, %v889
      %v922 = vmax.bf16 %v857, %v890
      %v923 = vmax.bf16 %v858, %v891
      %v924 = vld [vmem:[%s859 + $0x8] sm:$0x1]
      %v925 = vld [vmem:[%s859 + $0x14] sm:$0x1]
      %v926 = vld [vmem:[%s859 + $0x20] sm:$0x1]
      %v927 = vld [vmem:[%s859 + $0x2c] sm:$0x1]
      %v928 = vld [vmem:[%s859 + $0x38] sm:$0x1]
      %v929 = vld [vmem:[%s859 + $0x44] sm:$0x1]
      %v930 = vld [vmem:[%s859 + $0x50] sm:$0x1]
      %v931 = vld [vmem:[%s859 + $0x5c] sm:$0x1]
      %v932 = vld [vmem:[%s859 + $0x68] sm:$0x1]
      %v933 = vld [vmem:[%s859 + $0x74] sm:$0x1]
      %v934 = vld [vmem:[%s859 + $0x80] sm:$0x1]
      %v935 = vld [vmem:[%s859 + $0x8c] sm:$0x1]
      %v936 = vld [vmem:[%s859 + $0x98] sm:$0x1]
      %v937 = vld [vmem:[%s859 + $0xa4] sm:$0x1]
      %v938 = vld [vmem:[%s859 + $0xb0] sm:$0x1]
      %v939 = vld [vmem:[%s859 + $0xbc] sm:$0x1]
      %v941 = vshrl.u32 %v860, 16
      %v943 = vrot.slane %v941, 4
      %v944 = vshll.u32 %v860, 16
      %v946 = vrot.slane %v944, 5
      %v947 = vor.u32 %v943, %v946
      %v948 = vrot.slane %v947, 4
      %v950 = vshll.u32 %v861, 16
      %v952 = vrot.slane %v950, 5
      %v953 = vsel %vm167, %v948, %v952
      %v954 = vshrl.u32 %v861, 16
      %v956 = vrot.slane %v954, 4
      %v957 = vor.u32 %v956, %v952
      %v958 = vrot.slane %v957, 4
      %v960 = vshll.u32 %v924, 16
      %v962 = vrot.slane %v960, 5
      %v963 = vsel %vm167, %v958, %v962
      %v965 = vshrl.u32 %v862, 16
      %v967 = vrot.slane %v965, 4
      %v968 = vshll.u32 %v862, 16
      %v970 = vrot.slane %v968, 5
      %v971 = vor.u32 %v967, %v970
      %v972 = vrot.slane %v971, 4
      %v974 = vshll.u32 %v863, 16
      %v976 = vrot.slane %v974, 5
      %v977 = vsel %vm167, %v972, %v976
      %v978 = vshrl.u32 %v863, 16
      %v980 = vrot.slane %v978, 4
      %v981 = vor.u32 %v980, %v976
      %v982 = vrot.slane %v981, 4
      %v984 = vshll.u32 %v925, 16
      %v986 = vrot.slane %v984, 5
      %v987 = vsel %vm167, %v982, %v986
      %v989 = vshrl.u32 %v864, 16
      %v991 = vrot.slane %v989, 4
      %v992 = vshll.u32 %v864, 16
      %v994 = vrot.slane %v992, 5
      %v995 = vor.u32 %v991, %v994
      %v996 = vrot.slane %v995, 4
      %v998 = vshll.u32 %v865, 16
      %v1000 = vrot.slane %v998, 5
      %v1001 = vsel %vm167, %v996, %v1000
      %v1002 = vshrl.u32 %v865, 16
      %v1004 = vrot.slane %v1002, 4
      %v1005 = vor.u32 %v1004, %v1000
      %v1006 = vrot.slane %v1005, 4
      %v1008 = vshll.u32 %v926, 16
      %v1010 = vrot.slane %v1008, 5
      %v1011 = vsel %vm167, %v1006, %v1010
      %v1013 = vshrl.u32 %v866, 16
      %v1015 = vrot.slane %v1013, 4
      %v1016 = vshll.u32 %v866, 16
      %v1018 = vrot.slane %v1016, 5
      %v1019 = vor.u32 %v1015, %v1018
      %v1020 = vrot.slane %v1019, 4
      %v1022 = vshll.u32 %v867, 16
      %v1024 = vrot.slane %v1022, 5
      %v1025 = vsel %vm167, %v1020, %v1024
      %v1026 = vshrl.u32 %v867, 16
      %v1028 = vrot.slane %v1026, 4
      %v1029 = vor.u32 %v1028, %v1024
      %v1030 = vrot.slane %v1029, 4
      %v1032 = vshll.u32 %v927, 16
      %v1034 = vrot.slane %v1032, 5
      %v1035 = vsel %vm167, %v1030, %v1034
      %v1037 = vshrl.u32 %v868, 16
      %v1039 = vrot.slane %v1037, 4
      %v1040 = vshll.u32 %v868, 16
      %v1042 = vrot.slane %v1040, 5
      %v1043 = vor.u32 %v1039, %v1042
      %v1044 = vrot.slane %v1043, 4
      %v1046 = vshll.u32 %v869, 16
      %v1048 = vrot.slane %v1046, 5
      %v1049 = vsel %vm167, %v1044, %v1048
      %v1050 = vshrl.u32 %v869, 16
      %v1052 = vrot.slane %v1050, 4
      %v1053 = vor.u32 %v1052, %v1048
      %v1054 = vrot.slane %v1053, 4
      %v1056 = vshll.u32 %v928, 16
      %v1058 = vrot.slane %v1056, 5
      %v1059 = vsel %vm167, %v1054, %v1058
      %v1061 = vshrl.u32 %v870, 16
      %v1063 = vrot.slane %v1061, 4
      %v1064 = vshll.u32 %v870, 16
      %v1066 = vrot.slane %v1064, 5
      %v1067 = vor.u32 %v1063, %v1066
      %v1068 = vrot.slane %v1067, 4
      %v1070 = vshll.u32 %v871, 16
      %v1072 = vrot.slane %v1070, 5
      %v1073 = vsel %vm167, %v1068, %v1072
      %v1074 = vshrl.u32 %v871, 16
      %v1076 = vrot.slane %v1074, 4
      %v1077 = vor.u32 %v1076, %v1072
      %v1078 = vrot.slane %v1077, 4
      %v1080 = vshll.u32 %v929, 16
      %v1082 = vrot.slane %v1080, 5
      %v1083 = vsel %vm167, %v1078, %v1082
      %v1085 = vshrl.u32 %v872, 16
      %v1087 = vrot.slane %v1085, 4
      %v1088 = vshll.u32 %v872, 16
      %v1090 = vrot.slane %v1088, 5
      %v1091 = vor.u32 %v1087, %v1090
      %v1092 = vrot.slane %v1091, 4
      %v1094 = vshll.u32 %v873, 16
      %v1096 = vrot.slane %v1094, 5
      %v1097 = vsel %vm167, %v1092, %v1096
      %v1098 = vshrl.u32 %v873, 16
      %v1100 = vrot.slane %v1098, 4
      %v1101 = vor.u32 %v1100, %v1096
      %v1102 = vrot.slane %v1101, 4
      %v1104 = vshll.u32 %v930, 16
      %v1106 = vrot.slane %v1104, 5
      %v1107 = vsel %vm167, %v1102, %v1106
      %v1109 = vshrl.u32 %v874, 16
      %v1111 = vrot.slane %v1109, 4
      %v1112 = vshll.u32 %v874, 16
      %v1114 = vrot.slane %v1112, 5
      %v1115 = vor.u32 %v1111, %v1114
      %v1116 = vrot.slane %v1115, 4
      %v1118 = vshll.u32 %v875, 16
      %v1120 = vrot.slane %v1118, 5
      %v1121 = vsel %vm167, %v1116, %v1120
      %v1122 = vshrl.u32 %v875, 16
      %v1124 = vrot.slane %v1122, 4
      %v1125 = vor.u32 %v1124, %v1120
      %v1126 = vrot.slane %v1125, 4
      %v1128 = vshll.u32 %v931, 16
      %v1130 = vrot.slane %v1128, 5
      %v1131 = vsel %vm167, %v1126, %v1130
      %v1133 = vshrl.u32 %v876, 16
      %v1135 = vrot.slane %v1133, 4
      %v1136 = vshll.u32 %v876, 16
      %v1138 = vrot.slane %v1136, 5
      %v1139 = vor.u32 %v1135, %v1138
      %v1140 = vrot.slane %v1139, 4
      %v1142 = vshll.u32 %v877, 16
      %v1144 = vrot.slane %v1142, 5
      %v1145 = vsel %vm167, %v1140, %v1144
      %v1146 = vshrl.u32 %v877, 16
      %v1148 = vrot.slane %v1146, 4
      %v1149 = vor.u32 %v1148, %v1144
      %v1150 = vrot.slane %v1149, 4
      %v1152 = vshll.u32 %v932, 16
      %v1154 = vrot.slane %v1152, 5
      %v1155 = vsel %vm167, %v1150, %v1154
      %v1157 = vshrl.u32 %v878, 16
      %v1159 = vrot.slane %v1157, 4
      %v1160 = vshll.u32 %v878, 16
      %v1162 = vrot.slane %v1160, 5
      %v1163 = vor.u32 %v1159, %v1162
      %v1164 = vrot.slane %v1163, 4
      %v1166 = vshll.u32 %v879, 16
      %v1168 = vrot.slane %v1166, 5
      %v1169 = vsel %vm167, %v1164, %v1168
      %v1170 = vshrl.u32 %v879, 16
      %v1172 = vrot.slane %v1170, 4
      %v1173 = vor.u32 %v1172, %v1168
      %v1174 = vrot.slane %v1173, 4
      %v1176 = vshll.u32 %v933, 16
      %v1178 = vrot.slane %v1176, 5
      %v1179 = vsel %vm167, %v1174, %v1178
      %v1181 = vshrl.u32 %v880, 16
      %v1183 = vrot.slane %v1181, 4
      %v1184 = vshll.u32 %v880, 16
      %v1186 = vrot.slane %v1184, 5
      %v1187 = vor.u32 %v1183, %v1186
      %v1188 = vrot.slane %v1187, 4
      %v1190 = vshll.u32 %v881, 16
      %v1192 = vrot.slane %v1190, 5
      %v1193 = vsel %vm167, %v1188, %v1192
      %v1194 = vshrl.u32 %v881, 16
      %v1196 = vrot.slane %v1194, 4
      %v1197 = vor.u32 %v1196, %v1192
      %v1198 = vrot.slane %v1197, 4
      %v1200 = vshll.u32 %v934, 16
      %v1202 = vrot.slane %v1200, 5
      %v1203 = vsel %vm167, %v1198, %v1202
      %v1205 = vshrl.u32 %v882, 16
      %v1207 = vrot.slane %v1205, 4
      %v1208 = vshll.u32 %v882, 16
      %v1210 = vrot.slane %v1208, 5
      %v1211 = vor.u32 %v1207, %v1210
      %v1212 = vrot.slane %v1211, 4
      %v1214 = vshll.u32 %v883, 16
      %v1216 = vrot.slane %v1214, 5
      %v1217 = vsel %vm167, %v1212, %v1216
      %v1218 = vshrl.u32 %v883, 16
      %v1220 = vrot.slane %v1218, 4
      %v1221 = vor.u32 %v1220, %v1216
      %v1222 = vrot.slane %v1221, 4
      %v1224 = vshll.u32 %v935, 16
      %v1226 = vrot.slane %v1224, 5
      %v1227 = vsel %vm167, %v1222, %v1226
      %v1229 = vshrl.u32 %v884, 16
      %v1231 = vrot.slane %v1229, 4
      %v1232 = vshll.u32 %v884, 16
      %v1234 = vrot.slane %v1232, 5
      %v1235 = vor.u32 %v1231, %v1234
      %v1236 = vrot.slane %v1235, 4
      %v1238 = vshll.u32 %v885, 16
      %v1240 = vrot.slane %v1238, 5
      %v1241 = vsel %vm167, %v1236, %v1240
      %v1242 = vshrl.u32 %v885, 16
      %v1244 = vrot.slane %v1242, 4
      %v1245 = vor.u32 %v1244, %v1240
      %v1246 = vrot.slane %v1245, 4
      %v1248 = vshll.u32 %v936, 16
      %v1250 = vrot.slane %v1248, 5
      %v1251 = vsel %vm167, %v1246, %v1250
      %v1253 = vshrl.u32 %v886, 16
      %v1255 = vrot.slane %v1253, 4
      %v1256 = vshll.u32 %v886, 16
      %v1258 = vrot.slane %v1256, 5
      %v1259 = vor.u32 %v1255, %v1258
      %v1260 = vrot.slane %v1259, 4
      %v1262 = vshll.u32 %v887, 16
      %v1264 = vrot.slane %v1262, 5
      %v1265 = vsel %vm167, %v1260, %v1264
      %v1266 = vshrl.u32 %v887, 16
      %v1268 = vrot.slane %v1266, 4
      %v1269 = vor.u32 %v1268, %v1264
      %v1270 = vrot.slane %v1269, 4
      %v1272 = vshll.u32 %v937, 16
      %v1274 = vrot.slane %v1272, 5
      %v1275 = vsel %vm167, %v1270, %v1274
      %v1277 = vshrl.u32 %v888, 16
      %v1279 = vrot.slane %v1277, 4
      %v1280 = vshll.u32 %v888, 16
      %v1282 = vrot.slane %v1280, 5
      %v1283 = vor.u32 %v1279, %v1282
      %v1284 = vrot.slane %v1283, 4
      %v1286 = vshll.u32 %v889, 16
      %v1288 = vrot.slane %v1286, 5
      %v1289 = vsel %vm167, %v1284, %v1288
      %v1290 = vshrl.u32 %v889, 16
      %v1292 = vrot.slane %v1290, 4
      %v1293 = vor.u32 %v1292, %v1288
      %v1294 = vrot.slane %v1293, 4
      %v1296 = vshll.u32 %v938, 16
      %v1298 = vrot.slane %v1296, 5
      %v1299 = vsel %vm167, %v1294, %v1298
      %v1301 = vshrl.u32 %v890, 16
      %v1303 = vrot.slane %v1301, 4
      %v1304 = vshll.u32 %v890, 16
      %v1306 = vrot.slane %v1304, 5
      %v1307 = vor.u32 %v1303, %v1306
      %v1308 = vrot.slane %v1307, 4
      %v1310 = vshll.u32 %v891, 16
      %v1312 = vrot.slane %v1310, 5
      %v1313 = vsel %vm167, %v1308, %v1312
      %v1314 = vshrl.u32 %v891, 16
      %v1316 = vrot.slane %v1314, 4
      %v1317 = vor.u32 %v1316, %v1312
      %v1318 = vrot.slane %v1317, 4
      %v1320 = vshll.u32 %v939, 16
      %v1322 = vrot.slane %v1320, 5
      %v1323 = vsel %vm167, %v1318, %v1322
      %v1356 = vmax.bf16 %v892, %v953
      %v1357 = vmax.bf16 %v893, %v963
      %v1358 = vmax.bf16 %v894, %v977
      %v1359 = vmax.bf16 %v895, %v987
      %v1360 = vmax.bf16 %v896, %v1001
      %v1361 = vmax.bf16 %v897, %v1011
      %v1362 = vmax.bf16 %v898, %v1025
      %v1363 = vmax.bf16 %v899, %v1035
      %v1364 = vmax.bf16 %v900, %v1049
      %v1365 = vmax.bf16 %v901, %v1059
      %v1366 = vmax.bf16 %v902, %v1073
      %v1367 = vmax.bf16 %v903, %v1083
      %v1368 = vmax.bf16 %v904, %v1097
      %v1369 = vmax.bf16 %v905, %v1107
      %v1370 = vmax.bf16 %v906, %v1121
      %v1371 = vmax.bf16 %v907, %v1131
      %v1372 = vmax.bf16 %v908, %v1145
      %v1373 = vmax.bf16 %v909, %v1155
      %v1374 = vmax.bf16 %v910, %v1169
      %v1375 = vmax.bf16 %v911, %v1179
      %v1376 = vmax.bf16 %v912, %v1193
      %v1377 = vmax.bf16 %v913, %v1203
      %v1378 = vmax.bf16 %v914, %v1217
      %v1379 = vmax.bf16 %v915, %v1227
      %v1380 = vmax.bf16 %v916, %v1241
      %v1381 = vmax.bf16 %v917, %v1251
      %v1382 = vmax.bf16 %v918, %v1265
      %v1383 = vmax.bf16 %v919, %v1275
      %v1384 = vmax.bf16 %v920, %v1289
      %v1385 = vmax.bf16 %v921, %v1299
      %v1386 = vmax.bf16 %v922, %v1313
      %v1387 = vmax.bf16 %v923, %v1323
      %v1388 = vld [vmem:[%s859] sm:$0xe]
      %v1389 = vld [vmem:[%s859 + $0xc] sm:$0xe]
      %v1390 = vld [vmem:[%s859 + $0x18] sm:$0xe]
      %v1391 = vld [vmem:[%s859 + $0x24] sm:$0xe]
      %v1392 = vld [vmem:[%s859 + $0x30] sm:$0xe]
      %v1393 = vld [vmem:[%s859 + $0x3c] sm:$0xe]
      %v1394 = vld [vmem:[%s859 + $0x48] sm:$0xe]
      %v1395 = vld [vmem:[%s859 + $0x54] sm:$0xe]
      %v1396 = vld [vmem:[%s859 + $0x60] sm:$0xe]
      %v1397 = vld [vmem:[%s859 + $0x6c] sm:$0xe]
      %v1398 = vld [vmem:[%s859 + $0x78] sm:$0xe]
      %v1399 = vld [vmem:[%s859 + $0x84] sm:$0xe]
      %v1400 = vld [vmem:[%s859 + $0x90] sm:$0xe]
      %v1401 = vld [vmem:[%s859 + $0x9c] sm:$0xe]
      %v1402 = vld [vmem:[%s859 + $0xa8] sm:$0xe]
      %v1403 = vld [vmem:[%s859 + $0xb4] sm:$0xe]
      %v1452 = vrot.slane %v1388, 5
      %v1453 = vrot.slane %v1452, 4
      %v1454 = vrot.slane %v861, 5
      %v1455 = vsel %vm682, %v1453, %v1454
      %v1456 = vrot.slane %v1454, 4
      %v1457 = vrot.slane %v924, 5
      %v1458 = vsel %vm682, %v1456, %v1457
      %v1459 = vrot.slane %v1389, 5
      %v1460 = vrot.slane %v1459, 4
      %v1461 = vrot.slane %v863, 5
      %v1462 = vsel %vm682, %v1460, %v1461
      %v1463 = vrot.slane %v1461, 4
      %v1464 = vrot.slane %v925, 5
      %v1465 = vsel %vm682, %v1463, %v1464
      %v1466 = vrot.slane %v1390, 5
      %v1467 = vrot.slane %v1466, 4
      %v1468 = vrot.slane %v865, 5
      %v1469 = vsel %vm682, %v1467, %v1468
      %v1470 = vrot.slane %v1468, 4
      %v1471 = vrot.slane %v926, 5
      %v1472 = vsel %vm682, %v1470, %v1471
      %v1473 = vrot.slane %v1391, 5
      %v1474 = vrot.slane %v1473, 4
      %v1475 = vrot.slane %v867, 5
      %v1476 = vsel %vm682, %v1474, %v1475
      %v1477 = vrot.slane %v1475, 4
      %v1478 = vrot.slane %v927, 5
      %v1479 = vsel %vm682, %v1477, %v1478
      %v1480 = vrot.slane %v1392, 5
      %v1481 = vrot.slane %v1480, 4
      %v1482 = vrot.slane %v869, 5
      %v1483 = vsel %vm682, %v1481, %v1482
      %v1484 = vrot.slane %v1482, 4
      %v1485 = vrot.slane %v928, 5
      %v1486 = vsel %vm682, %v1484, %v1485
      %v1487 = vrot.slane %v1393, 5
      %v1488 = vrot.slane %v1487, 4
      %v1489 = vrot.slane %v871, 5
      %v1490 = vsel %vm682, %v1488, %v1489
      %v1491 = vrot.slane %v1489, 4
      %v1492 = vrot.slane %v929, 5
      %v1493 = vsel %vm682, %v1491, %v1492
      %v1494 = vrot.slane %v1394, 5
      %v1495 = vrot.slane %v1494, 4
      %v1496 = vrot.slane %v873, 5
      %v1497 = vsel %vm682, %v1495, %v1496
      %v1498 = vrot.slane %v1496, 4
      %v1499 = vrot.slane %v930, 5
      %v1500 = vsel %vm682, %v1498, %v1499
      %v1501 = vrot.slane %v1395, 5
      %v1502 = vrot.slane %v1501, 4
      %v1503 = vrot.slane %v875, 5
      %v1504 = vsel %vm682, %v1502, %v1503
      %v1505 = vrot.slane %v1503, 4
      %v1506 = vrot.slane %v931, 5
      %v1507 = vsel %vm682, %v1505, %v1506
      %v1508 = vrot.slane %v1396, 5
      %v1509 = vrot.slane %v1508, 4
      %v1510 = vrot.slane %v877, 5
      %v1511 = vsel %vm682, %v1509, %v1510
      %v1512 = vrot.slane %v1510, 4
      %v1513 = vrot.slane %v932, 5
      %v1514 = vsel %vm682, %v1512, %v1513
      %v1515 = vrot.slane %v1397, 5
      %v1516 = vrot.slane %v1515, 4
      %v1517 = vrot.slane %v879, 5
      %v1518 = vsel %vm682, %v1516, %v1517
      %v1519 = vrot.slane %v1517, 4
      %v1520 = vrot.slane %v933, 5
      %v1521 = vsel %vm682, %v1519, %v1520
      %v1522 = vrot.slane %v1398, 5
      %v1523 = vrot.slane %v1522, 4
      %v1524 = vrot.slane %v881, 5
      %v1525 = vsel %vm682, %v1523, %v1524
      %v1526 = vrot.slane %v1524, 4
      %v1527 = vrot.slane %v934, 5
      %v1528 = vsel %vm682, %v1526, %v1527
      %v1529 = vrot.slane %v1399, 5
      %v1530 = vrot.slane %v1529, 4
      %v1531 = vrot.slane %v883, 5
      %v1532 = vsel %vm682, %v1530, %v1531
      %v1533 = vrot.slane %v1531, 4
      %v1534 = vrot.slane %v935, 5
      %v1535 = vsel %vm682, %v1533, %v1534
      %v1536 = vrot.slane %v1400, 5
      %v1537 = vrot.slane %v1536, 4
      %v1538 = vrot.slane %v885, 5
      %v1539 = vsel %vm682, %v1537, %v1538
      %v1540 = vrot.slane %v1538, 4
      %v1541 = vrot.slane %v936, 5
      %v1542 = vsel %vm682, %v1540, %v1541
      %v1543 = vrot.slane %v1401, 5
      %v1544 = vrot.slane %v1543, 4
      %v1545 = vrot.slane %v887, 5
      %v1546 = vsel %vm682, %v1544, %v1545
      %v1547 = vrot.slane %v1545, 4
      %v1548 = vrot.slane %v937, 5
      %v1549 = vsel %vm682, %v1547, %v1548
      %v1550 = vrot.slane %v1402, 5
      %v1551 = vrot.slane %v1550, 4
      %v1552 = vrot.slane %v889, 5
      %v1553 = vsel %vm682, %v1551, %v1552
      %v1554 = vrot.slane %v1552, 4
      %v1555 = vrot.slane %v938, 5
      %v1556 = vsel %vm682, %v1554, %v1555
      %v1557 = vrot.slane %v1403, 5
      %v1558 = vrot.slane %v1557, 4
      %v1559 = vrot.slane %v891, 5
      %v1560 = vsel %vm682, %v1558, %v1559
      %v1561 = vrot.slane %v1559, 4
      %v1562 = vrot.slane %v939, 5
      %v1563 = vsel %vm682, %v1561, %v1562
      %v1596 = vmax.bf16 %v1356, %v1455
      %v1597 = vmax.bf16 %v1357, %v1458
      %v1598 = vmax.bf16 %v1358, %v1462
      %v1599 = vmax.bf16 %v1359, %v1465
      %v1600 = vmax.bf16 %v1360, %v1469
      %v1601 = vmax.bf16 %v1361, %v1472
      %v1602 = vmax.bf16 %v1362, %v1476
      %v1603 = vmax.bf16 %v1363, %v1479
      %v1604 = vmax.bf16 %v1364, %v1483
      %v1605 = vmax.bf16 %v1365, %v1486
      %v1606 = vmax.bf16 %v1366, %v1490
      %v1607 = vmax.bf16 %v1367, %v1493
      %v1608 = vmax.bf16 %v1368, %v1497
      %v1609 = vmax.bf16 %v1369, %v1500
      %v1610 = vmax.bf16 %v1370, %v1504
      %v1611 = vmax.bf16 %v1371, %v1507
      %v1612 = vmax.bf16 %v1372, %v1511
      %v1613 = vmax.bf16 %v1373, %v1514
      %v1614 = vmax.bf16 %v1374, %v1518
      %v1615 = vmax.bf16 %v1375, %v1521
      %v1616 = vmax.bf16 %v1376, %v1525
      %v1617 = vmax.bf16 %v1377, %v1528
      %v1618 = vmax.bf16 %v1378, %v1532
      %v1619 = vmax.bf16 %v1379, %v1535
      %v1620 = vmax.bf16 %v1380, %v1539
      %v1621 = vmax.bf16 %v1381, %v1542
      %v1622 = vmax.bf16 %v1382, %v1546
      %v1623 = vmax.bf16 %v1383, %v1549
      %v1624 = vmax.bf16 %v1384, %v1553
      %v1625 = vmax.bf16 %v1385, %v1556
      %v1626 = vmax.bf16 %v1386, %v1560
      %v1627 = vmax.bf16 %v1387, %v1563
      %s1628 = scalar_lea.vmem %s111, 24
      %v1629 = vld [vmem:[%s1628] sm:$0xf]
      %v1630 = vld [vmem:[%s1628 + $0x4] sm:$0xf]
      %v1631 = vld [vmem:[%s1628 + $0xc] sm:$0xf]
      %v1632 = vld [vmem:[%s1628 + $0x10] sm:$0xf]
      %v1633 = vld [vmem:[%s1628 + $0x18] sm:$0xf]
      %v1634 = vld [vmem:[%s1628 + $0x1c] sm:$0xf]
      %v1635 = vld [vmem:[%s1628 + $0x24] sm:$0xf]
      %v1636 = vld [vmem:[%s1628 + $0x28] sm:$0xf]
      %v1637 = vld [vmem:[%s1628 + $0x30] sm:$0xf]
      %v1638 = vld [vmem:[%s1628 + $0x34] sm:$0xf]
      %v1639 = vld [vmem:[%s1628 + $0x3c] sm:$0xf]
      %v1640 = vld [vmem:[%s1628 + $0x40] sm:$0xf]
      %v1641 = vld [vmem:[%s1628 + $0x48] sm:$0xf]
      %v1642 = vld [vmem:[%s1628 + $0x4c] sm:$0xf]
      %v1643 = vld [vmem:[%s1628 + $0x54] sm:$0xf]
      %v1644 = vld [vmem:[%s1628 + $0x58] sm:$0xf]
      %v1645 = vld [vmem:[%s1628 + $0x60] sm:$0xf]
      %v1646 = vld [vmem:[%s1628 + $0x64] sm:$0xf]
      %v1647 = vld [vmem:[%s1628 + $0x6c] sm:$0xf]
      %v1648 = vld [vmem:[%s1628 + $0x70] sm:$0xf]
      %v1649 = vld [vmem:[%s1628 + $0x78] sm:$0xf]
      %v1650 = vld [vmem:[%s1628 + $0x7c] sm:$0xf]
      %v1651 = vld [vmem:[%s1628 + $0x84] sm:$0xf]
      %v1652 = vld [vmem:[%s1628 + $0x88] sm:$0xf]
      %v1653 = vld [vmem:[%s1628 + $0x90] sm:$0xf]
      %v1654 = vld [vmem:[%s1628 + $0x94] sm:$0xf]
      %v1655 = vld [vmem:[%s1628 + $0x9c] sm:$0xf]
      %v1656 = vld [vmem:[%s1628 + $0xa0] sm:$0xf]
      %v1657 = vld [vmem:[%s1628 + $0xa8] sm:$0xf]
      %v1658 = vld [vmem:[%s1628 + $0xac] sm:$0xf]
      %v1659 = vld [vmem:[%s1628 + $0xb4] sm:$0xf]
      %v1660 = vld [vmem:[%s1628 + $0xb8] sm:$0xf]
      %v1661 = vmax.bf16 %v1596, %v1629
      %v1662 = vmax.bf16 %v1597, %v1630
      %v1663 = vmax.bf16 %v1598, %v1631
      %v1664 = vmax.bf16 %v1599, %v1632
      %v1665 = vmax.bf16 %v1600, %v1633
      %v1666 = vmax.bf16 %v1601, %v1634
      %v1667 = vmax.bf16 %v1602, %v1635
      %v1668 = vmax.bf16 %v1603, %v1636
      %v1669 = vmax.bf16 %v1604, %v1637
      %v1670 = vmax.bf16 %v1605, %v1638
      %v1671 = vmax.bf16 %v1606, %v1639
      %v1672 = vmax.bf16 %v1607, %v1640
      %v1673 = vmax.bf16 %v1608, %v1641
      %v1674 = vmax.bf16 %v1609, %v1642
      %v1675 = vmax.bf16 %v1610, %v1643
      %v1676 = vmax.bf16 %v1611, %v1644
      %v1677 = vmax.bf16 %v1612, %v1645
      %v1678 = vmax.bf16 %v1613, %v1646
      %v1679 = vmax.bf16 %v1614, %v1647
      %v1680 = vmax.bf16 %v1615, %v1648
      %v1681 = vmax.bf16 %v1616, %v1649
      %v1682 = vmax.bf16 %v1617, %v1650
      %v1683 = vmax.bf16 %v1618, %v1651
      %v1684 = vmax.bf16 %v1619, %v1652
      %v1685 = vmax.bf16 %v1620, %v1653
      %v1686 = vmax.bf16 %v1621, %v1654
      %v1687 = vmax.bf16 %v1622, %v1655
      %v1688 = vmax.bf16 %v1623, %v1656
      %v1689 = vmax.bf16 %v1624, %v1657
      %v1690 = vmax.bf16 %v1625, %v1658
      %v1691 = vmax.bf16 %v1626, %v1659
      %v1692 = vmax.bf16 %v1627, %v1660
      %v1693 = vld [vmem:[%s1628 + $0x8] sm:$0x1]
      %v1694 = vld [vmem:[%s1628 + $0x14] sm:$0x1]
      %v1695 = vld [vmem:[%s1628 + $0x20] sm:$0x1]
      %v1696 = vld [vmem:[%s1628 + $0x2c] sm:$0x1]
      %v1697 = vld [vmem:[%s1628 + $0x38] sm:$0x1]
      %v1698 = vld [vmem:[%s1628 + $0x44] sm:$0x1]
      %v1699 = vld [vmem:[%s1628 + $0x50] sm:$0x1]
      %v1700 = vld [vmem:[%s1628 + $0x5c] sm:$0x1]
      %v1701 = vld [vmem:[%s1628 + $0x68] sm:$0x1]
      %v1702 = vld [vmem:[%s1628 + $0x74] sm:$0x1]
      %v1703 = vld [vmem:[%s1628 + $0x80] sm:$0x1]
      %v1704 = vld [vmem:[%s1628 + $0x8c] sm:$0x1]
      %v1705 = vld [vmem:[%s1628 + $0x98] sm:$0x1]
      %v1706 = vld [vmem:[%s1628 + $0xa4] sm:$0x1]
      %v1707 = vld [vmem:[%s1628 + $0xb0] sm:$0x1]
      %v1708 = vld [vmem:[%s1628 + $0xbc] sm:$0x1]
      %v1710 = vshrl.u32 %v1629, 16
      %v1712 = vrot.slane %v1710, 4
      %v1713 = vshll.u32 %v1629, 16
      %v1715 = vrot.slane %v1713, 5
      %v1716 = vor.u32 %v1712, %v1715
      %v1717 = vrot.slane %v1716, 4
      %v1719 = vshll.u32 %v1630, 16
      %v1721 = vrot.slane %v1719, 5
      %v1722 = vsel %vm167, %v1717, %v1721
      %v1723 = vshrl.u32 %v1630, 16
      %v1725 = vrot.slane %v1723, 4
      %v1726 = vor.u32 %v1725, %v1721
      %v1727 = vrot.slane %v1726, 4
      %v1729 = vshll.u32 %v1693, 16
      %v1731 = vrot.slane %v1729, 5
      %v1732 = vsel %vm167, %v1727, %v1731
      %v1734 = vshrl.u32 %v1631, 16
      %v1736 = vrot.slane %v1734, 4
      %v1737 = vshll.u32 %v1631, 16
      %v1739 = vrot.slane %v1737, 5
      %v1740 = vor.u32 %v1736, %v1739
      %v1741 = vrot.slane %v1740, 4
      %v1743 = vshll.u32 %v1632, 16
      %v1745 = vrot.slane %v1743, 5
      %v1746 = vsel %vm167, %v1741, %v1745
      %v1747 = vshrl.u32 %v1632, 16
      %v1749 = vrot.slane %v1747, 4
      %v1750 = vor.u32 %v1749, %v1745
      %v1751 = vrot.slane %v1750, 4
      %v1753 = vshll.u32 %v1694, 16
      %v1755 = vrot.slane %v1753, 5
      %v1756 = vsel %vm167, %v1751, %v1755
      %v1758 = vshrl.u32 %v1633, 16
      %v1760 = vrot.slane %v1758, 4
      %v1761 = vshll.u32 %v1633, 16
      %v1763 = vrot.slane %v1761, 5
      %v1764 = vor.u32 %v1760, %v1763
      %v1765 = vrot.slane %v1764, 4
      %v1767 = vshll.u32 %v1634, 16
      %v1769 = vrot.slane %v1767, 5
      %v1770 = vsel %vm167, %v1765, %v1769
      %v1771 = vshrl.u32 %v1634, 16
      %v1773 = vrot.slane %v1771, 4
      %v1774 = vor.u32 %v1773, %v1769
      %v1775 = vrot.slane %v1774, 4
      %v1777 = vshll.u32 %v1695, 16
      %v1779 = vrot.slane %v1777, 5
      %v1780 = vsel %vm167, %v1775, %v1779
      %v1782 = vshrl.u32 %v1635, 16
      %v1784 = vrot.slane %v1782, 4
      %v1785 = vshll.u32 %v1635, 16
      %v1787 = vrot.slane %v1785, 5
      %v1788 = vor.u32 %v1784, %v1787
      %v1789 = vrot.slane %v1788, 4
      %v1791 = vshll.u32 %v1636, 16
      %v1793 = vrot.slane %v1791, 5
      %v1794 = vsel %vm167, %v1789, %v1793
      %v1795 = vshrl.u32 %v1636, 16
      %v1797 = vrot.slane %v1795, 4
      %v1798 = vor.u32 %v1797, %v1793
      %v1799 = vrot.slane %v1798, 4
      %v1801 = vshll.u32 %v1696, 16
      %v1803 = vrot.slane %v1801, 5
      %v1804 = vsel %vm167, %v1799, %v1803
      %v1806 = vshrl.u32 %v1637, 16
      %v1808 = vrot.slane %v1806, 4
      %v1809 = vshll.u32 %v1637, 16
      %v1811 = vrot.slane %v1809, 5
      %v1812 = vor.u32 %v1808, %v1811
      %v1813 = vrot.slane %v1812, 4
      %v1815 = vshll.u32 %v1638, 16
      %v1817 = vrot.slane %v1815, 5
      %v1818 = vsel %vm167, %v1813, %v1817
      %v1819 = vshrl.u32 %v1638, 16
      %v1821 = vrot.slane %v1819, 4
      %v1822 = vor.u32 %v1821, %v1817
      %v1823 = vrot.slane %v1822, 4
      %v1825 = vshll.u32 %v1697, 16
      %v1827 = vrot.slane %v1825, 5
      %v1828 = vsel %vm167, %v1823, %v1827
      %v1830 = vshrl.u32 %v1639, 16
      %v1832 = vrot.slane %v1830, 4
      %v1833 = vshll.u32 %v1639, 16
      %v1835 = vrot.slane %v1833, 5
      %v1836 = vor.u32 %v1832, %v1835
      %v1837 = vrot.slane %v1836, 4
      %v1839 = vshll.u32 %v1640, 16
      %v1841 = vrot.slane %v1839, 5
      %v1842 = vsel %vm167, %v1837, %v1841
      %v1843 = vshrl.u32 %v1640, 16
      %v1845 = vrot.slane %v1843, 4
      %v1846 = vor.u32 %v1845, %v1841
      %v1847 = vrot.slane %v1846, 4
      %v1849 = vshll.u32 %v1698, 16
      %v1851 = vrot.slane %v1849, 5
      %v1852 = vsel %vm167, %v1847, %v1851
      %v1854 = vshrl.u32 %v1641, 16
      %v1856 = vrot.slane %v1854, 4
      %v1857 = vshll.u32 %v1641, 16
      %v1859 = vrot.slane %v1857, 5
      %v1860 = vor.u32 %v1856, %v1859
      %v1861 = vrot.slane %v1860, 4
      %v1863 = vshll.u32 %v1642, 16
      %v1865 = vrot.slane %v1863, 5
      %v1866 = vsel %vm167, %v1861, %v1865
      %v1867 = vshrl.u32 %v1642, 16
      %v1869 = vrot.slane %v1867, 4
      %v1870 = vor.u32 %v1869, %v1865
      %v1871 = vrot.slane %v1870, 4
      %v1873 = vshll.u32 %v1699, 16
      %v1875 = vrot.slane %v1873, 5
      %v1876 = vsel %vm167, %v1871, %v1875
      %v1878 = vshrl.u32 %v1643, 16
      %v1880 = vrot.slane %v1878, 4
      %v1881 = vshll.u32 %v1643, 16
      %v1883 = vrot.slane %v1881, 5
      %v1884 = vor.u32 %v1880, %v1883
      %v1885 = vrot.slane %v1884, 4
      %v1887 = vshll.u32 %v1644, 16
      %v1889 = vrot.slane %v1887, 5
      %v1890 = vsel %vm167, %v1885, %v1889
      %v1891 = vshrl.u32 %v1644, 16
      %v1893 = vrot.slane %v1891, 4
      %v1894 = vor.u32 %v1893, %v1889
      %v1895 = vrot.slane %v1894, 4
      %v1897 = vshll.u32 %v1700, 16
      %v1899 = vrot.slane %v1897, 5
      %v1900 = vsel %vm167, %v1895, %v1899
      %v1902 = vshrl.u32 %v1645, 16
      %v1904 = vrot.slane %v1902, 4
      %v1905 = vshll.u32 %v1645, 16
      %v1907 = vrot.slane %v1905, 5
      %v1908 = vor.u32 %v1904, %v1907
      %v1909 = vrot.slane %v1908, 4
      %v1911 = vshll.u32 %v1646, 16
      %v1913 = vrot.slane %v1911, 5
      %v1914 = vsel %vm167, %v1909, %v1913
      %v1915 = vshrl.u32 %v1646, 16
      %v1917 = vrot.slane %v1915, 4
      %v1918 = vor.u32 %v1917, %v1913
      %v1919 = vrot.slane %v1918, 4
      %v1921 = vshll.u32 %v1701, 16
      %v1923 = vrot.slane %v1921, 5
      %v1924 = vsel %vm167, %v1919, %v1923
      %v1926 = vshrl.u32 %v1647, 16
      %v1928 = vrot.slane %v1926, 4
      %v1929 = vshll.u32 %v1647, 16
      %v1931 = vrot.slane %v1929, 5
      %v1932 = vor.u32 %v1928, %v1931
      %v1933 = vrot.slane %v1932, 4
      %v1935 = vshll.u32 %v1648, 16
      %v1937 = vrot.slane %v1935, 5
      %v1938 = vsel %vm167, %v1933, %v1937
      %v1939 = vshrl.u32 %v1648, 16
      %v1941 = vrot.slane %v1939, 4
      %v1942 = vor.u32 %v1941, %v1937
      %v1943 = vrot.slane %v1942, 4
      %v1945 = vshll.u32 %v1702, 16
      %v1947 = vrot.slane %v1945, 5
      %v1948 = vsel %vm167, %v1943, %v1947
      %v1950 = vshrl.u32 %v1649, 16
      %v1952 = vrot.slane %v1950, 4
      %v1953 = vshll.u32 %v1649, 16
      %v1955 = vrot.slane %v1953, 5
      %v1956 = vor.u32 %v1952, %v1955
      %v1957 = vrot.slane %v1956, 4
      %v1959 = vshll.u32 %v1650, 16
      %v1961 = vrot.slane %v1959, 5
      %v1962 = vsel %vm167, %v1957, %v1961
      %v1963 = vshrl.u32 %v1650, 16
      %v1965 = vrot.slane %v1963, 4
      %v1966 = vor.u32 %v1965, %v1961
      %v1967 = vrot.slane %v1966, 4
      %v1969 = vshll.u32 %v1703, 16
      %v1971 = vrot.slane %v1969, 5
      %v1972 = vsel %vm167, %v1967, %v1971
      %v1974 = vshrl.u32 %v1651, 16
      %v1976 = vrot.slane %v1974, 4
      %v1977 = vshll.u32 %v1651, 16
      %v1979 = vrot.slane %v1977, 5
      %v1980 = vor.u32 %v1976, %v1979
      %v1981 = vrot.slane %v1980, 4
      %v1983 = vshll.u32 %v1652, 16
      %v1985 = vrot.slane %v1983, 5
      %v1986 = vsel %vm167, %v1981, %v1985
      %v1987 = vshrl.u32 %v1652, 16
      %v1989 = vrot.slane %v1987, 4
      %v1990 = vor.u32 %v1989, %v1985
      %v1991 = vrot.slane %v1990, 4
      %v1993 = vshll.u32 %v1704, 16
      %v1995 = vrot.slane %v1993, 5
      %v1996 = vsel %vm167, %v1991, %v1995
      %v1998 = vshrl.u32 %v1653, 16
      %v2000 = vrot.slane %v1998, 4
      %v2001 = vshll.u32 %v1653, 16
      %v2003 = vrot.slane %v2001, 5
      %v2004 = vor.u32 %v2000, %v2003
      %v2005 = vrot.slane %v2004, 4
      %v2007 = vshll.u32 %v1654, 16
      %v2009 = vrot.slane %v2007, 5
      %v2010 = vsel %vm167, %v2005, %v2009
      %v2011 = vshrl.u32 %v1654, 16
      %v2013 = vrot.slane %v2011, 4
      %v2014 = vor.u32 %v2013, %v2009
      %v2015 = vrot.slane %v2014, 4
      %v2017 = vshll.u32 %v1705, 16
      %v2019 = vrot.slane %v2017, 5
      %v2020 = vsel %vm167, %v2015, %v2019
      %v2022 = vshrl.u32 %v1655, 16
      %v2024 = vrot.slane %v2022, 4
      %v2025 = vshll.u32 %v1655, 16
      %v2027 = vrot.slane %v2025, 5
      %v2028 = vor.u32 %v2024, %v2027
      %v2029 = vrot.slane %v2028, 4
      %v2031 = vshll.u32 %v1656, 16
      %v2033 = vrot.slane %v2031, 5
      %v2034 = vsel %vm167, %v2029, %v2033
      %v2035 = vshrl.u32 %v1656, 16
      %v2037 = vrot.slane %v2035, 4
      %v2038 = vor.u32 %v2037, %v2033
      %v2039 = vrot.slane %v2038, 4
      %v2041 = vshll.u32 %v1706, 16
      %v2043 = vrot.slane %v2041, 5
      %v2044 = vsel %vm167, %v2039, %v2043
      %v2046 = vshrl.u32 %v1657, 16
      %v2048 = vrot.slane %v2046, 4
      %v2049 = vshll.u32 %v1657, 16
      %v2051 = vrot.slane %v2049, 5
      %v2052 = vor.u32 %v2048, %v2051
      %v2053 = vrot.slane %v2052, 4
      %v2055 = vshll.u32 %v1658, 16
      %v2057 = vrot.slane %v2055, 5
      %v2058 = vsel %vm167, %v2053, %v2057
      %v2059 = vshrl.u32 %v1658, 16
      %v2061 = vrot.slane %v2059, 4
      %v2062 = vor.u32 %v2061, %v2057
      %v2063 = vrot.slane %v2062, 4
      %v2065 = vshll.u32 %v1707, 16
      %v2067 = vrot.slane %v2065, 5
      %v2068 = vsel %vm167, %v2063, %v2067
      %v2070 = vshrl.u32 %v1659, 16
      %v2072 = vrot.slane %v2070, 4
      %v2073 = vshll.u32 %v1659, 16
      %v2075 = vrot.slane %v2073, 5
      %v2076 = vor.u32 %v2072, %v2075
      %v2077 = vrot.slane %v2076, 4
      %v2079 = vshll.u32 %v1660, 16
      %v2081 = vrot.slane %v2079, 5
      %v2082 = vsel %vm167, %v2077, %v2081
      %v2083 = vshrl.u32 %v1660, 16
      %v2085 = vrot.slane %v2083, 4
      %v2086 = vor.u32 %v2085, %v2081
      %v2087 = vrot.slane %v2086, 4
      %v2089 = vshll.u32 %v1708, 16
      %v2091 = vrot.slane %v2089, 5
      %v2092 = vsel %vm167, %v2087, %v2091
      %v2125 = vmax.bf16 %v1661, %v1722
      %v2126 = vmax.bf16 %v1662, %v1732
      %v2127 = vmax.bf16 %v1663, %v1746
      %v2128 = vmax.bf16 %v1664, %v1756
      %v2129 = vmax.bf16 %v1665, %v1770
      %v2130 = vmax.bf16 %v1666, %v1780
      %v2131 = vmax.bf16 %v1667, %v1794
      %v2132 = vmax.bf16 %v1668, %v1804
      %v2133 = vmax.bf16 %v1669, %v1818
      %v2134 = vmax.bf16 %v1670, %v1828
      %v2135 = vmax.bf16 %v1671, %v1842
      %v2136 = vmax.bf16 %v1672, %v1852
      %v2137 = vmax.bf16 %v1673, %v1866
      %v2138 = vmax.bf16 %v1674, %v1876
      %v2139 = vmax.bf16 %v1675, %v1890
      %v2140 = vmax.bf16 %v1676, %v1900
      %v2141 = vmax.bf16 %v1677, %v1914
      %v2142 = vmax.bf16 %v1678, %v1924
      %v2143 = vmax.bf16 %v1679, %v1938
      %v2144 = vmax.bf16 %v1680, %v1948
      %v2145 = vmax.bf16 %v1681, %v1962
      %v2146 = vmax.bf16 %v1682, %v1972
      %v2147 = vmax.bf16 %v1683, %v1986
      %v2148 = vmax.bf16 %v1684, %v1996
      %v2149 = vmax.bf16 %v1685, %v2010
      %v2150 = vmax.bf16 %v1686, %v2020
      %v2151 = vmax.bf16 %v1687, %v2034
      %v2152 = vmax.bf16 %v1688, %v2044
      %v2153 = vmax.bf16 %v1689, %v2058
      %v2154 = vmax.bf16 %v1690, %v2068
      %v2155 = vmax.bf16 %v1691, %v2082
      %v2156 = vmax.bf16 %v1692, %v2092
      %v2157 = vld [vmem:[%s1628] sm:$0xe]
      %v2158 = vld [vmem:[%s1628 + $0xc] sm:$0xe]
      %v2159 = vld [vmem:[%s1628 + $0x18] sm:$0xe]
      %v2160 = vld [vmem:[%s1628 + $0x24] sm:$0xe]
      %v2161 = vld [vmem:[%s1628 + $0x30] sm:$0xe]
      %v2162 = vld [vmem:[%s1628 + $0x3c] sm:$0xe]
      %v2163 = vld [vmem:[%s1628 + $0x48] sm:$0xe]
      %v2164 = vld [vmem:[%s1628 + $0x54] sm:$0xe]
      %v2165 = vld [vmem:[%s1628 + $0x60] sm:$0xe]
      %v2166 = vld [vmem:[%s1628 + $0x6c] sm:$0xe]
      %v2167 = vld [vmem:[%s1628 + $0x78] sm:$0xe]
      %v2168 = vld [vmem:[%s1628 + $0x84] sm:$0xe]
      %v2169 = vld [vmem:[%s1628 + $0x90] sm:$0xe]
      %v2170 = vld [vmem:[%s1628 + $0x9c] sm:$0xe]
      %v2171 = vld [vmem:[%s1628 + $0xa8] sm:$0xe]
      %v2172 = vld [vmem:[%s1628 + $0xb4] sm:$0xe]
      %v2221 = vrot.slane %v2157, 5
      %v2222 = vrot.slane %v2221, 4
      %v2223 = vrot.slane %v1630, 5
      %v2224 = vsel %vm682, %v2222, %v2223
      %v2225 = vrot.slane %v2223, 4
      %v2226 = vrot.slane %v1693, 5
      %v2227 = vsel %vm682, %v2225, %v2226
      %v2228 = vrot.slane %v2158, 5
      %v2229 = vrot.slane %v2228, 4
      %v2230 = vrot.slane %v1632, 5
      %v2231 = vsel %vm682, %v2229, %v2230
      %v2232 = vrot.slane %v2230, 4
      %v2233 = vrot.slane %v1694, 5
      %v2234 = vsel %vm682, %v2232, %v2233
      %v2235 = vrot.slane %v2159, 5
      %v2236 = vrot.slane %v2235, 4
      %v2237 = vrot.slane %v1634, 5
      %v2238 = vsel %vm682, %v2236, %v2237
      %v2239 = vrot.slane %v2237, 4
      %v2240 = vrot.slane %v1695, 5
      %v2241 = vsel %vm682, %v2239, %v2240
      %v2242 = vrot.slane %v2160, 5
      %v2243 = vrot.slane %v2242, 4
      %v2244 = vrot.slane %v1636, 5
      %v2245 = vsel %vm682, %v2243, %v2244
      %v2246 = vrot.slane %v2244, 4
      %v2247 = vrot.slane %v1696, 5
      %v2248 = vsel %vm682, %v2246, %v2247
      %v2249 = vrot.slane %v2161, 5
      %v2250 = vrot.slane %v2249, 4
      %v2251 = vrot.slane %v1638, 5
      %v2252 = vsel %vm682, %v2250, %v2251
      %v2253 = vrot.slane %v2251, 4
      %v2254 = vrot.slane %v1697, 5
      %v2255 = vsel %vm682, %v2253, %v2254
      %v2256 = vrot.slane %v2162, 5
      %v2257 = vrot.slane %v2256, 4
      %v2258 = vrot.slane %v1640, 5
      %v2259 = vsel %vm682, %v2257, %v2258
      %v2260 = vrot.slane %v2258, 4
      %v2261 = vrot.slane %v1698, 5
      %v2262 = vsel %vm682, %v2260, %v2261
      %v2263 = vrot.slane %v2163, 5
      %v2264 = vrot.slane %v2263, 4
      %v2265 = vrot.slane %v1642, 5
      %v2266 = vsel %vm682, %v2264, %v2265
      %v2267 = vrot.slane %v2265, 4
      %v2268 = vrot.slane %v1699, 5
      %v2269 = vsel %vm682, %v2267, %v2268
      %v2270 = vrot.slane %v2164, 5
      %v2271 = vrot.slane %v2270, 4
      %v2272 = vrot.slane %v1644, 5
      %v2273 = vsel %vm682, %v2271, %v2272
      %v2274 = vrot.slane %v2272, 4
      %v2275 = vrot.slane %v1700, 5
      %v2276 = vsel %vm682, %v2274, %v2275
      %v2277 = vrot.slane %v2165, 5
      %v2278 = vrot.slane %v2277, 4
      %v2279 = vrot.slane %v1646, 5
      %v2280 = vsel %vm682, %v2278, %v2279
      %v2281 = vrot.slane %v2279, 4
      %v2282 = vrot.slane %v1701, 5
      %v2283 = vsel %vm682, %v2281, %v2282
      %v2284 = vrot.slane %v2166, 5
      %v2285 = vrot.slane %v2284, 4
      %v2286 = vrot.slane %v1648, 5
      %v2287 = vsel %vm682, %v2285, %v2286
      %v2288 = vrot.slane %v2286, 4
      %v2289 = vrot.slane %v1702, 5
      %v2290 = vsel %vm682, %v2288, %v2289
      %v2291 = vrot.slane %v2167, 5
      %v2292 = vrot.slane %v2291, 4
      %v2293 = vrot.slane %v1650, 5
      %v2294 = vsel %vm682, %v2292, %v2293
      %v2295 = vrot.slane %v2293, 4
      %v2296 = vrot.slane %v1703, 5
      %v2297 = vsel %vm682, %v2295, %v2296
      %v2298 = vrot.slane %v2168, 5
      %v2299 = vrot.slane %v2298, 4
      %v2300 = vrot.slane %v1652, 5
      %v2301 = vsel %vm682, %v2299, %v2300
      %v2302 = vrot.slane %v2300, 4
      %v2303 = vrot.slane %v1704, 5
      %v2304 = vsel %vm682, %v2302, %v2303
      %v2305 = vrot.slane %v2169, 5
      %v2306 = vrot.slane %v2305, 4
      %v2307 = vrot.slane %v1654, 5
      %v2308 = vsel %vm682, %v2306, %v2307
      %v2309 = vrot.slane %v2307, 4
      %v2310 = vrot.slane %v1705, 5
      %v2311 = vsel %vm682, %v2309, %v2310
      %v2312 = vrot.slane %v2170, 5
      %v2313 = vrot.slane %v2312, 4
      %v2314 = vrot.slane %v1656, 5
      %v2315 = vsel %vm682, %v2313, %v2314
      %v2316 = vrot.slane %v2314, 4
      %v2317 = vrot.slane %v1706, 5
      %v2318 = vsel %vm682, %v2316, %v2317
      %v2319 = vrot.slane %v2171, 5
      %v2320 = vrot.slane %v2319, 4
      %v2321 = vrot.slane %v1658, 5
      %v2322 = vsel %vm682, %v2320, %v2321
      %v2323 = vrot.slane %v2321, 4
      %v2324 = vrot.slane %v1707, 5
      %v2325 = vsel %vm682, %v2323, %v2324
      %v2326 = vrot.slane %v2172, 5
      %v2327 = vrot.slane %v2326, 4
      %v2328 = vrot.slane %v1660, 5
      %v2329 = vsel %vm682, %v2327, %v2328
      %v2330 = vrot.slane %v2328, 4
      %v2331 = vrot.slane %v1708, 5
      %v2332 = vsel %vm682, %v2330, %v2331
      %v2365 = vmax.bf16 %v2125, %v2224
      %v2366 = vmax.bf16 %v2126, %v2227
      %v2367 = vmax.bf16 %v2127, %v2231
      %v2368 = vmax.bf16 %v2128, %v2234
      %v2369 = vmax.bf16 %v2129, %v2238
      %v2370 = vmax.bf16 %v2130, %v2241
      %v2371 = vmax.bf16 %v2131, %v2245
      %v2372 = vmax.bf16 %v2132, %v2248
      %v2373 = vmax.bf16 %v2133, %v2252
      %v2374 = vmax.bf16 %v2134, %v2255
      %v2375 = vmax.bf16 %v2135, %v2259
      %v2376 = vmax.bf16 %v2136, %v2262
      %v2377 = vmax.bf16 %v2137, %v2266
      %v2378 = vmax.bf16 %v2138, %v2269
      %v2379 = vmax.bf16 %v2139, %v2273
      %v2380 = vmax.bf16 %v2140, %v2276
      %v2381 = vmax.bf16 %v2141, %v2280
      %v2382 = vmax.bf16 %v2142, %v2283
      %v2383 = vmax.bf16 %v2143, %v2287
      %v2384 = vmax.bf16 %v2144, %v2290
      %v2385 = vmax.bf16 %v2145, %v2294
      %v2386 = vmax.bf16 %v2146, %v2297
      %v2387 = vmax.bf16 %v2147, %v2301
      %v2388 = vmax.bf16 %v2148, %v2304
      %v2389 = vmax.bf16 %v2149, %v2308
      %v2390 = vmax.bf16 %v2150, %v2311
      %v2391 = vmax.bf16 %v2151, %v2315
      %v2392 = vmax.bf16 %v2152, %v2318
      %v2393 = vmax.bf16 %v2153, %v2322
      %v2394 = vmax.bf16 %v2154, %v2325
      %v2395 = vmax.bf16 %v2155, %v2329
      %v2396 = vmax.bf16 %v2156, %v2332
      %vm2397 = vcmask 519168
      %2398 = vst.msk [vmem:[%s116] sm:$0xf] %vm2397, %v2365
      %2399 = vst.msk [vmem:[%s116 + $0x4] sm:$0xf] %vm2397, %v2366
      %2400 = vst.msk [vmem:[%s116 + $0x8] sm:$0xf] %vm2397, %v2367
      %2401 = vst.msk [vmem:[%s116 + $0xc] sm:$0xf] %vm2397, %v2368
      %2402 = vst.msk [vmem:[%s116 + $0x10] sm:$0xf] %vm2397, %v2369
      %2403 = vst.msk [vmem:[%s116 + $0x14] sm:$0xf] %vm2397, %v2370
      %2404 = vst.msk [vmem:[%s116 + $0x18] sm:$0xf] %vm2397, %v2371
      %2405 = vst.msk [vmem:[%s116 + $0x1c] sm:$0xf] %vm2397, %v2372
      %2406 = vst.msk [vmem:[%s116 + $0x20] sm:$0xf] %vm2397, %v2373
      %2407 = vst.msk [vmem:[%s116 + $0x24] sm:$0xf] %vm2397, %v2374
      %2408 = vst.msk [vmem:[%s116 + $0x28] sm:$0xf] %vm2397, %v2375
      %2409 = vst.msk [vmem:[%s116 + $0x2c] sm:$0xf] %vm2397, %v2376
      %2410 = vst.msk [vmem:[%s116 + $0x30] sm:$0xf] %vm2397, %v2377
      %2411 = vst.msk [vmem:[%s116 + $0x34] sm:$0xf] %vm2397, %v2378
      %2412 = vst.msk [vmem:[%s116 + $0x38] sm:$0xf] %vm2397, %v2379
      %2413 = vst.msk [vmem:[%s116 + $0x3c] sm:$0xf] %vm2397, %v2380
      %2414 = vst.msk [vmem:[%s116 + $0x40] sm:$0xf] %vm2397, %v2381
      %2415 = vst.msk [vmem:[%s116 + $0x44] sm:$0xf] %vm2397, %v2382
      %2416 = vst.msk [vmem:[%s116 + $0x48] sm:$0xf] %vm2397, %v2383
      %2417 = vst.msk [vmem:[%s116 + $0x4c] sm:$0xf] %vm2397, %v2384
      %2418 = vst.msk [vmem:[%s116 + $0x50] sm:$0xf] %vm2397, %v2385
      %2419 = vst.msk [vmem:[%s116 + $0x54] sm:$0xf] %vm2397, %v2386
      %2420 = vst.msk [vmem:[%s116 + $0x58] sm:$0xf] %vm2397, %v2387
      %2421 = vst.msk [vmem:[%s116 + $0x5c] sm:$0xf] %vm2397, %v2388
      %2422 = vst.msk [vmem:[%s116 + $0x60] sm:$0xf] %vm2397, %v2389
      %2423 = vst.msk [vmem:[%s116 + $0x64] sm:$0xf] %vm2397, %v2390
      %2424 = vst.msk [vmem:[%s116 + $0x68] sm:$0xf] %vm2397, %v2391
      %2425 = vst.msk [vmem:[%s116 + $0x6c] sm:$0xf] %vm2397, %v2392
      %2426 = vst.msk [vmem:[%s116 + $0x70] sm:$0xf] %vm2397, %v2393
      %2427 = vst.msk [vmem:[%s116 + $0x74] sm:$0xf] %vm2397, %v2394
      %2428 = vst.msk [vmem:[%s116 + $0x78] sm:$0xf] %vm2397, %v2395
      %2429 = vst.msk [vmem:[%s116 + $0x7c] sm:$0xf] %vm2397, %v2396
      %p2430 = scmp.lt.s32.totalorder %s12, 1
      %s2431 = scalar_select %p2430, %s12, 1
      %s2432 = smul.addr %s2431, 32
      %s2433 = smul.addr %s2432, 4
      %s2434 = scalar_lea.vmem %s1, %s2433
      // Predicated region
      $region25: #{resnet_forward.13} parent=23 // pred_check
        %p2435 = pneg %p56
      $region26: #{resnet_forward.13} parent=23 // pred_check_branch
        %2437 = sbr.rel (%p2435) target = $region28
      $region27: #{resnet_forward.13} parent=23 // pred_region
        _
      $region28: #{resnet_forward.13} parent=23 // pred_fallthru
        _
    $region24: #{resnet_forward.13} parent=5 // pred_fallthru
      _
    %p2438 = scmp.le.s32.totalorder 2, %s7
    // Predicated region
    $region29: #{resnet_forward.13} parent=5 // pred_check
      %p2439 = pneg %p2438
    $region30: #{resnet_forward.13} parent=5 // pred_check_branch
      %2441 = sbr.rel (%p2439) target = $region32
    $region31: #{resnet_forward.13} parent=5 // pred_region
      %s2442 = ssub.s32 %s7, 2
      // Predicated region
      $region33: #{resnet_forward.13} parent=31 // pred_check
        %p2443 = pneg %p62
      $region34: #{resnet_forward.13} parent=31 // pred_check_branch
        %2445 = sbr.rel (%p2443) target = $region36
      $region35: #{resnet_forward.13} parent=31 // pred_region
        %p2446 = scmp.lt.s32.totalorder %s13, 1
        %s2447 = scalar_select %p2446, %s13, 1
        %s2448 = smul.addr %s2447, 32
        %s2449 = smul.addr %s2448, 4
        %s2450 = scalar_lea.vmem %s1, %s2449
      $region36: #{resnet_forward.13} parent=31 // pred_fallthru
        _
    $region32: #{resnet_forward.13} parent=5 // pred_fallthru
      _
  $region6: #{resnet_forward.13} parent=0 // loop_footer
    %s11 = sadd.s32 1, %s7
  $region7: #{resnet_forward.13} parent=0 // loop_footer_branch
    %6 = sbr.rel target = $region3
  $region8: #{resnet_forward.13} parent=0 // loop_exit
    _

// kernel: resnet_forward.17
$region0: #{resnet_forward.17}
  #allocation0 [shape = 'u32[]', space=smem, size = 0x4, offset = 0x4, fixed_abs, tag = 'smem constant byte address 0x4 - core index']
  #allocation1 [shape = 'u32[144,128]{1,0:T(1,128)}', space=vmem, size = 0x12000, scoped, tag = 'internal scratch']
  %s0 = inlined_call_operand.vmem [shape: bf16[80,128], index: 0, kind: input, shape index: {}]
  %s1 = inlined_call_operand.vmem [shape: f32[1,128], index: 1, kind: input, shape index: {}]
  %s2 = inlined_call_operand.vmem [shape: f32[1,128], index: 2, kind: input, shape index: {}]
  %s3 = inlined_call_operand.vmem [shape: bf16[80,128], index: 3, kind: input, shape index: {}]
  %s4 = inlined_call_operand.vmem [shape: bf16[80,128], index: 4, kind: output, shape index: {}]
  %s5 = sld [smem:[#allocation0]]
  $region26: #{resnet_forward.17} parent=0
    _
  %s7 = ssub.s32 1, %s5
  %s8 = scalar_select 0, %s7, %s5
  // Predicated region
  $region2: #{resnet_forward.17} parent=0 // pred_check
    _
  $region3: #{resnet_forward.17} parent=0 // pred_check_branch
    %10 = sbr.rel (0) target = $region5
  $region4: #{resnet_forward.17} parent=0 // pred_region
    _
  $region5: #{resnet_forward.17} parent=0 // pred_fallthru
    _
  // Predicated region
  $region6: #{resnet_forward.17} parent=0 // pred_check
    _
  $region7: #{resnet_forward.17} parent=0 // pred_check_branch
    %12 = sbr.rel (0) target = $region9
  $region8: #{resnet_forward.17} parent=0 // pred_region
    _
  $region9: #{resnet_forward.17} parent=0 // pred_fallthru
    _
  // Predicated region
  $region10: #{resnet_forward.17} parent=0 // pred_check
    _
  $region11: #{resnet_forward.17} parent=0 // pred_check_branch
    %14 = sbr.rel (0) target = $region13
  $region12: #{resnet_forward.17} parent=0 // pred_region
    _
  $region13: #{resnet_forward.17} parent=0 // pred_fallthru
    _
  // Predicated region
  $region14: #{resnet_forward.17} parent=0 // pred_check
    _
  $region15: #{resnet_forward.17} parent=0 // pred_check_branch
    %16 = sbr.rel (0) target = $region17
  $region16: #{resnet_forward.17} parent=0 // pred_region
    _
  $region17: #{resnet_forward.17} parent=0 // pred_fallthru
    _
  %v17 = vld [vmem:[%s0] sm:$0xf]
  %v18 = vld [vmem:[%s0 + $0x4] sm:$0xf]
  %v19 = vld [vmem:[%s0 + $0x8] sm:$0xf]
  %v20 = vld [vmem:[%s0 + $0xc] sm:$0xf]
  %v21 = vld [vmem:[%s0 + $0x10] sm:$0xf]
  %v22 = vld [vmem:[%s0 + $0x14] sm:$0xf]
  %v23 = vld [vmem:[%s0 + $0x18] sm:$0xf]
  %v24 = vld [vmem:[%s0 + $0x1c] sm:$0xf]
  %v25 = vld [vmem:[%s0 + $0x20] sm:$0xf]
  %v26 = vld [vmem:[%s0 + $0x24] sm:$0xf]
  %v27 = vunpack.c.l.bf16 %v17
  %v28 = vunpack.c.l.bf16 %v18
  %v29 = vunpack.c.l.bf16 %v19
  %v30 = vunpack.c.l.bf16 %v20
  %v31 = vunpack.c.l.bf16 %v21
  %v32 = vunpack.c.l.bf16 %v22
  %v33 = vunpack.c.l.bf16 %v23
  %v34 = vunpack.c.l.bf16 %v24
  %v35 = vunpack.c.l.bf16 %v25
  %v36 = vunpack.c.l.bf16 %v26
  %v37 = vld [vmem:[%s1] sm:$0x1]
  %v39 = vlaneseq
  %v40 = vshrl.u32 %v39, 7
  %v41 = vsub.s32 0, %v40
  %v42 = vrot.slane %v37, %v41
  %v44 = vmul.f32 %v27, %v42
  %v45 = vmul.f32 %v28, %v42
  %v46 = vmul.f32 %v29, %v42
  %v47 = vmul.f32 %v30, %v42
  %v48 = vmul.f32 %v31, %v42
  %v49 = vmul.f32 %v32, %v42
  %v50 = vmul.f32 %v33, %v42
  %v51 = vmul.f32 %v34, %v42
  %v52 = vmul.f32 %v35, %v42
  %v53 = vmul.f32 %v36, %v42
  %v54 = vld [vmem:[%s2] sm:$0x1]
  %v56 = vlaneseq
  %v57 = vshrl.u32 %v56, 7
  %v58 = vsub.s32 0, %v57
  %v59 = vrot.slane %v54, %v58
  %v61 = vadd.f32 %v44, %v59
  %v62 = vadd.f32 %v45, %v59
  %v63 = vadd.f32 %v46, %v59
  %v64 = vadd.f32 %v47, %v59
  %v65 = vadd.f32 %v48, %v59
  %v66 = vadd.f32 %v49, %v59
  %v67 = vadd.f32 %v50, %v59
  %v68 = vadd.f32 %v51, %v59
  %v69 = vadd.f32 %v52, %v59
  %v70 = vadd.f32 %v53, %v59
  %v71 = vld [vmem:[%s3] sm:$0xf]
  %v72 = vld [vmem:[%s3 + $0x4] sm:$0xf]
  %v73 = vld [vmem:[%s3 + $0x8] sm:$0xf]
  %v74 = vld [vmem:[%s3 + $0xc] sm:$0xf]
  %v75 = vld [vmem:[%s3 + $0x10] sm:$0xf]
  %v76 = vld [vmem:[%s3 + $0x14] sm:$0xf]
  %v77 = vld [vmem:[%s3 + $0x18] sm:$0xf]
  %v78 = vld [vmem:[%s3 + $0x1c] sm:$0xf]
  %v79 = vld [vmem:[%s3 + $0x20] sm:$0xf]
  %v80 = vld [vmem:[%s3 + $0x24] sm:$0xf]
  %v81 = vunpack.c.l.bf16 %v71
  %v82 = vunpack.c.l.bf16 %v72
  %v83 = vunpack.c.l.bf16 %v73
  %v84 = vunpack.c.l.bf16 %v74
  %v85 = vunpack.c.l.bf16 %v75
  %v86 = vunpack.c.l.bf16 %v76
  %v87 = vunpack.c.l.bf16 %v77
  %v88 = vunpack.c.l.bf16 %v78
  %v89 = vunpack.c.l.bf16 %v79
  %v90 = vunpack.c.l.bf16 %v80
  %v91 = vadd.f32 %v61, %v81
  %v92 = vadd.f32 %v62, %v82
  %v93 = vadd.f32 %v63, %v83
  %v94 = vadd.f32 %v64, %v84
  %v95 = vadd.f32 %v65, %v85
  %v96 = vadd.f32 %v66, %v86
  %v97 = vadd.f32 %v67, %v87
  %v98 = vadd.f32 %v68, %v88
  %v99 = vadd.f32 %v69, %v89
  %v100 = vadd.f32 %v70, %v90
  %v101 = vmax.f32 %v91, 0.0
  %v102 = vmax.f32 %v92, 0.0
  %v103 = vmax.f32 %v93, 0.0
  %v104 = vmax.f32 %v94, 0.0
  %v105 = vmax.f32 %v95, 0.0
  %v106 = vmax.f32 %v96, 0.0
  %v107 = vmax.f32 %v97, 0.0
  %v108 = vmax.f32 %v98, 0.0
  %v109 = vmax.f32 %v99, 0.0
  %v110 = vmax.f32 %v100, 0.0
  %v111 = vpack.c.bf16 %v102, %v101
  %v112 = vpack.c.bf16 %v104, %v103
  %v113 = vpack.c.bf16 %v106, %v105
  %v114 = vpack.c.bf16 %v108, %v107
  %v115 = vpack.c.bf16 %v110, %v109
  %v121 = vunpack.c.l.b16 %v111
  %v122 = vunpack.c.h.b16 %v111
  %v123 = vunpack.c.l.b16 %v112
  %v124 = vunpack.c.h.b16 %v112
  %v125 = vunpack.c.l.b16 %v113
  %v126 = vunpack.c.h.b16 %v113
  %v127 = vunpack.c.l.b16 %v114
  %v128 = vunpack.c.h.b16 %v114
  %v129 = vunpack.c.l.b16 %v115
  %v130 = vunpack.c.h.b16 %v115
  %v131 = vpack.c.b16 %v121, %v121
  %v132 = vpack.c.b16 %v122, %v122
  %v133 = vpack.c.b16 %v123, %v123
  %v134 = vpack.c.b16 %v124, %v124
  %v135 = vpack.c.b16 %v125, %v125
  %v136 = vpack.c.b16 %v126, %v126
  %v137 = vpack.c.b16 %v127, %v127
  %v138 = vpack.c.b16 %v128, %v128
  %v139 = vpack.c.b16 %v129, %v129
  %v140 = vpack.c.b16 %v130, %v130
  %151 = vst [vmem:[%s4] sm:$0xf] %v131
  %152 = vst [vmem:[%s4 + $0x4] sm:$0xf] %v132
  %153 = vst [vmem:[%s4 + $0x8] sm:$0xf] %v133
  %154 = vst [vmem:[%s4 + $0xc] sm:$0xf] %v134
  %155 = vst [vmem:[%s4 + $0x10] sm:$0xf] %v135
  %156 = vst [vmem:[%s4 + $0x14] sm:$0xf] %v136
  %157 = vst [vmem:[%s4 + $0x18] sm:$0xf] %v137
  %158 = vst [vmem:[%s4 + $0x1c] sm:$0xf] %v138
  %159 = vst [vmem:[%s4 + $0x20] sm:$0xf] %v139
  %160 = vst [vmem:[%s4 + $0x24] sm:$0xf] %v140
  // Predicated region
  $region18: #{resnet_forward.17} parent=0 // pred_check
    _
  $region19: #{resnet_forward.17} parent=0 // pred_check_branch
    %162 = sbr.rel (0) target = $region21
  $region20: #{resnet_forward.17} parent=0 // pred_region
    _
  $region21: #{resnet_forward.17} parent=0 // pred_fallthru
    _
  // Predicated region
  $region22: #{resnet_forward.17} parent=0 // pred_check
    _
  $region23: #{resnet_forward.17} parent=0 // pred_check_branch
    %164 = sbr.rel (0) target = $region25
  $region24: #{resnet_forward.17} parent=0 // pred_region
    _
  $region25: #{resnet_forward.17} parent=0 // pred_fallthru
    _

// kernel: resnet_forward.14
$region0: #{resnet_forward.14}
  #allocation0 [shape = 'u32[]', space=smem, size = 0x4, offset = 0x4, fixed_abs, tag = 'smem constant byte address 0x4 - core index']
  #allocation1 [shape = 'u32[144,128]{1,0:T(1,128)}', space=vmem, size = 0x12000, scoped, tag = 'internal scratch']
  %s0 = inlined_call_operand.vmem [shape: bf16[2,110,64], index: 0, kind: input, shape index: {}]
  %s1 = inlined_call_operand.vmem [shape: bf16[9,64,64], index: 1, kind: input, shape index: {}]
  %s2 = inlined_call_operand.vmem [shape: bf16[2,80,64], index: 2, kind: output, shape index: {0}]
  %s3 = inlined_call_operand.vmem [shape: f32[1,64], index: 3, kind: output, shape index: {1}]
  %s4 = inlined_call_operand.vmem [shape: f32[1,64], index: 4, kind: output, shape index: {2}]
  %5 = xla_tuple %s2, %s3, %s4
  %s6 = sld [smem:[#allocation0]]
  $region61: #{resnet_forward.14} parent=0
    _
  %s8 = ssub.s32 1, %s6
  %s9 = scalar_select 0, %s8, %s6
  loop: start=0, step=1, limit=4
  $region2: #{resnet_forward.14} parent=0 // loop_pre_header
    _
  $region3: #{resnet_forward.14} parent=0 // loop_header
    %s11 = sphi 0, %s15
    %p12 = scmp.ge.s32.totalorder %s11, 4
    %s21 = sphi 0, %s23
    %s24 = sphi 0, %s21
    %s25 = sphi 0, %s24
    %s41 = sphi 0, %s25
    %s45 = sphi 0, %s45
    %s47 = sphi 0, %s45
    %s48 = sphi 0, %s47
    %s62 = sphi 0, %s48
    %s68 = sphi 0, %s70
    %s71 = sphi 0, %s68
    %s72 = sphi 0, %s71
    %s88 = sphi 0, %s72
    %s92 = sphi 0, %s92
    %s94 = sphi 0, %s92
    %s95 = sphi 0, %s94
    %s109 = sphi 0, %s95
    %s113 = sphi 0, %s113
    %s115 = sphi 0, %s113
    %s116 = sphi 0, %s115
    %s130 = sphi 0, %s116
  $region4: #{resnet_forward.14} parent=0 // loop_header_branch
    %14 = sbr.rel (%p12) target = $region8
  $region5: #{resnet_forward.14} parent=0 // loop_body
    %s16 = ssub.s32 %s11, 1
    %s17 = ssub.s32 %s11, 2
    %s18 = sadd.s32 %s11, 1
    %s19 = ssub.s32 %s11, %s18
    %p20 = scmp.eq.s32.totalorder %s19, 0
    %s22 = sadd.s32 %s21, 1
    %s23 = scalar_select %p20, %s21, %s22
    %p26 = pneg %p20
    %p27 = scmp.eq.s32.totalorder %s11, 1
    %p28 = por %p26, %p27
    %p29 = scmp.ne.s32.totalorder %s21, %s24
    %p30 = scmp.eq.s32.totalorder %s11, 0
    %p31 = por %p29, %p30
    %p32 = scmp.ne.s32.totalorder %s21, %s24
    %p33 = scmp.eq.s32.totalorder %s16, 1
    %p34 = por %p32, %p33
    %p35 = scmp.ne.s32.totalorder %s24, %s25
    %p36 = scmp.eq.s32.totalorder %s16, 0
    %p37 = por %p35, %p36
    %p38 = scmp.ne.s32.totalorder %s24, %s25
    %p39 = scmp.eq.s32.totalorder %s17, 1
    %p40 = por %p38, %p39
    %p42 = scmp.ne.s32.totalorder %s25, %s41
    %p43 = scmp.eq.s32.totalorder %s17, 0
    %p44 = por %p42, %p43
    %s46 = sadd.s32 %s45, 1
    %p49 = scmp.eq.s32.totalorder %s11, 1
    %p50 = scmp.ne.s32.totalorder %s45, %s47
    %p51 = scmp.eq.s32.totalorder %s11, 0
    %p52 = por %p50, %p51
    %p53 = scmp.ne.s32.totalorder %s45, %s47
    %p54 = scmp.eq.s32.totalorder %s16, 1
    %p55 = por %p53, %p54
    %p56 = scmp.ne.s32.totalorder %s47, %s48
    %p57 = scmp.eq.s32.totalorder %s16, 0
    %p58 = por %p56, %p57
    %p59 = scmp.ne.s32.totalorder %s47, %s48
    %p60 = scmp.eq.s32.totalorder %s17, 1
    %p61 = por %p59, %p60
    %p63 = scmp.ne.s32.totalorder %s48, %s62
    %p64 = scmp.eq.s32.totalorder %s17, 0
    %p65 = por %p63, %p64
    %s66 = ssub.s32 %s11, %s18
    %p67 = scmp.eq.s32.totalorder %s66, 0
    %s69 = sadd.s32 %s68, 1
    %s70 = scalar_select %p67, %s68, %s69
    %p73 = pneg %p67
    %p74 = scmp.eq.s32.totalorder %s11, 1
    %p75 = por %p73, %p74
    %p76 = scmp.ne.s32.totalorder %s68, %s71
    %p77 = scmp.eq.s32.totalorder %s11, 0
    %p78 = por %p76, %p77
    %p79 = scmp.ne.s32.totalorder %s68, %s71
    %p80 = scmp.eq.s32.totalorder %s16, 1
    %p81 = por %p79, %p80
    %p82 = scmp.ne.s32.totalorder %s71, %s72
    %p83 = scmp.eq.s32.totalorder %s16, 0
    %p84 = por %p82, %p83
    %p85 = scmp.ne.s32.totalorder %s71, %s72
    %p86 = scmp.eq.s32.totalorder %s17, 1
    %p87 = por %p85, %p86
    %p89 = scmp.ne.s32.totalorder %s72, %s88
    %p90 = scmp.eq.s32.totalorder %s17, 0
    %p91 = por %p89, %p90
    %s93 = sadd.s32 %s92, 1
    %p96 = scmp.eq.s32.totalorder %s11, 1
    %p97 = scmp.ne.s32.totalorder %s92, %s94
    %p98 = scmp.eq.s32.totalorder %s11, 0
    %p99 = por %p97, %p98
    %p100 = scmp.ne.s32.totalorder %s92, %s94
    %p101 = scmp.eq.s32.totalorder %s16, 1
    %p102 = por %p100, %p101
    %p103 = scmp.ne.s32.totalorder %s94, %s95
    %p104 = scmp.eq.s32.totalorder %s16, 0
    %p105 = por %p103, %p104
    %p106 = scmp.ne.s32.totalorder %s94, %s95
    %p107 = scmp.eq.s32.totalorder %s17, 1
    %p108 = por %p106, %p107
    %p110 = scmp.ne.s32.totalorder %s95, %s109
    %p111 = scmp.eq.s32.totalorder %s17, 0
    %p112 = por %p110, %p111
    %s114 = sadd.s32 %s113, 1
    %p117 = scmp.eq.s32.totalorder %s11, 1
    %p118 = scmp.ne.s32.totalorder %s113, %s115
    %p119 = scmp.eq.s32.totalorder %s11, 0
    %p120 = por %p118, %p119
    %p121 = scmp.ne.s32.totalorder %s113, %s115
    %p122 = scmp.eq.s32.totalorder %s16, 1
    %p123 = por %p121, %p122
    %p124 = scmp.ne.s32.totalorder %s115, %s116
    %p125 = scmp.eq.s32.totalorder %s16, 0
    %p126 = por %p124, %p125
    %p127 = scmp.ne.s32.totalorder %s115, %s116
    %p128 = scmp.eq.s32.totalorder %s17, 1
    %p129 = por %p127, %p128
    %p131 = scmp.ne.s32.totalorder %s116, %s130
    %p132 = scmp.eq.s32.totalorder %s17, 0
    %p133 = por %p131, %p132
    %p134 = scmp.le.s32.totalorder 1, %s11
    %p135 = scmp.lt.s32.totalorder %s11, 3
    %p136 = pnand %p134, %p135
    %p137 = pneg %p136
    // Predicated region
    $region9: #{resnet_forward.14} parent=5 // pred_check
      _
    $region10: #{resnet_forward.14} parent=5 // pred_check_branch
      %139 = sbr.rel (%p136) target = $region12
    $region11: #{resnet_forward.14} parent=5 // pred_region
      %s140 = ssub.s32 %s11, 1
      // Predicated region
      $region13: #{resnet_forward.14} parent=11 // pred_check
        %p141 = pneg %p58
      $region14: #{resnet_forward.14} parent=11 // pred_check_branch
        %143 = sbr.rel (%p141) target = $region16
      $region15: #{resnet_forward.14} parent=11 // pred_region
        _
      $region16: #{resnet_forward.14} parent=11 // pred_fallthru
        _
    $region12: #{resnet_forward.14} parent=5 // pred_fallthru
      _
    %p144 = scmp.lt.s32.totalorder %s11, 2
    // Predicated region
    $region17: #{resnet_forward.14} parent=5 // pred_check
      %p145 = pneg %p144
    $region18: #{resnet_forward.14} parent=5 // pred_check_branch
      %147 = sbr.rel (%p145) target = $region20
    $region19: #{resnet_forward.14} parent=5 // pred_region
      // Predicated region
      $region21: #{resnet_forward.14} parent=19 // pred_check
        %p148 = pneg %p31
      $region22: #{resnet_forward.14} parent=19 // pred_check_branch
        %150 = sbr.rel (%p148) target = $region24
      $region23: #{resnet_forward.14} parent=19 // pred_region
        %p151 = scmp.lt.s32.totalorder %s11, 1
        %s152 = scalar_select %p151, %s11, 1
        %s153 = smul.addr %s152, 14
        %s154 = smul.addr %s153, 4
        %s155 = scalar_lea.vmem %s0, %s154
      $region24: #{resnet_forward.14} parent=19 // pred_fallthru
        _
    $region20: #{resnet_forward.14} parent=5 // pred_fallthru
      _
    %p156 = scmp.le.s32.totalorder 1, %s11
    %p157 = scmp.lt.s32.totalorder %s11, 3
    %p158 = pnand %p156, %p157
    %p159 = pneg %p158
    // Predicated region
    $region25: #{resnet_forward.14} parent=5 // pred_check
      _
    $region26: #{resnet_forward.14} parent=5 // pred_check_branch
      %161 = sbr.rel (%p158) target = $region28
    $region27: #{resnet_forward.14} parent=5 // pred_region
      %s162 = ssub.s32 %s11, 1
      %p163 = scmp.lt.s32.totalorder %s16, 1
      %s164 = scalar_select %p163, %s16, 1
      %s165 = smul.addr %s164, 14
      %s166 = smul.addr %s165, 4
      %s167 = scalar_lea.vmem %s0, %s166
      %p168 = pneg %p37
      %p169 = pneg %p34
      %p170 = pneg %p58
      %p171 = pneg %p55
      %p172 = pneg %p84
      %p173 = pneg %p81
      %p174 = scmp.lt.s32.totalorder %s16, 1
      %s175 = scalar_select %p174, %s16, 1
      %s176 = smul.addr %s175, 10
      %s177 = smul.addr %s176, 4
      %s178 = scalar_lea.vmem %s2, %s177
      %p179 = pneg %p105
      %p180 = pneg %p102
      %p181 = pneg %p126
      %p182 = pneg %p123
      %p183 = scmp.lt.s32.totalorder %s16, 1
      %s184 = scalar_select %p183, %s16, 1
      %s185 = smul.addr %s184, 14
      %s186 = smul.addr %s185, 4
      %s187 = scalar_lea.vmem %s0, %s186
      %p188 = scmp.lt.s32.totalorder %s16, 1
      %s189 = scalar_select %p188, %s16, 1
      %s190 = smul.addr %s189, 10
      %s191 = smul.addr %s190, 4
      %s192 = scalar_lea.vmem %s2, %s191
      %v194 = vld [vmem:[%s187] sm:$0xf]
      %v195 = vld [vmem:[%s187 + $0x4] sm:$0xf]
      %v196 = vld [vmem:[%s187 + $0x8] sm:$0xf]
      %v197 = vld [vmem:[%s187 + $0xc] sm:$0xf]
      %v198 = vld [vmem:[%s187 + $0x10] sm:$0xf]
      %v199 = vld [vmem:[%s187 + $0x14] sm:$0xf]
      %v200 = vld [vmem:[%s187 + $0x18] sm:$0xf]
      %v201 = vld [vmem:[%s187 + $0x1c] sm:$0xf]
      %v202 = vld [vmem:[%s187 + $0x20] sm:$0xf]
      %v203 = vld [vmem:[%s187 + $0x24] sm:$0xf]
      %v204 = vld [vmem:[%s1] sm:$0xf]
      %v205 = vld [vmem:[%s1 + $0x4] sm:$0xf]
      %v206 = vld [vmem:[%s1 + $0x8] sm:$0xf]
      %v207 = vld [vmem:[%s1 + $0xc] sm:$0xf]
      %v208 = vld [vmem:[%s1 + $0x10] sm:$0xf]
      %v209 = vld [vmem:[%s1 + $0x14] sm:$0xf]
      %v210 = vld [vmem:[%s1 + $0x18] sm:$0xf]
      %v211 = vld [vmem:[%s1 + $0x1c] sm:$0xf]
      %v212 = vld [vmem:[%s187 + $0x28] sm:$0x1]
      %s213 = scalar_lea.vmem %s1, 32
      %v214 = vld [vmem:[%s213] sm:$0xf]
      %v215 = vld [vmem:[%s213 + $0x4] sm:$0xf]
      %v216 = vld [vmem:[%s213 + $0x8] sm:$0xf]
      %v217 = vld [vmem:[%s213 + $0xc] sm:$0xf]
      %v218 = vld [vmem:[%s213 + $0x10] sm:$0xf]
      %v219 = vld [vmem:[%s213 + $0x14] sm:$0xf]
      %v220 = vld [vmem:[%s213 + $0x18] sm:$0xf]
      %v221 = vld [vmem:[%s213 + $0x1c] sm:$0xf]
      %v233 = vunpack.c.l.b16 %v194
      %v234 = vunpack.c.l.b16 %v195
      %v235 = vunpack.c.l.b16 %v196
      %v236 = vunpack.c.l.b16 %v197
      %v237 = vunpack.c.l.b16 %v198
      %v238 = vunpack.c.l.b16 %v199
      %v239 = vunpack.c.l.b16 %v200
      %v240 = vunpack.c.l.b16 %v201
      %v241 = vunpack.c.l.b16 %v202
      %v242 = vunpack.c.l.b16 %v203
      %v243 = vunpack.c.l.b16 %v212
      %v244 = vpack.c.b16 %v234, %v233
      %v245 = vpack.c.b16 %v236, %v235
      %v246 = vpack.c.b16 %v238, %v237
      %v247 = vpack.c.b16 %v240, %v239
      %v248 = vpack.c.b16 %v242, %v241
      %v249 = vpack.c.b16 %v243, %v243
      %vm250 = vsmask.f32 7424
      %v252 = vshrl.u32 %v244, 16
      %v254 = vshll.u32 %v244, 16
      %v256 = vrot.slane %v254, 1
      %v257 = vor.u32 %v252, %v256
      %v259 = vshll.u32 %v245, 16
      %v261 = vrot.slane %v259, 1
      %v262 = vsel %vm250, %v257, %v261
      %v263 = vshrl.u32 %v245, 16
      %v265 = vor.u32 %v263, %v261
      %v267 = vshll.u32 %v246, 16
      %v269 = vrot.slane %v267, 1
      %v270 = vsel %vm250, %v265, %v269
      %v271 = vshrl.u32 %v246, 16
      %v273 = vor.u32 %v271, %v269
      %v275 = vshll.u32 %v247, 16
      %v277 = vrot.slane %v275, 1
      %v278 = vsel %vm250, %v273, %v277
      %v279 = vshrl.u32 %v247, 16
      %v281 = vor.u32 %v279, %v277
      %v283 = vshll.u32 %v248, 16
      %v285 = vrot.slane %v283, 1
      %v286 = vsel %vm250, %v281, %v285
      %v287 = vshrl.u32 %v248, 16
      %v289 = vor.u32 %v287, %v285
      %v291 = vshll.u32 %v249, 16
      %v293 = vrot.slane %v291, 1
      %v294 = vsel %vm250, %v289, %v293
      %v303 = vunpack.c.l.b16 %v214
      %v304 = vunpack.c.l.b16 %v215
      %v305 = vunpack.c.l.b16 %v216
      %v306 = vunpack.c.l.b16 %v217
      %v307 = vunpack.c.l.b16 %v218
      %v308 = vunpack.c.l.b16 %v219
      %v309 = vunpack.c.l.b16 %v220
      %v310 = vunpack.c.l.b16 %v221
      %v311 = vpack.c.b16 %v304, %v303
      %v312 = vpack.c.b16 %v306, %v305
      %v313 = vpack.c.b16 %v308, %v307
      %v314 = vpack.c.b16 %v310, %v309
      %vm319 = vcmask 523264
      %v321 = vsel %vm319, %v262, 0
      %v324 = vsel %vm319, %v270, 0
      %v327 = vsel %vm319, %v278, 0
      %v330 = vsel %vm319, %v286, 0
      %v333 = vsel %vm319, %v294, 0
      %335 = vmatprep.subr.bf16.mxu0 0
      %336 = vmatpush1.bf16.msra.mxu0 %v311
      %337 = vmatprep.subr.bf16.mxu0 0
      %338 = vmatpush1.bf16.msra.mxu0 %v312
      %339 = vmatprep.subr.bf16.mxu0 0
      %340 = vmatpush1.bf16.msra.mxu0 %v313
      %341 = vmatprep.subr.bf16.mxu0 0
      %342 = vmatpush1.bf16.msra.mxu0 %v314
      %343 = vmatprep.subr.bf16.mxu0 0
      %344 = vmatpush1.bf16.msra.mxu0 0
      %345 = vmatprep.subr.bf16.mxu0 0
      %346 = vmatpush1.bf16.msra.mxu0 0
      %347 = vmatprep.subr.bf16.mxu0 0
      %348 = vmatpush1.bf16.msra.mxu0 0
      %349 = vmatprep.subr.bf16.mxu0 0
      %350 = vmatpush1.bf16.msra.mxu0 0
      %351 = vmatprep.subr.bf16.mxu0 0
      %352 = vmatpush1.bf16.msra.mxu0 0
      %353 = vmatprep.subr.bf16.mxu0 0
      %354 = vmatpush1.bf16.msra.mxu0 0
      %355 = vmatprep.subr.bf16.mxu0 0
      %356 = vmatpush1.bf16.msra.mxu0 0
      %357 = vmatprep.subr.bf16.mxu0 0
      %358 = vmatpush1.bf16.msra.mxu0 0
      %359 = vmatprep.subr.bf16.mxu0 0
      %360 = vmatpush1.bf16.msra.mxu0 0
      %361 = vmatprep.subr.bf16.mxu0 0
      %362 = vmatpush1.bf16.msra.mxu0 0
      %363 = vmatprep.subr.bf16.mxu0 0
      %364 = vmatpush1.bf16.msra.mxu0 0
      %365 = vmatprep.subr.bf16.mxu0 0
      %366 = vmatpush1.bf16.msra.mxu0 0
      %367 = vmatprep.mubr.bf16.mxu0 0
      %368 = vmatmul.mubr.bf16.gmra.mrb[0].mxu0 %v321
      %v369 = vpop.f32.mrb[0].mxu0
      %v370 = vadd.f32 0.0, %v369
      %v371 = vpop.f32.mrb[0].mxu0
      %v372 = vpop.f32.mrb[0].mxu0
      %v373 = vadd.f32 0.0, %v372
      %v374 = vpop.f32.mrb[0].mxu0
      %375 = vmatprep.mubr.bf16.mxu0 0
      %376 = vmatmul.mubr.bf16.gmra.mrb[0].mxu0 %v324
      %v377 = vpop.f32.mrb[0].mxu0
      %v378 = vadd.f32 0.0, %v377
      %v379 = vpop.f32.mrb[0].mxu0
      %v380 = vpop.f32.mrb[0].mxu0
      %v381 = vadd.f32 0.0, %v380
      %v382 = vpop.f32.mrb[0].mxu0
      %383 = vmatprep.mubr.bf16.mxu0 0
      %384 = vmatmul.mubr.bf16.gmra.mrb[0].mxu0 %v327
      %v385 = vpop.f32.mrb[0].mxu0
      %v386 = vadd.f32 0.0, %v385
      %v387 = vpop.f32.mrb[0].mxu0
      %v388 = vpop.f32.mrb[0].mxu0
      %v389 = vadd.f32 0.0, %v388
      %v390 = vpop.f32.mrb[0].mxu0
      %391 = vmatprep.mubr.bf16.mxu0 0
      %392 = vmatmul.mubr.bf16.gmra.mrb[0].mxu0 %v330
      %v393 = vpop.f32.mrb[0].mxu0
      %v394 = vadd.f32 0.0, %v393
      %v395 = vpop.f32.mrb[0].mxu0
      %v396 = vpop.f32.mrb[0].mxu0
      %v397 = vadd.f32 0.0, %v396
      %v398 = vpop.f32.mrb[0].mxu0
      %399 = vmatprep.mubr.bf16.mxu0 0
      %400 = vmatmul.mubr.bf16.gmra.mrb[0].mxu0 %v333
      %v401 = vpop.f32.mrb[0].mxu0
      %v402 = vadd.f32 0.0, %v401
      %v403 = vpop.f32.mrb[0].mxu0
      %v404 = vpop.f32.mrb[0].mxu0
      %v405 = vadd.f32 0.0, %v404
      %v406 = vpop.f32.mrb[0].mxu0
      %407 = vdwg.mxu0
      %v416 = vunpack.c.l.b16 %v204
      %v417 = vunpack.c.l.b16 %v205
      %v418 = vunpack.c.l.b16 %v206
      %v419 = vunpack.c.l.b16 %v207
      %v420 = vunpack.c.l.b16 %v208
      %v421 = vunpack.c.l.b16 %v209
      %v422 = vunpack.c.l.b16 %v210
      %v423 = vunpack.c.l.b16 %v211
      %v424 = vpack.c.b16 %v417, %v416
      %v425 = vpack.c.b16 %v419, %v418
      %v426 = vpack.c.b16 %v421, %v420
      %v427 = vpack.c.b16 %v423, %v422
      %v432 = vsel %vm319, %v244, 0
      %v434 = vsel %vm319, %v245, 0
      %v436 = vsel %vm319, %v246, 0
      %v438 = vsel %vm319, %v247, 0
      %v440 = vsel %vm319, %v248, 0
      %442 = vmatprep.subr.bf16.mxu0 0
      %443 = vmatpush1.bf16.msra.mxu0 %v424
      %444 = vmatprep.subr.bf16.mxu0 0
      %445 = vmatpush1.bf16.msra.mxu0 %v425
      %446 = vmatprep.subr.bf16.mxu0 0
      %447 = vmatpush1.bf16.msra.mxu0 %v426
      %448 = vmatprep.subr.bf16.mxu0 0
      %449 = vmatpush1.bf16.msra.mxu0 %v427
      %450 = vmatprep.subr.bf16.mxu0 0
      %451 = vmatpush1.bf16.msra.mxu0 0
      %452 = vmatprep.subr.bf16.mxu0 0
      %453 = vmatpush1.bf16.msra.mxu0 0
      %454 = vmatprep.subr.bf16.mxu0 0
      %455 = vmatpush1.bf16.msra.mxu0 0
      %456 = vmatprep.subr.bf16.mxu0 0
      %457 = vmatpush1.bf16.msra.mxu0 0
      %458 = vmatprep.subr.bf16.mxu0 0
      %459 = vmatpush1.bf16.msra.mxu0 0
      %460 = vmatprep.subr.bf16.mxu0 0
      %461 = vmatpush1.bf16.msra.mxu0 0
      %462 = vmatprep.subr.bf16.mxu0 0
      %463 = vmatpush1.bf16.msra.mxu0 0
      %464 = vmatprep.subr.bf16.mxu0 0
      %465 = vmatpush1.bf16.msra.mxu0 0
      %466 = vmatprep.subr.bf16.mxu0 0
      %467 = vmatpush1.bf16.msra.mxu0 0
      %468 = vmatprep.subr.bf16.mxu0 0
      %469 = vmatpush1.bf16.msra.mxu0 0
      %470 = vmatprep.subr.bf16.mxu0 0
      %471 = vmatpush1.bf16.msra.mxu0 0
      %472 = vmatprep.subr.bf16.mxu0 0
      %473 = vmatpush1.bf16.msra.mxu0 0
      %474 = vmatprep.mubr.bf16.mxu0 0
      %475 = vmatmul.mubr.bf16.gmra.mrb[0].mxu0 %v432
      %v476 = vpop.f32.mrb[0].mxu0
      %v477 = vadd.f32 %v370, %v476
      %v478 = vpop.f32.mrb[0].mxu0
      %v479 = vpop.f32.mrb[0].mxu0
      %v480 = vadd.f32 %v373, %v479
      %v481 = vpop.f32.mrb[0].mxu0
      %482 = vmatprep.mubr.bf16.mxu0 0
      %483 = vmatmul.mubr.bf16.gmra.mrb[0].mxu0 %v434
      %v484 = vpop.f32.mrb[0].mxu0
      %v485 = vadd.f32 %v378, %v484
      %v486 = vpop.f32.mrb[0].mxu0
      %v487 = vpop.f32.mrb[0].mxu0
      %v488 = vadd.f32 %v381, %v487
      %v489 = vpop.f32.mrb[0].mxu0
      %490 = vmatprep.mubr.bf16.mxu0 0
      %491 = vmatmul.mubr.bf16.gmra.mrb[0].mxu0 %v436
      %v492 = vpop.f32.mrb[0].mxu0
      %v493 = vadd.f32 %v386, %v492
      %v494 = vpop.f32.mrb[0].mxu0
      %v495 = vpop.f32.mrb[0].mxu0
      %v496 = vadd.f32 %v389, %v495
      %v497 = vpop.f32.mrb[0].mxu0
      %498 = vmatprep.mubr.bf16.mxu0 0
      %499 = vmatmul.mubr.bf16.gmra.mrb[0].mxu0 %v438
      %v500 = vpop.f32.mrb[0].mxu0
      %v501 = vadd.f32 %v394, %v500
      %v502 = vpop.f32.mrb[0].mxu0
      %v503 = vpop.f32.mrb[0].mxu0
      %v504 = vadd.f32 %v397, %v503
      %v505 = vpop.f32.mrb[0].mxu0
      %506 = vmatprep.mubr.bf16.mxu0 0
      %507 = vmatmul.mubr.bf16.gmra.mrb[0].mxu0 %v440
      %v508 = vpop.f32.mrb[0].mxu0
      %v509 = vadd.f32 %v402, %v508
      %v510 = vpop.f32.mrb[0].mxu0
      %v511 = vpop.f32.mrb[0].mxu0
      %v512 = vadd.f32 %v405, %v511
      %v513 = vpop.f32.mrb[0].mxu0
      %514 = vdwg.mxu0
      %v515 = vld [vmem:[%s187] sm:$0xe]
      %s516 = scalar_lea.vmem %s1, 64
      %v517 = vld [vmem:[%s516] sm:$0xf]
      %v518 = vld [vmem:[%s516 + $0x4] sm:$0xf]
      %v519 = vld [vmem:[%s516 + $0x8] sm:$0xf]
      %v520 = vld [vmem:[%s516 + $0xc] sm:$0xf]
      %v521 = vld [vmem:[%s516 + $0x10] sm:$0xf]
      %v522 = vld [vmem:[%s516 + $0x14] sm:$0xf]
      %v523 = vld [vmem:[%s516 + $0x18] sm:$0xf]
      %v524 = vld [vmem:[%s516 + $0x1c] sm:$0xf]
      %v526 = vunpack.c.l.b16 %v515
      %v527 = vpack.c.b16 %v234, %v526
      %vm528 = vcmask 1046528
      %v529 = vrot.slane %v527, 1
      %v530 = vrot.slane %v245, 1
      %v531 = vsel %vm528, %v529, %v530
      %v532 = vrot.slane %v246, 1
      %v533 = vsel %vm528, %v530, %v532
      %v534 = vrot.slane %v247, 1
      %v535 = vsel %vm528, %v532, %v534
      %v536 = vrot.slane %v248, 1
      %v537 = vsel %vm528, %v534, %v536
      %v538 = vrot.slane %v249, 1
      %v539 = vsel %vm528, %v536, %v538
      %v548 = vunpack.c.l.b16 %v517
      %v549 = vunpack.c.l.b16 %v518
      %v550 = vunpack.c.l.b16 %v519
      %v551 = vunpack.c.l.b16 %v520
      %v552 = vunpack.c.l.b16 %v521
      %v553 = vunpack.c.l.b16 %v522
      %v554 = vunpack.c.l.b16 %v523
      %v555 = vunpack.c.l.b16 %v524
      %v556 = vpack.c.b16 %v549, %v548
      %v557 = vpack.c.b16 %v551, %v550
      %v558 = vpack.c.b16 %v553, %v552
      %v559 = vpack.c.b16 %v555, %v554
      %v565 = vsel %vm319, %v531, 0
      %v568 = vsel %vm319, %v533, 0
      %v571 = vsel %vm319, %v535, 0
      %v574 = vsel %vm319, %v537, 0
      %v577 = vsel %vm319, %v539, 0
      %579 = vmatprep.subr.bf16.mxu0 0
      %580 = vmatpush1.bf16.msra.mxu0 %v556
      %581 = vmatprep.subr.bf16.mxu0 0
      %582 = vmatpush1.bf16.msra.mxu0 %v557
      %583 = vmatprep.subr.bf16.mxu0 0
      %584 = vmatpush1.bf16.msra.mxu0 %v558
      %585 = vmatprep.subr.bf16.mxu0 0
      %586 = vmatpush1.bf16.msra.mxu0 %v559
      %587 = vmatprep.subr.bf16.mxu0 0
      %588 = vmatpush1.bf16.msra.mxu0 0
      %589 = vmatprep.subr.bf16.mxu0 0
      %590 = vmatpush1.bf16.msra.mxu0 0
      %591 = vmatprep.subr.bf16.mxu0 0
      %592 = vmatpush1.bf16.msra.mxu0 0
      %593 = vmatprep.subr.bf16.mxu0 0
      %594 = vmatpush1.bf16.msra.mxu0 0
      %595 = vmatprep.subr.bf16.mxu0 0
      %596 = vmatpush1.bf16.msra.mxu0 0
      %597 = vmatprep.subr.bf16.mxu0 0
      %598 = vmatpush1.bf16.msra.mxu0 0
      %599 = vmatprep.subr.bf16.mxu0 0
      %600 = vmatpush1.bf16.msra.mxu0 0
      %601 = vmatprep.subr.bf16.mxu0 0
      %602 = vmatpush1.bf16.msra.mxu0 0
      %603 = vmatprep.subr.bf16.mxu0 0
      %604 = vmatpush1.bf16.msra.mxu0 0
      %605 = vmatprep.subr.bf16.mxu0 0
      %606 = vmatpush1.bf16.msra.mxu0 0
      %607 = vmatprep.subr.bf16.mxu0 0
      %608 = vmatpush1.bf16.msra.mxu0 0
      %609 = vmatprep.subr.bf16.mxu0 0
      %610 = vmatpush1.bf16.msra.mxu0 0
      %611 = vmatprep.mubr.bf16.mxu0 0
      %612 = vmatmul.mubr.bf16.gmra.mrb[0].mxu0 %v565
      %v613 = vpop.f32.mrb[0].mxu0
      %v614 = vadd.f32 0.0, %v613
      %v615 = vpop.f32.mrb[0].mxu0
      %v616 = vpop.f32.mrb[0].mxu0
      %v617 = vadd.f32 0.0, %v616
      %v618 = vpop.f32.mrb[0].mxu0
      %619 = vmatprep.mubr.bf16.mxu0 0
      %620 = vmatmul.mubr.bf16.gmra.mrb[0].mxu0 %v568
      %v621 = vpop.f32.mrb[0].mxu0
      %v622 = vadd.f32 0.0, %v621
      %v623 = vpop.f32.mrb[0].mxu0
      %v624 = vpop.f32.mrb[0].mxu0
      %v625 = vadd.f32 0.0, %v624
      %v626 = vpop.f32.mrb[0].mxu0
      %627 = vmatprep.mubr.bf16.mxu0 0
      %628 = vmatmul.mubr.bf16.gmra.mrb[0].mxu0 %v571
      %v629 = vpop.f32.mrb[0].mxu0
      %v630 = vadd.f32 0.0, %v629
      %v631 = vpop.f32.mrb[0].mxu0
      %v632 = vpop.f32.mrb[0].mxu0
      %v633 = vadd.f32 0.0, %v632
      %v634 = vpop.f32.mrb[0].mxu0
      %635 = vmatprep.mubr.bf16.mxu0 0
      %636 = vmatmul.mubr.bf16.gmra.mrb[0].mxu0 %v574
      %v637 = vpop.f32.mrb[0].mxu0
      %v638 = vadd.f32 0.0, %v637
      %v639 = vpop.f32.mrb[0].mxu0
      %v640 = vpop.f32.mrb[0].mxu0
      %v641 = vadd.f32 0.0, %v640
      %v642 = vpop.f32.mrb[0].mxu0
      %643 = vmatprep.mubr.bf16.mxu0 0
      %644 = vmatmul.mubr.bf16.gmra.mrb[0].mxu0 %v577
      %v645 = vpop.f32.mrb[0].mxu0
      %v646 = vadd.f32 0.0, %v645
      %v647 = vpop.f32.mrb[0].mxu0
      %v648 = vpop.f32.mrb[0].mxu0
      %v649 = vadd.f32 0.0, %v648
      %v650 = vpop.f32.mrb[0].mxu0
      %651 = vdwg.mxu0
      %v652 = vadd.f32 %v477, %v614
      %v653 = vadd.f32 %v480, %v617
      %v654 = vadd.f32 %v485, %v622
      %v655 = vadd.f32 %v488, %v625
      %v656 = vadd.f32 %v493, %v630
      %v657 = vadd.f32 %v496, %v633
      %v658 = vadd.f32 %v501, %v638
      %v659 = vadd.f32 %v504, %v641
      %v660 = vadd.f32 %v509, %v646
      %v661 = vadd.f32 %v512, %v649
      %v662 = vld [vmem:[%s187 + $0x4] sm:$0xe]
      %v663 = vld [vmem:[%s187 + $0x8] sm:$0xf]
      %v664 = vld [vmem:[%s187 + $0xc] sm:$0xf]
      %v665 = vld [vmem:[%s187 + $0x10] sm:$0xf]
      %v666 = vld [vmem:[%s187 + $0x14] sm:$0xf]
      %v667 = vld [vmem:[%s187 + $0x18] sm:$0xf]
      %v668 = vld [vmem:[%s187 + $0x1c] sm:$0xf]
      %v669 = vld [vmem:[%s187 + $0x20] sm:$0xf]
      %v670 = vld [vmem:[%s187 + $0x24] sm:$0xf]
      %v671 = vld [vmem:[%s187 + $0x28] sm:$0xf]
      %v672 = vld [vmem:[%s187 + $0x2c] sm:$0x1]
      %s673 = scalar_lea.vmem %s1, 96
      %v674 = vld [vmem:[%s673] sm:$0xf]
      %v675 = vld [vmem:[%s673 + $0x4] sm:$0xf]
      %v676 = vld [vmem:[%s673 + $0x8] sm:$0xf]
      %v677 = vld [vmem:[%s673 + $0xc] sm:$0xf]
      %v678 = vld [vmem:[%s673 + $0x10] sm:$0xf]
      %v679 = vld [vmem:[%s673 + $0x14] sm:$0xf]
      %v680 = vld [vmem:[%s673 + $0x18] sm:$0xf]
      %v681 = vld [vmem:[%s673 + $0x1c] sm:$0xf]
      %v693 = vunpack.c.l.b16 %v662
      %v694 = vunpack.c.l.b16 %v663
      %v695 = vunpack.c.l.b16 %v664
      %v696 = vunpack.c.l.b16 %v665
      %v697 = vunpack.c.l.b16 %v666
      %v698 = vunpack.c.l.b16 %v667
      %v699 = vunpack.c.l.b16 %v668
      %v700 = vunpack.c.l.b16 %v669
      %v701 = vunpack.c.l.b16 %v670
      %v702 = vunpack.c.l.b16 %v671
      %v703 = vunpack.c.l.b16 %v672
      %v704 = vpack.c.b16 %v694, %v693
      %v705 = vpack.c.b16 %v696, %v695
      %v706 = vpack.c.b16 %v698, %v697
      %v707 = vpack.c.b16 %v700, %v699
      %v708 = vpack.c.b16 %v702, %v701
      %v709 = vpack.c.b16 %v703, %v703
      %v710 = vrot.slane %v704, 1
      %v711 = vrot.slane %v705, 1
      %v712 = vsel %vm528, %v710, %v711
      %v713 = vrot.slane %v706, 1
      %v714 = vsel %vm528, %v711, %v713
      %v715 = vrot.slane %v707, 1
      %v716 = vsel %vm528, %v713, %v715
      %v717 = vrot.slane %v708, 1
      %v718 = vsel %vm528, %v715, %v717
      %v719 = vrot.slane %v709, 1
      %v720 = vsel %vm528, %v717, %v719
      %v729 = vunpack.c.l.b16 %v674
      %v730 = vunpack.c.l.b16 %v675
      %v731 = vunpack.c.l.b16 %v676
      %v732 = vunpack.c.l.b16 %v677
      %v733 = vunpack.c.l.b16 %v678
      %v734 = vunpack.c.l.b16 %v679
      %v735 = vunpack.c.l.b16 %v680
      %v736 = vunpack.c.l.b16 %v681
      %v737 = vpack.c.b16 %v730, %v729
      %v738 = vpack.c.b16 %v732, %v731
      %v739 = vpack.c.b16 %v734, %v733
      %v740 = vpack.c.b16 %v736, %v735
      %v746 = vsel %vm319, %v712, 0
      %v749 = vsel %vm319, %v714, 0
      %v752 = vsel %vm319, %v716, 0
      %v755 = vsel %vm319, %v718, 0
      %v758 = vsel %vm319, %v720, 0
      %760 = vmatprep.subr.bf16.mxu0 0
      %761 = vmatpush1.bf16.msra.mxu0 %v737
      %762 = vmatprep.subr.bf16.mxu0 0
      %763 = vmatpush1.bf16.msra.mxu0 %v738
      %764 = vmatprep.subr.bf16.mxu0 0
      %765 = vmatpush1.bf16.msra.mxu0 %v739
      %766 = vmatprep.subr.bf16.mxu0 0
      %767 = vmatpush1.bf16.msra.mxu0 %v740
      %768 = vmatprep.subr.bf16.mxu0 0
      %769 = vmatpush1.bf16.msra.mxu0 0
      %770 = vmatprep.subr.bf16.mxu0 0
      %771 = vmatpush1.bf16.msra.mxu0 0
      %772 = vmatprep.subr.bf16.mxu0 0
      %773 = vmatpush1.bf16.msra.mxu0 0
      %774 = vmatprep.subr.bf16.mxu0 0
      %775 = vmatpush1.bf16.msra.mxu0 0
      %776 = vmatprep.subr.bf16.mxu0 0
      %777 = vmatpush1.bf16.msra.mxu0 0
      %778 = vmatprep.subr.bf16.mxu0 0
      %779 = vmatpush1.bf16.msra.mxu0 0
      %780 = vmatprep.subr.bf16.mxu0 0
      %781 = vmatpush1.bf16.msra.mxu0 0
      %782 = vmatprep.subr.bf16.mxu0 0
      %783 = vmatpush1.bf16.msra.mxu0 0
      %784 = vmatprep.subr.bf16.mxu0 0
      %785 = vmatpush1.bf16.msra.mxu0 0
      %786 = vmatprep.subr.bf16.mxu0 0
      %787 = vmatpush1.bf16.msra.mxu0 0
      %788 = vmatprep.subr.bf16.mxu0 0
      %789 = vmatpush1.bf16.msra.mxu0 0
      %790 = vmatprep.subr.bf16.mxu0 0
      %791 = vmatpush1.bf16.msra.mxu0 0
      %792 = vmatprep.mubr.bf16.mxu0 0
      %793 = vmatmul.mubr.bf16.gmra.mrb[0].mxu0 %v746
      %v794 = vpop.f32.mrb[0].mxu0
      %v795 = vadd.f32 0.0, %v794
      %v796 = vpop.f32.mrb[0].mxu0
      %v797 = vpop.f32.mrb[0].mxu0
      %v798 = vadd.f32 0.0, %v797
      %v799 = vpop.f32.mrb[0].mxu0
      %800 = vmatprep.mubr.bf16.mxu0 0
      %801 = vmatmul.mubr.bf16.gmra.mrb[0].mxu0 %v749
      %v802 = vpop.f32.mrb[0].mxu0
      %v803 = vadd.f32 0.0, %v802
      %v804 = vpop.f32.mrb[0].mxu0
      %v805 = vpop.f32.mrb[0].mxu0
      %v806 = vadd.f32 0.0, %v805
      %v807 = vpop.f32.mrb[0].mxu0
      %808 = vmatprep.mubr.bf16.mxu0 0
      %809 = vmatmul.mubr.bf16.gmra.mrb[0].mxu0 %v752
      %v810 = vpop.f32.mrb[0].mxu0
      %v811 = vadd.f32 0.0, %v810
      %v812 = vpop.f32.mrb[0].mxu0
      %v813 = vpop.f32.mrb[0].mxu0
      %v814 = vadd.f32 0.0, %v813
      %v815 = vpop.f32.mrb[0].mxu0
      %816 = vmatprep.mubr.bf16.mxu0 0
      %817 = vmatmul.mubr.bf16.gmra.mrb[0].mxu0 %v755
      %v818 = vpop.f32.mrb[0].mxu0
      %v819 = vadd.f32 0.0, %v818
      %v820 = vpop.f32.mrb[0].mxu0
      %v821 = vpop.f32.mrb[0].mxu0
      %v822 = vadd.f32 0.0, %v821
      %v823 = vpop.f32.mrb[0].mxu0
      %824 = vmatprep.mubr.bf16.mxu0 0
      %825 = vmatmul.mubr.bf16.gmra.mrb[0].mxu0 %v758
      %v826 = vpop.f32.mrb[0].mxu0
      %v827 = vadd.f32 0.0, %v826
      %v828 = vpop.f32.mrb[0].mxu0
      %v829 = vpop.f32.mrb[0].mxu0
      %v830 = vadd.f32 0.0, %v829
      %v831 = vpop.f32.mrb[0].mxu0
      %832 = vdwg.mxu0
      %v833 = vadd.f32 %v652, %v795
      %v834 = vadd.f32 %v653, %v798
      %v835 = vadd.f32 %v654, %v803
      %v836 = vadd.f32 %v655, %v806
      %v837 = vadd.f32 %v656, %v811
      %v838 = vadd.f32 %v657, %v814
      %v839 = vadd.f32 %v658, %v819
      %v840 = vadd.f32 %v659, %v822
      %v841 = vadd.f32 %v660, %v827
      %v842 = vadd.f32 %v661, %v830
      %v843 = vld [vmem:[%s187 + $0x2c] sm:$0x3]
      %s844 = scalar_lea.vmem %s1, 128
      %v845 = vld [vmem:[%s844] sm:$0xf]
      %v846 = vld [vmem:[%s844 + $0x4] sm:$0xf]
      %v847 = vld [vmem:[%s844 + $0x8] sm:$0xf]
      %v848 = vld [vmem:[%s844 + $0xc] sm:$0xf]
      %v849 = vld [vmem:[%s844 + $0x10] sm:$0xf]
      %v850 = vld [vmem:[%s844 + $0x14] sm:$0xf]
      %v851 = vld [vmem:[%s844 + $0x18] sm:$0xf]
      %v852 = vld [vmem:[%s844 + $0x1c] sm:$0xf]
      %v854 = vunpack.c.l.b16 %v843
      %v855 = vpack.c.b16 %v854, %v854
      %vm856 = vsmask.f32 6400
      %v858 = vshrl.u32 %v704, 16
      %v860 = vrot.slane %v858, 1
      %v861 = vshll.u32 %v704, 16
      %v863 = vrot.slane %v861, 2
      %v864 = vor.u32 %v860, %v863
      %v866 = vshrl.u32 %v705, 16
      %v868 = vrot.slane %v866, 1
      %v869 = vshll.u32 %v705, 16
      %v871 = vrot.slane %v869, 2
      %v872 = vor.u32 %v868, %v871
      %v873 = vsel %vm856, %v864, %v872
      %v875 = vshrl.u32 %v706, 16
      %v877 = vrot.slane %v875, 1
      %v878 = vshll.u32 %v706, 16
      %v880 = vrot.slane %v878, 2
      %v881 = vor.u32 %v877, %v880
      %v882 = vsel %vm856, %v872, %v881
      %v884 = vshrl.u32 %v707, 16
      %v886 = vrot.slane %v884, 1
      %v887 = vshll.u32 %v707, 16
      %v889 = vrot.slane %v887, 2
      %v890 = vor.u32 %v886, %v889
      %v891 = vsel %vm856, %v881, %v890
      %v893 = vshrl.u32 %v708, 16
      %v895 = vrot.slane %v893, 1
      %v896 = vshll.u32 %v708, 16
      %v898 = vrot.slane %v896, 2
      %v899 = vor.u32 %v895, %v898
      %v900 = vsel %vm856, %v890, %v899
      %v902 = vshrl.u32 %v855, 16
      %v904 = vrot.slane %v902, 1
      %v905 = vshll.u32 %v855, 16
      %v907 = vrot.slane %v905, 2
      %v908 = vor.u32 %v904, %v907
      %v909 = vsel %vm856, %v899, %v908
      %v918 = vunpack.c.l.b16 %v845
      %v919 = vunpack.c.l.b16 %v846
      %v920 = vunpack.c.l.b16 %v847
      %v921 = vunpack.c.l.b16 %v848
      %v922 = vunpack.c.l.b16 %v849
      %v923 = vunpack.c.l.b16 %v850
      %v924 = vunpack.c.l.b16 %v851
      %v925 = vunpack.c.l.b16 %v852
      %v926 = vpack.c.b16 %v919, %v918
      %v927 = vpack.c.b16 %v921, %v920
      %v928 = vpack.c.b16 %v923, %v922
      %v929 = vpack.c.b16 %v925, %v924
      %v935 = vsel %vm319, %v873, 0
      %v938 = vsel %vm319, %v882, 0
      %v941 = vsel %vm319, %v891, 0
      %v944 = vsel %vm319, %v900, 0
      %v947 = vsel %vm319, %v909, 0
      %949 = vmatprep.subr.bf16.mxu0 0
      %950 = vmatpush1.bf16.msra.mxu0 %v926
      %951 = vmatprep.subr.bf16.mxu0 0
      %952 = vmatpush1.bf16.msra.mxu0 %v927
      %953 = vmatprep.subr.bf16.mxu0 0
      %954 = vmatpush1.bf16.msra.mxu0 %v928
      %955 = vmatprep.subr.bf16.mxu0 0
      %956 = vmatpush1.bf16.msra.mxu0 %v929
      %957 = vmatprep.subr.bf16.mxu0 0
      %958 = vmatpush1.bf16.msra.mxu0 0
      %959 = vmatprep.subr.bf16.mxu0 0
      %960 = vmatpush1.bf16.msra.mxu0 0
      %961 = vmatprep.subr.bf16.mxu0 0
      %962 = vmatpush1.bf16.msra.mxu0 0
      %963 = vmatprep.subr.bf16.mxu0 0
      %964 = vmatpush1.bf16.msra.mxu0 0
      %965 = vmatprep.subr.bf16.mxu0 0
      %966 = vmatpush1.bf16.msra.mxu0 0
      %967 = vmatprep.subr.bf16.mxu0 0
      %968 = vmatpush1.bf16.msra.mxu0 0
      %969 = vmatprep.subr.bf16.mxu0 0
      %970 = vmatpush1.bf16.msra.mxu0 0
      %971 = vmatprep.subr.bf16.mxu0 0
      %972 = vmatpush1.bf16.msra.mxu0 0
      %973 = vmatprep.subr.bf16.mxu0 0
      %974 = vmatpush1.bf16.msra.mxu0 0
      %975 = vmatprep.subr.bf16.mxu0 0
      %976 = vmatpush1.bf16.msra.mxu0 0
      %977 = vmatprep.subr.bf16.mxu0 0
      %978 = vmatpush1.bf16.msra.mxu0 0
      %979 = vmatprep.subr.bf16.mxu0 0
      %980 = vmatpush1.bf16.msra.mxu0 0
      %981 = vmatprep.mubr.bf16.mxu0 0
      %982 = vmatmul.mubr.bf16.gmra.mrb[0].mxu0 %v935
      %v983 = vpop.f32.mrb[0].mxu0
      %v984 = vadd.f32 0.0, %v983
      %v985 = vpop.f32.mrb[0].mxu0
      %v986 = vpop.f32.mrb[0].mxu0
      %v987 = vadd.f32 0.0, %v986
      %v988 = vpop.f32.mrb[0].mxu0
      %989 = vmatprep.mubr.bf16.mxu0 0
      %990 = vmatmul.mubr.bf16.gmra.mrb[0].mxu0 %v938
      %v991 = vpop.f32.mrb[0].mxu0
      %v992 = vadd.f32 0.0, %v991
      %v993 = vpop.f32.mrb[0].mxu0
      %v994 = vpop.f32.mrb[0].mxu0
      %v995 = vadd.f32 0.0, %v994
      %v996 = vpop.f32.mrb[0].mxu0
      %997 = vmatprep.mubr.bf16.mxu0 0
      %998 = vmatmul.mubr.bf16.gmra.mrb[0].mxu0 %v941
      %v999 = vpop.f32.mrb[0].mxu0
      %v1000 = vadd.f32 0.0, %v999
      %v1001 = vpop.f32.mrb[0].mxu0
      %v1002 = vpop.f32.mrb[0].mxu0
      %v1003 = vadd.f32 0.0, %v1002
      %v1004 = vpop.f32.mrb[0].mxu0
      %1005 = vmatprep.mubr.bf16.mxu0 0
      %1006 = vmatmul.mubr.bf16.gmra.mrb[0].mxu0 %v944
      %v1007 = vpop.f32.mrb[0].mxu0
      %v1008 = vadd.f32 0.0, %v1007
      %v1009 = vpop.f32.mrb[0].mxu0
      %v1010 = vpop.f32.mrb[0].mxu0
      %v1011 = vadd.f32 0.0, %v1010
      %v1012 = vpop.f32.mrb[0].mxu0
      %1013 = vmatprep.mubr.bf16.mxu0 0
      %1014 = vmatmul.mubr.bf16.gmra.mrb[0].mxu0 %v947
      %v1015 = vpop.f32.mrb[0].mxu0
      %v1016 = vadd.f32 0.0, %v1015
      %v1017 = vpop.f32.mrb[0].mxu0
      %v1018 = vpop.f32.mrb[0].mxu0
      %v1019 = vadd.f32 0.0, %v1018
      %v1020 = vpop.f32.mrb[0].mxu0
      %1021 = vdwg.mxu0
      %v1022 = vadd.f32 %v833, %v984
      %v1023 = vadd.f32 %v834, %v987
      %v1024 = vadd.f32 %v835, %v992
      %v1025 = vadd.f32 %v836, %v995
      %v1026 = vadd.f32 %v837, %v1000
      %v1027 = vadd.f32 %v838, %v1003
      %v1028 = vadd.f32 %v839, %v1008
      %v1029 = vadd.f32 %v840, %v1011
      %v1030 = vadd.f32 %v841, %v1016
      %v1031 = vadd.f32 %v842, %v1019
      %v1032 = vld [vmem:[%s187 + $0x4] sm:$0xc]
      %s1033 = scalar_lea.vmem %s1, 160
      %v1034 = vld [vmem:[%s1033] sm:$0xf]
      %v1035 = vld [vmem:[%s1033 + $0x4] sm:$0xf]
      %v1036 = vld [vmem:[%s1033 + $0x8] sm:$0xf]
      %v1037 = vld [vmem:[%s1033 + $0xc] sm:$0xf]
      %v1038 = vld [vmem:[%s1033 + $0x10] sm:$0xf]
      %v1039 = vld [vmem:[%s1033 + $0x14] sm:$0xf]
      %v1040 = vld [vmem:[%s1033 + $0x18] sm:$0xf]
      %v1041 = vld [vmem:[%s1033 + $0x1c] sm:$0xf]
      %v1043 = vunpack.c.l.b16 %v1032
      %v1044 = vpack.c.b16 %v694, %v1043
      %vm1045 = vcmask 1045504
      %v1046 = vrot.slane %v1044, 2
      %v1047 = vrot.slane %v705, 2
      %v1048 = vsel %vm1045, %v1046, %v1047
      %v1049 = vrot.slane %v706, 2
      %v1050 = vsel %vm1045, %v1047, %v1049
      %v1051 = vrot.slane %v707, 2
      %v1052 = vsel %vm1045, %v1049, %v1051
      %v1053 = vrot.slane %v708, 2
      %v1054 = vsel %vm1045, %v1051, %v1053
      %v1055 = vrot.slane %v855, 2
      %v1056 = vsel %vm1045, %v1053, %v1055
      %v1065 = vunpack.c.l.b16 %v1034
      %v1066 = vunpack.c.l.b16 %v1035
      %v1067 = vunpack.c.l.b16 %v1036
      %v1068 = vunpack.c.l.b16 %v1037
      %v1069 = vunpack.c.l.b16 %v1038
      %v1070 = vunpack.c.l.b16 %v1039
      %v1071 = vunpack.c.l.b16 %v1040
      %v1072 = vunpack.c.l.b16 %v1041
      %v1073 = vpack.c.b16 %v1066, %v1065
      %v1074 = vpack.c.b16 %v1068, %v1067
      %v1075 = vpack.c.b16 %v1070, %v1069
      %v1076 = vpack.c.b16 %v1072, %v1071
      %v1082 = vsel %vm319, %v1048, 0
      %v1085 = vsel %vm319, %v1050, 0
      %v1088 = vsel %vm319, %v1052, 0
      %v1091 = vsel %vm319, %v1054, 0
      %v1094 = vsel %vm319, %v1056, 0
      %1096 = vmatprep.subr.bf16.mxu0 0
      %1097 = vmatpush1.bf16.msra.mxu0 %v1073
      %1098 = vmatprep.subr.bf16.mxu0 0
      %1099 = vmatpush1.bf16.msra.mxu0 %v1074
      %1100 = vmatprep.subr.bf16.mxu0 0
      %1101 = vmatpush1.bf16.msra.mxu0 %v1075
      %1102 = vmatprep.subr.bf16.mxu0 0
      %1103 = vmatpush1.bf16.msra.mxu0 %v1076
      %1104 = vmatprep.subr.bf16.mxu0 0
      %1105 = vmatpush1.bf16.msra.mxu0 0
      %1106 = vmatprep.subr.bf16.mxu0 0
      %1107 = vmatpush1.bf16.msra.mxu0 0
      %1108 = vmatprep.subr.bf16.mxu0 0
      %1109 = vmatpush1.bf16.msra.mxu0 0
      %1110 = vmatprep.subr.bf16.mxu0 0
      %1111 = vmatpush1.bf16.msra.mxu0 0
      %1112 = vmatprep.subr.bf16.mxu0 0
      %1113 = vmatpush1.bf16.msra.mxu0 0
      %1114 = vmatprep.subr.bf16.mxu0 0
      %1115 = vmatpush1.bf16.msra.mxu0 0
      %1116 = vmatprep.subr.bf16.mxu0 0
      %1117 = vmatpush1.bf16.msra.mxu0 0
      %1118 = vmatprep.subr.bf16.mxu0 0
      %1119 = vmatpush1.bf16.msra.mxu0 0
      %1120 = vmatprep.subr.bf16.mxu0 0
      %1121 = vmatpush1.bf16.msra.mxu0 0
      %1122 = vmatprep.subr.bf16.mxu0 0
      %1123 = vmatpush1.bf16.msra.mxu0 0
      %1124 = vmatprep.subr.bf16.mxu0 0
      %1125 = vmatpush1.bf16.msra.mxu0 0
      %1126 = vmatprep.subr.bf16.mxu0 0
      %1127 = vmatpush1.bf16.msra.mxu0 0
      %1128 = vmatprep.mubr.bf16.mxu0 0
      %1129 = vmatmul.mubr.bf16.gmra.mrb[0].mxu0 %v1082
      %v1130 = vpop.f32.mrb[0].mxu0
      %v1131 = vadd.f32 0.0, %v1130
      %v1132 = vpop.f32.mrb[0].mxu0
      %v1133 = vpop.f32.mrb[0].mxu0
      %v1134 = vadd.f32 0.0, %v1133
      %v1135 = vpop.f32.mrb[0].mxu0
      %1136 = vmatprep.mubr.bf16.mxu0 0
      %1137 = vmatmul.mubr.bf16.gmra.mrb[0].mxu0 %v1085
      %v1138 = vpop.f32.mrb[0].mxu0
      %v1139 = vadd.f32 0.0, %v1138
      %v1140 = vpop.f32.mrb[0].mxu0
      %v1141 = vpop.f32.mrb[0].mxu0
      %v1142 = vadd.f32 0.0, %v1141
      %v1143 = vpop.f32.mrb[0].mxu0
      %1144 = vmatprep.mubr.bf16.mxu0 0
      %1145 = vmatmul.mubr.bf16.gmra.mrb[0].mxu0 %v1088
      %v1146 = vpop.f32.mrb[0].mxu0
      %v1147 = vadd.f32 0.0, %v1146
      %v1148 = vpop.f32.mrb[0].mxu0
      %v1149 = vpop.f32.mrb[0].mxu0
      %v1150 = vadd.f32 0.0, %v1149
      %v1151 = vpop.f32.mrb[0].mxu0
      %1152 = vmatprep.mubr.bf16.mxu0 0
      %1153 = vmatmul.mubr.bf16.gmra.mrb[0].mxu0 %v1091
      %v1154 = vpop.f32.mrb[0].mxu0
      %v1155 = vadd.f32 0.0, %v1154
      %v1156 = vpop.f32.mrb[0].mxu0
      %v1157 = vpop.f32.mrb[0].mxu0
      %v1158 = vadd.f32 0.0, %v1157
      %v1159 = vpop.f32.mrb[0].mxu0
      %1160 = vmatprep.mubr.bf16.mxu0 0
      %1161 = vmatmul.mubr.bf16.gmra.mrb[0].mxu0 %v1094
      %v1162 = vpop.f32.mrb[0].mxu0
      %v1163 = vadd.f32 0.0, %v1162
      %v1164 = vpop.f32.mrb[0].mxu0
      %v1165 = vpop.f32.mrb[0].mxu0
      %v1166 = vadd.f32 0.0, %v1165
      %v1167 = vpop.f32.mrb[0].mxu0
      %1168 = vdwg.mxu0
      %v1169 = vadd.f32 %v1022, %v1131
      %v1170 = vadd.f32 %v1023, %v1134
      %v1171 = vadd.f32 %v1024, %v1139
      %v1172 = vadd.f32 %v1025, %v1142
      %v1173 = vadd.f32 %v1026, %v1147
      %v1174 = vadd.f32 %v1027, %v1150
      %v1175 = vadd.f32 %v1028, %v1155
      %v1176 = vadd.f32 %v1029, %v1158
      %v1177 = vadd.f32 %v1030, %v1163
      %v1178 = vadd.f32 %v1031, %v1166
      %v1179 = vld [vmem:[%s187 + $0x8] sm:$0xc]
      %v1180 = vld [vmem:[%s187 + $0xc] sm:$0xf]
      %v1181 = vld [vmem:[%s187 + $0x10] sm:$0xf]
      %v1182 = vld [vmem:[%s187 + $0x14] sm:$0xf]
      %v1183 = vld [vmem:[%s187 + $0x18] sm:$0xf]
      %v1184 = vld [vmem:[%s187 + $0x1c] sm:$0xf]
      %v1185 = vld [vmem:[%s187 + $0x20] sm:$0xf]
      %v1186 = vld [vmem:[%s187 + $0x24] sm:$0xf]
      %v1187 = vld [vmem:[%s187 + $0x28] sm:$0xf]
      %v1188 = vld [vmem:[%s187 + $0x2c] sm:$0xf]
      %v1189 = vld [vmem:[%s187 + $0x30] sm:$0x3]
      %s1190 = scalar_lea.vmem %s1, 192
      %v1191 = vld [vmem:[%s1190] sm:$0xf]
      %v1192 = vld [vmem:[%s1190 + $0x4] sm:$0xf]
      %v1193 = vld [vmem:[%s1190 + $0x8] sm:$0xf]
      %v1194 = vld [vmem:[%s1190 + $0xc] sm:$0xf]
      %v1195 = vld [vmem:[%s1190 + $0x10] sm:$0xf]
      %v1196 = vld [vmem:[%s1190 + $0x14] sm:$0xf]
      %v1197 = vld [vmem:[%s1190 + $0x18] sm:$0xf]
      %v1198 = vld [vmem:[%s1190 + $0x1c] sm:$0xf]
      %v1210 = vunpack.c.l.b16 %v1179
      %v1211 = vunpack.c.l.b16 %v1180
      %v1212 = vunpack.c.l.b16 %v1181
      %v1213 = vunpack.c.l.b16 %v1182
      %v1214 = vunpack.c.l.b16 %v1183
      %v1215 = vunpack.c.l.b16 %v1184
      %v1216 = vunpack.c.l.b16 %v1185
      %v1217 = vunpack.c.l.b16 %v1186
      %v1218 = vunpack.c.l.b16 %v1187
      %v1219 = vunpack.c.l.b16 %v1188
      %v1220 = vunpack.c.l.b16 %v1189
      %v1221 = vpack.c.b16 %v1211, %v1210
      %v1222 = vpack.c.b16 %v1213, %v1212
      %v1223 = vpack.c.b16 %v1215, %v1214
      %v1224 = vpack.c.b16 %v1217, %v1216
      %v1225 = vpack.c.b16 %v1219, %v1218
      %v1226 = vpack.c.b16 %v1220, %v1220
      %v1227 = vrot.slane %v1221, 2
      %v1228 = vrot.slane %v1222, 2
      %v1229 = vsel %vm1045, %v1227, %v1228
      %v1230 = vrot.slane %v1223, 2
      %v1231 = vsel %vm1045, %v1228, %v1230
      %v1232 = vrot.slane %v1224, 2
      %v1233 = vsel %vm1045, %v1230, %v1232
      %v1234 = vrot.slane %v1225, 2
      %v1235 = vsel %vm1045, %v1232, %v1234
      %v1236 = vrot.slane %v1226, 2
      %v1237 = vsel %vm1045, %v1234, %v1236
      %v1246 = vunpack.c.l.b16 %v1191
      %v1247 = vunpack.c.l.b16 %v1192
      %v1248 = vunpack.c.l.b16 %v1193
      %v1249 = vunpack.c.l.b16 %v1194
      %v1250 = vunpack.c.l.b16 %v1195
      %v1251 = vunpack.c.l.b16 %v1196
      %v1252 = vunpack.c.l.b16 %v1197
      %v1253 = vunpack.c.l.b16 %v1198
      %v1254 = vpack.c.b16 %v1247, %v1246
      %v1255 = vpack.c.b16 %v1249, %v1248
      %v1256 = vpack.c.b16 %v1251, %v1250
      %v1257 = vpack.c.b16 %v1253, %v1252
      %v1263 = vsel %vm319, %v1229, 0
      %v1266 = vsel %vm319, %v1231, 0
      %v1269 = vsel %vm319, %v1233, 0
      %v1272 = vsel %vm319, %v1235, 0
      %v1275 = vsel %vm319, %v1237, 0
      %1277 = vmatprep.subr.bf16.mxu0 0
      %1278 = vmatpush1.bf16.msra.mxu0 %v1254
      %1279 = vmatprep.subr.bf16.mxu0 0
      %1280 = vmatpush1.bf16.msra.mxu0 %v1255
      %1281 = vmatprep.subr.bf16.mxu0 0
      %1282 = vmatpush1.bf16.msra.mxu0 %v1256
      %1283 = vmatprep.subr.bf16.mxu0 0
      %1284 = vmatpush1.bf16.msra.mxu0 %v1257
      %1285 = vmatprep.subr.bf16.mxu0 0
      %1286 = vmatpush1.bf16.msra.mxu0 0
      %1287 = vmatprep.subr.bf16.mxu0 0
      %1288 = vmatpush1.bf16.msra.mxu0 0
      %1289 = vmatprep.subr.bf16.mxu0 0
      %1290 = vmatpush1.bf16.msra.mxu0 0
      %1291 = vmatprep.subr.bf16.mxu0 0
      %1292 = vmatpush1.bf16.msra.mxu0 0
      %1293 = vmatprep.subr.bf16.mxu0 0
      %1294 = vmatpush1.bf16.msra.mxu0 0
      %1295 = vmatprep.subr.bf16.mxu0 0
      %1296 = vmatpush1.bf16.msra.mxu0 0
      %1297 = vmatprep.subr.bf16.mxu0 0
      %1298 = vmatpush1.bf16.msra.mxu0 0
      %1299 = vmatprep.subr.bf16.mxu0 0
      %1300 = vmatpush1.bf16.msra.mxu0 0
      %1301 = vmatprep.subr.bf16.mxu0 0
      %1302 = vmatpush1.bf16.msra.mxu0 0
      %1303 = vmatprep.subr.bf16.mxu0 0
      %1304 = vmatpush1.bf16.msra.mxu0 0
      %1305 = vmatprep.subr.bf16.mxu0 0
      %1306 = vmatpush1.bf16.msra.mxu0 0
      %1307 = vmatprep.subr.bf16.mxu0 0
      %1308 = vmatpush1.bf16.msra.mxu0 0
      %1309 = vmatprep.mubr.bf16.mxu0 0
      %1310 = vmatmul.mubr.bf16.gmra.mrb[0].mxu0 %v1263
      %v1311 = vpop.f32.mrb[0].mxu0
      %v1312 = vadd.f32 0.0, %v1311
      %v1313 = vpop.f32.mrb[0].mxu0
      %v1314 = vpop.f32.mrb[0].mxu0
      %v1315 = vadd.f32 0.0, %v1314
      %v1316 = vpop.f32.mrb[0].mxu0
      %1317 = vmatprep.mubr.bf16.mxu0 0
      %1318 = vmatmul.mubr.bf16.gmra.mrb[0].mxu0 %v1266
      %v1319 = vpop.f32.mrb[0].mxu0
      %v1320 = vadd.f32 0.0, %v1319
      %v1321 = vpop.f32.mrb[0].mxu0
      %v1322 = vpop.f32.mrb[0].mxu0
      %v1323 = vadd.f32 0.0, %v1322
      %v1324 = vpop.f32.mrb[0].mxu0
      %1325 = vmatprep.mubr.bf16.mxu0 0
      %1326 = vmatmul.mubr.bf16.gmra.mrb[0].mxu0 %v1269
      %v1327 = vpop.f32.mrb[0].mxu0
      %v1328 = vadd.f32 0.0, %v1327
      %v1329 = vpop.f32.mrb[0].mxu0
      %v1330 = vpop.f32.mrb[0].mxu0
      %v1331 = vadd.f32 0.0, %v1330
      %v1332 = vpop.f32.mrb[0].mxu0
      %1333 = vmatprep.mubr.bf16.mxu0 0
      %1334 = vmatmul.mubr.bf16.gmra.mrb[0].mxu0 %v1272
      %v1335 = vpop.f32.mrb[0].mxu0
      %v1336 = vadd.f32 0.0, %v1335
      %v1337 = vpop.f32.mrb[0].mxu0
      %v1338 = vpop.f32.mrb[0].mxu0
      %v1339 = vadd.f32 0.0, %v1338
      %v1340 = vpop.f32.mrb[0].mxu0
      %1341 = vmatprep.mubr.bf16.mxu0 0
      %1342 = vmatmul.mubr.bf16.gmra.mrb[0].mxu0 %v1275
      %v1343 = vpop.f32.mrb[0].mxu0
      %v1344 = vadd.f32 0.0, %v1343
      %v1345 = vpop.f32.mrb[0].mxu0
      %v1346 = vpop.f32.mrb[0].mxu0
      %v1347 = vadd.f32 0.0, %v1346
      %v1348 = vpop.f32.mrb[0].mxu0
      %1349 = vdwg.mxu0
      %v1350 = vadd.f32 %v1169, %v1312
      %v1351 = vadd.f32 %v1170, %v1315
      %v1352 = vadd.f32 %v1171, %v1320
      %v1353 = vadd.f32 %v1172, %v1323
      %v1354 = vadd.f32 %v1173, %v1328
      %v1355 = vadd.f32 %v1174, %v1331
      %v1356 = vadd.f32 %v1175, %v1336
      %v1357 = vadd.f32 %v1176, %v1339
      %v1358 = vadd.f32 %v1177, %v1344
      %v1359 = vadd.f32 %v1178, %v1347
      %v1360 = vld [vmem:[%s187 + $0x30] sm:$0x7]
      %s1361 = scalar_lea.vmem %s1, 224
      %v1362 = vld [vmem:[%s1361] sm:$0xf]
      %v1363 = vld [vmem:[%s1361 + $0x4] sm:$0xf]
      %v1364 = vld [vmem:[%s1361 + $0x8] sm:$0xf]
      %v1365 = vld [vmem:[%s1361 + $0xc] sm:$0xf]
      %v1366 = vld [vmem:[%s1361 + $0x10] sm:$0xf]
      %v1367 = vld [vmem:[%s1361 + $0x14] sm:$0xf]
      %v1368 = vld [vmem:[%s1361 + $0x18] sm:$0xf]
      %v1369 = vld [vmem:[%s1361 + $0x1c] sm:$0xf]
      %v1371 = vunpack.c.l.b16 %v1360
      %v1372 = vpack.c.b16 %v1371, %v1371
      %vm1373 = vsmask.f32 5376
      %v1375 = vshrl.u32 %v1221, 16
      %v1377 = vrot.slane %v1375, 2
      %v1378 = vshll.u32 %v1221, 16
      %v1380 = vrot.slane %v1378, 3
      %v1381 = vor.u32 %v1377, %v1380
      %v1383 = vshrl.u32 %v1222, 16
      %v1385 = vrot.slane %v1383, 2
      %v1386 = vshll.u32 %v1222, 16
      %v1388 = vrot.slane %v1386, 3
      %v1389 = vor.u32 %v1385, %v1388
      %v1390 = vsel %vm1373, %v1381, %v1389
      %v1392 = vshrl.u32 %v1223, 16
      %v1394 = vrot.slane %v1392, 2
      %v1395 = vshll.u32 %v1223, 16
      %v1397 = vrot.slane %v1395, 3
      %v1398 = vor.u32 %v1394, %v1397
      %v1399 = vsel %vm1373, %v1389, %v1398
      %v1401 = vshrl.u32 %v1224, 16
      %v1403 = vrot.slane %v1401, 2
      %v1404 = vshll.u32 %v1224, 16
      %v1406 = vrot.slane %v1404, 3
      %v1407 = vor.u32 %v1403, %v1406
      %v1408 = vsel %vm1373, %v1398, %v1407
      %v1410 = vshrl.u32 %v1225, 16
      %v1412 = vrot.slane %v1410, 2
      %v1413 = vshll.u32 %v1225, 16
      %v1415 = vrot.slane %v1413, 3
      %v1416 = vor.u32 %v1412, %v1415
      %v1417 = vsel %vm1373, %v1407, %v1416
      %v1419 = vshrl.u32 %v1372, 16
      %v1421 = vrot.slane %v1419, 2
      %v1422 = vshll.u32 %v1372, 16
      %v1424 = vrot.slane %v1422, 3
      %v1425 = vor.u32 %v1421, %v1424
      %v1426 = vsel %vm1373, %v1416, %v1425
      %v1435 = vunpack.c.l.b16 %v1362
      %v1436 = vunpack.c.l.b16 %v1363
      %v1437 = vunpack.c.l.b16 %v1364
      %v1438 = vunpack.c.l.b16 %v1365
      %v1439 = vunpack.c.l.b16 %v1366
      %v1440 = vunpack.c.l.b16 %v1367
      %v1441 = vunpack.c.l.b16 %v1368
      %v1442 = vunpack.c.l.b16 %v1369
      %v1443 = vpack.c.b16 %v1436, %v1435
      %v1444 = vpack.c.b16 %v1438, %v1437
      %v1445 = vpack.c.b16 %v1440, %v1439
      %v1446 = vpack.c.b16 %v1442, %v1441
      %v1452 = vsel %vm319, %v1390, 0
      %v1455 = vsel %vm319, %v1399, 0
      %v1458 = vsel %vm319, %v1408, 0
      %v1461 = vsel %vm319, %v1417, 0
      %v1464 = vsel %vm319, %v1426, 0
      %1466 = vmatprep.subr.bf16.mxu0 0
      %1467 = vmatpush1.bf16.msra.mxu0 %v1443
      %1468 = vmatprep.subr.bf16.mxu0 0
      %1469 = vmatpush1.bf16.msra.mxu0 %v1444
      %1470 = vmatprep.subr.bf16.mxu0 0
      %1471 = vmatpush1.bf16.msra.mxu0 %v1445
      %1472 = vmatprep.subr.bf16.mxu0 0
      %1473 = vmatpush1.bf16.msra.mxu0 %v1446
      %1474 = vmatprep.subr.bf16.mxu0 0
      %1475 = vmatpush1.bf16.msra.mxu0 0
      %1476 = vmatprep.subr.bf16.mxu0 0
      %1477 = vmatpush1.bf16.msra.mxu0 0
      %1478 = vmatprep.subr.bf16.mxu0 0
      %1479 = vmatpush1.bf16.msra.mxu0 0
      %1480 = vmatprep.subr.bf16.mxu0 0
      %1481 = vmatpush1.bf16.msra.mxu0 0
      %1482 = vmatprep.subr.bf16.mxu0 0
      %1483 = vmatpush1.bf16.msra.mxu0 0
      %1484 = vmatprep.subr.bf16.mxu0 0
      %1485 = vmatpush1.bf16.msra.mxu0 0
      %1486 = vmatprep.subr.bf16.mxu0 0
      %1487 = vmatpush1.bf16.msra.mxu0 0
      %1488 = vmatprep.subr.bf16.mxu0 0
      %1489 = vmatpush1.bf16.msra.mxu0 0
      %1490 = vmatprep.subr.bf16.mxu0 0
      %1491 = vmatpush1.bf16.msra.mxu0 0
      %1492 = vmatprep.subr.bf16.mxu0 0
      %1493 = vmatpush1.bf16.msra.mxu0 0
      %1494 = vmatprep.subr.bf16.mxu0 0
      %1495 = vmatpush1.bf16.msra.mxu0 0
      %1496 = vmatprep.subr.bf16.mxu0 0
      %1497 = vmatpush1.bf16.msra.mxu0 0
      %1498 = vmatprep.mubr.bf16.mxu0 0
      %1499 = vmatmul.mubr.bf16.gmra.mrb[0].mxu0 %v1452
      %v1500 = vpop.f32.mrb[0].mxu0
      %v1501 = vadd.f32 0.0, %v1500
      %v1502 = vpop.f32.mrb[0].mxu0
      %v1503 = vpop.f32.mrb[0].mxu0
      %v1504 = vadd.f32 0.0, %v1503
      %v1505 = vpop.f32.mrb[0].mxu0
      %1506 = vmatprep.mubr.bf16.mxu0 0
      %1507 = vmatmul.mubr.bf16.gmra.mrb[0].mxu0 %v1455
      %v1508 = vpop.f32.mrb[0].mxu0
      %v1509 = vadd.f32 0.0, %v1508
      %v1510 = vpop.f32.mrb[0].mxu0
      %v1511 = vpop.f32.mrb[0].mxu0
      %v1512 = vadd.f32 0.0, %v1511
      %v1513 = vpop.f32.mrb[0].mxu0
      %1514 = vmatprep.mubr.bf16.mxu0 0
      %1515 = vmatmul.mubr.bf16.gmra.mrb[0].mxu0 %v1458
      %v1516 = vpop.f32.mrb[0].mxu0
      %v1517 = vadd.f32 0.0, %v1516
      %v1518 = vpop.f32.mrb[0].mxu0
      %v1519 = vpop.f32.mrb[0].mxu0
      %v1520 = vadd.f32 0.0, %v1519
      %v1521 = vpop.f32.mrb[0].mxu0
      %1522 = vmatprep.mubr.bf16.mxu0 0
      %1523 = vmatmul.mubr.bf16.gmra.mrb[0].mxu0 %v1461
      %v1524 = vpop.f32.mrb[0].mxu0
      %v1525 = vadd.f32 0.0, %v1524
      %v1526 = vpop.f32.mrb[0].mxu0
      %v1527 = vpop.f32.mrb[0].mxu0
      %v1528 = vadd.f32 0.0, %v1527
      %v1529 = vpop.f32.mrb[0].mxu0
      %1530 = vmatprep.mubr.bf16.mxu0 0
      %1531 = vmatmul.mubr.bf16.gmra.mrb[0].mxu0 %v1464
      %v1532 = vpop.f32.mrb[0].mxu0
      %v1533 = vadd.f32 0.0, %v1532
      %v1534 = vpop.f32.mrb[0].mxu0
      %v1535 = vpop.f32.mrb[0].mxu0
      %v1536 = vadd.f32 0.0, %v1535
      %v1537 = vpop.f32.mrb[0].mxu0
      %1538 = vdwg.mxu0
      %v1539 = vadd.f32 %v1350, %v1501
      %v1540 = vadd.f32 %v1351, %v1504
      %v1541 = vadd.f32 %v1352, %v1509
      %v1542 = vadd.f32 %v1353, %v1512
      %v1543 = vadd.f32 %v1354, %v1517
      %v1544 = vadd.f32 %v1355, %v1520
      %v1545 = vadd.f32 %v1356, %v1525
      %v1546 = vadd.f32 %v1357, %v1528
      %v1547 = vadd.f32 %v1358, %v1533
      %v1548 = vadd.f32 %v1359, %v1536
      %v1549 = vld [vmem:[%s187 + $0x8] sm:$0x8]
      %s1550 = scalar_lea.vmem %s1, 256
      %v1551 = vld [vmem:[%s1550] sm:$0xf]
      %v1552 = vld [vmem:[%s1550 + $0x4] sm:$0xf]
      %v1553 = vld [vmem:[%s1550 + $0x8] sm:$0xf]
      %v1554 = vld [vmem:[%s1550 + $0xc] sm:$0xf]
      %v1555 = vld [vmem:[%s1550 + $0x10] sm:$0xf]
      %v1556 = vld [vmem:[%s1550 + $0x14] sm:$0xf]
      %v1557 = vld [vmem:[%s1550 + $0x18] sm:$0xf]
      %v1558 = vld [vmem:[%s1550 + $0x1c] sm:$0xf]
      %v1560 = vunpack.c.l.b16 %v1549
      %v1561 = vpack.c.b16 %v1211, %v1560
      %vm1562 = vcmask 1044480
      %v1563 = vrot.slane %v1561, 3
      %v1564 = vrot.slane %v1222, 3
      %v1565 = vsel %vm1562, %v1563, %v1564
      %v1566 = vrot.slane %v1223, 3
      %v1567 = vsel %vm1562, %v1564, %v1566
      %v1568 = vrot.slane %v1224, 3
      %v1569 = vsel %vm1562, %v1566, %v1568
      %v1570 = vrot.slane %v1225, 3
      %v1571 = vsel %vm1562, %v1568, %v1570
      %v1572 = vrot.slane %v1372, 3
      %v1573 = vsel %vm1562, %v1570, %v1572
      %v1582 = vunpack.c.l.b16 %v1551
      %v1583 = vunpack.c.l.b16 %v1552
      %v1584 = vunpack.c.l.b16 %v1553
      %v1585 = vunpack.c.l.b16 %v1554
      %v1586 = vunpack.c.l.b16 %v1555
      %v1587 = vunpack.c.l.b16 %v1556
      %v1588 = vunpack.c.l.b16 %v1557
      %v1589 = vunpack.c.l.b16 %v1558
      %v1590 = vpack.c.b16 %v1583, %v1582
      %v1591 = vpack.c.b16 %v1585, %v1584
      %v1592 = vpack.c.b16 %v1587, %v1586
      %v1593 = vpack.c.b16 %v1589, %v1588
      %v1599 = vsel %vm319, %v1565, 0
      %v1602 = vsel %vm319, %v1567, 0
      %v1605 = vsel %vm319, %v1569, 0
      %v1608 = vsel %vm319, %v1571, 0
      %v1611 = vsel %vm319, %v1573, 0
      %1613 = vmatprep.subr.bf16.mxu0 0
      %1614 = vmatpush1.bf16.msra.mxu0 %v1590
      %1615 = vmatprep.subr.bf16.mxu0 0
      %1616 = vmatpush1.bf16.msra.mxu0 %v1591
      %1617 = vmatprep.subr.bf16.mxu0 0
      %1618 = vmatpush1.bf16.msra.mxu0 %v1592
      %1619 = vmatprep.subr.bf16.mxu0 0
      %1620 = vmatpush1.bf16.msra.mxu0 %v1593
      %1621 = vmatprep.subr.bf16.mxu0 0
      %1622 = vmatpush1.bf16.msra.mxu0 0
      %1623 = vmatprep.subr.bf16.mxu0 0
      %1624 = vmatpush1.bf16.msra.mxu0 0
      %1625 = vmatprep.subr.bf16.mxu0 0
      %1626 = vmatpush1.bf16.msra.mxu0 0
      %1627 = vmatprep.subr.bf16.mxu0 0
      %1628 = vmatpush1.bf16.msra.mxu0 0
      %1629 = vmatprep.subr.bf16.mxu0 0
      %1630 = vmatpush1.bf16.msra.mxu0 0
      %1631 = vmatprep.subr.bf16.mxu0 0
      %1632 = vmatpush1.bf16.msra.mxu0 0
      %1633 = vmatprep.subr.bf16.mxu0 0
      %1634 = vmatpush1.bf16.msra.mxu0 0
      %1635 = vmatprep.subr.bf16.mxu0 0
      %1636 = vmatpush1.bf16.msra.mxu0 0
      %1637 = vmatprep.subr.bf16.mxu0 0
      %1638 = vmatpush1.bf16.msra.mxu0 0
      %1639 = vmatprep.subr.bf16.mxu0 0
      %1640 = vmatpush1.bf16.msra.mxu0 0
      %1641 = vmatprep.subr.bf16.mxu0 0
      %1642 = vmatpush1.bf16.msra.mxu0 0
      %1643 = vmatprep.subr.bf16.mxu0 0
      %1644 = vmatpush1.bf16.msra.mxu0 0
      %1645 = vmatprep.mubr.bf16.mxu0 0
      %1646 = vmatmul.mubr.bf16.gmra.mrb[0].mxu0 %v1599
      %v1647 = vpop.f32.mrb[0].mxu0
      %v1648 = vadd.f32 0.0, %v1647
      %v1649 = vpop.f32.mrb[0].mxu0
      %v1650 = vpop.f32.mrb[0].mxu0
      %v1651 = vadd.f32 0.0, %v1650
      %v1652 = vpop.f32.mrb[0].mxu0
      %1653 = vmatprep.mubr.bf16.mxu0 0
      %1654 = vmatmul.mubr.bf16.gmra.mrb[0].mxu0 %v1602
      %v1655 = vpop.f32.mrb[0].mxu0
      %v1656 = vadd.f32 0.0, %v1655
      %v1657 = vpop.f32.mrb[0].mxu0
      %v1658 = vpop.f32.mrb[0].mxu0
      %v1659 = vadd.f32 0.0, %v1658
      %v1660 = vpop.f32.mrb[0].mxu0
      %1661 = vmatprep.mubr.bf16.mxu0 0
      %1662 = vmatmul.mubr.bf16.gmra.mrb[0].mxu0 %v1605
      %v1663 = vpop.f32.mrb[0].mxu0
      %v1664 = vadd.f32 0.0, %v1663
      %v1665 = vpop.f32.mrb[0].mxu0
      %v1666 = vpop.f32.mrb[0].mxu0
      %v1667 = vadd.f32 0.0, %v1666
      %v1668 = vpop.f32.mrb[0].mxu0
      %1669 = vmatprep.mubr.bf16.mxu0 0
      %1670 = vmatmul.mubr.bf16.gmra.mrb[0].mxu0 %v1608
      %v1671 = vpop.f32.mrb[0].mxu0
      %v1672 = vadd.f32 0.0, %v1671
      %v1673 = vpop.f32.mrb[0].mxu0
      %v1674 = vpop.f32.mrb[0].mxu0
      %v1675 = vadd.f32 0.0, %v1674
      %v1676 = vpop.f32.mrb[0].mxu0
      %1677 = vmatprep.mubr.bf16.mxu0 0
      %1678 = vmatmul.mubr.bf16.gmra.mrb[0].mxu0 %v1611
      %v1679 = vpop.f32.mrb[0].mxu0
      %v1680 = vadd.f32 0.0, %v1679
      %v1681 = vpop.f32.mrb[0].mxu0
      %v1682 = vpop.f32.mrb[0].mxu0
      %v1683 = vadd.f32 0.0, %v1682
      %v1684 = vpop.f32.mrb[0].mxu0
      %1685 = vdwg.mxu0
      %v1686 = vadd.f32 %v1539, %v1648
      %v1687 = vadd.f32 %v1540, %v1651
      %v1688 = vadd.f32 %v1541, %v1656
      %v1689 = vadd.f32 %v1542, %v1659
      %v1690 = vadd.f32 %v1543, %v1664
      %v1691 = vadd.f32 %v1544, %v1667
      %v1692 = vadd.f32 %v1545, %v1672
      %v1693 = vadd.f32 %v1546, %v1675
      %v1694 = vadd.f32 %v1547, %v1680
      %v1695 = vadd.f32 %v1548, %v1683
      %p1696 = scmp.eq.s32.totalorder %s16, 0
      // Predicated region
      $region29: #{resnet_forward.14} parent=27 // pred_check
        %p1697 = pneg %p1696
      $region30: #{resnet_forward.14} parent=27 // pred_check_branch
        %1699 = sbr.rel (%p1697) target = $region32
      $region31: #{resnet_forward.14} parent=27 // pred_region
        %vm1700 = vcmask 516096
        %1701 = vst.msk [vmem:[%s3] sm:$0x1] %vm1700, 0.0
        %1702 = vst.msk [vmem:[%s4] sm:$0x1] %vm1700, 0.0
      $region32: #{resnet_forward.14} parent=27 // pred_fallthru
        _
      %v1703 = vlaneseq
      %v1704 = vshrl.u32 %v1703, 7
      %v1705 = vadd.s32 %v1704, 8
      %v1706 = vadd.s32 %v1704, 16
      %v1707 = vadd.s32 %v1704, 24
      %v1708 = vadd.s32 %v1704, 32
      %v1709 = vadd.s32 %v1704, 40
      %v1710 = vadd.s32 %v1704, 48
      %v1711 = vadd.s32 %v1704, 56
      %v1712 = vadd.s32 %v1704, 64
      %v1713 = vadd.s32 %v1704, 72
      %vm1714 = vcmp.lt.s32.totalorder %v1704, 0
      %v1715 = vsub.s32 0, %v1704
      %v1716 = vsel %vm1714, %v1715, %v1704
      %v1717 = vmul.u32.u64.compose %v1716, 3435973837
      %v1718 = vextract.low.u32 %v1717
      %v1719 = vextract.high.u32 %v1717
      %v1720 = vshrl.u32 %v1719, 3
      %v1721 = vmul.u32 %v1720, 10
      %v1722 = vsub.s32 %v1716, %v1721
      %v1723 = vsub.s32 0, %v1722
      %v1724 = vsel %vm1714, %v1723, %v1722
      %vm1725 = vcmp.lt.s32.totalorder %v1705, 0
      %v1726 = vsub.s32 0, %v1705
      %v1727 = vsel %vm1725, %v1726, %v1705
      %v1728 = vmul.u32.u64.compose %v1727, 3435973837
      %v1729 = vextract.low.u32 %v1728
      %v1730 = vextract.high.u32 %v1728
      %v1731 = vshrl.u32 %v1730, 3
      %v1732 = vmul.u32 %v1731, 10
      %v1733 = vsub.s32 %v1727, %v1732
      %v1734 = vsub.s32 0, %v1733
      %v1735 = vsel %vm1725, %v1734, %v1733
      %vm1736 = vcmp.lt.s32.totalorder %v1706, 0
      %v1737 = vsub.s32 0, %v1706
      %v1738 = vsel %vm1736, %v1737, %v1706
      %v1739 = vmul.u32.u64.compose %v1738, 3435973837
      %v1740 = vextract.low.u32 %v1739
      %v1741 = vextract.high.u32 %v1739
      %v1742 = vshrl.u32 %v1741, 3
      %v1743 = vmul.u32 %v1742, 10
      %v1744 = vsub.s32 %v1738, %v1743
      %v1745 = vsub.s32 0, %v1744
      %v1746 = vsel %vm1736, %v1745, %v1744
      %vm1747 = vcmp.lt.s32.totalorder %v1707, 0
      %v1748 = vsub.s32 0, %v1707
      %v1749 = vsel %vm1747, %v1748, %v1707
      %v1750 = vmul.u32.u64.compose %v1749, 3435973837
      %v1751 = vextract.low.u32 %v1750
      %v1752 = vextract.high.u32 %v1750
      %v1753 = vshrl.u32 %v1752, 3
      %v1754 = vmul.u32 %v1753, 10
      %v1755 = vsub.s32 %v1749, %v1754
      %v1756 = vsub.s32 0, %v1755
      %v1757 = vsel %vm1747, %v1756, %v1755
      %vm1758 = vcmp.lt.s32.totalorder %v1708, 0
      %v1759 = vsub.s32 0, %v1708
      %v1760 = vsel %vm1758, %v1759, %v1708
      %v1761 = vmul.u32.u64.compose %v1760, 3435973837
      %v1762 = vextract.low.u32 %v1761
      %v1763 = vextract.high.u32 %v1761
      %v1764 = vshrl.u32 %v1763, 3
      %v1765 = vmul.u32 %v1764, 10
      %v1766 = vsub.s32 %v1760, %v1765
      %v1767 = vsub.s32 0, %v1766
      %v1768 = vsel %vm1758, %v1767, %v1766
      %vm1769 = vcmp.lt.s32.totalorder %v1709, 0
      %v1770 = vsub.s32 0, %v1709
      %v1771 = vsel %vm1769, %v1770, %v1709
      %v1772 = vmul.u32.u64.compose %v1771, 3435973837
      %v1773 = vextract.low.u32 %v1772
      %v1774 = vextract.high.u32 %v1772
      %v1775 = vshrl.u32 %v1774, 3
      %v1776 = vmul.u32 %v1775, 10
      %v1777 = vsub.s32 %v1771, %v1776
      %v1778 = vsub.s32 0, %v1777
      %v1779 = vsel %vm1769, %v1778, %v1777
      %vm1780 = vcmp.lt.s32.totalorder %v1710, 0
      %v1781 = vsub.s32 0, %v1710
      %v1782 = vsel %vm1780, %v1781, %v1710
      %v1783 = vmul.u32.u64.compose %v1782, 3435973837
      %v1784 = vextract.low.u32 %v1783
      %v1785 = vextract.high.u32 %v1783
      %v1786 = vshrl.u32 %v1785, 3
      %v1787 = vmul.u32 %v1786, 10
      %v1788 = vsub.s32 %v1782, %v1787
      %v1789 = vsub.s32 0, %v1788
      %v1790 = vsel %vm1780, %v1789, %v1788
      %vm1791 = vcmp.lt.s32.totalorder %v1711, 0
      %v1792 = vsub.s32 0, %v1711
      %v1793 = vsel %vm1791, %v1792, %v1711
      %v1794 = vmul.u32.u64.compose %v1793, 3435973837
      %v1795 = vextract.low.u32 %v1794
      %v1796 = vextract.high.u32 %v1794
      %v1797 = vshrl.u32 %v1796, 3
      %v1798 = vmul.u32 %v1797, 10
      %v1799 = vsub.s32 %v1793, %v1798
      %v1800 = vsub.s32 0, %v1799
      %v1801 = vsel %vm1791, %v1800, %v1799
      %vm1802 = vcmp.lt.s32.totalorder %v1712, 0
      %v1803 = vsub.s32 0, %v1712
      %v1804 = vsel %vm1802, %v1803, %v1712
      %v1805 = vmul.u32.u64.compose %v1804, 3435973837
      %v1806 = vextract.low.u32 %v1805
      %v1807 = vextract.high.u32 %v1805
      %v1808 = vshrl.u32 %v1807, 3
      %v1809 = vmul.u32 %v1808, 10
      %v1810 = vsub.s32 %v1804, %v1809
      %v1811 = vsub.s32 0, %v1810
      %v1812 = vsel %vm1802, %v1811, %v1810
      %vm1813 = vcmp.lt.s32.totalorder %v1713, 0
      %v1814 = vsub.s32 0, %v1713
      %v1815 = vsel %vm1813, %v1814, %v1713
      %v1816 = vmul.u32.u64.compose %v1815, 3435973837
      %v1817 = vextract.low.u32 %v1816
      %v1818 = vextract.high.u32 %v1816
      %v1819 = vshrl.u32 %v1818, 3
      %v1820 = vmul.u32 %v1819, 10
      %v1821 = vsub.s32 %v1815, %v1820
      %v1822 = vsub.s32 0, %v1821
      %v1823 = vsel %vm1813, %v1822, %v1821
      %vm1824 = vcmp.ne.s32.totalorder %v1724, 0
      %vm1825 = vcmp.ne.s32.totalorder %v1735, 0
      %vm1826 = vcmp.ne.s32.totalorder %v1746, 0
      %vm1827 = vcmp.ne.s32.totalorder %v1757, 0
      %vm1828 = vcmp.ne.s32.totalorder %v1768, 0
      %vm1829 = vcmp.ne.s32.totalorder %v1779, 0
      %vm1830 = vcmp.ne.s32.totalorder %v1790, 0
      %vm1831 = vcmp.ne.s32.totalorder %v1801, 0
      %vm1832 = vcmp.ne.s32.totalorder %v1812, 0
      %vm1833 = vcmp.ne.s32.totalorder %v1823, 0
      %vm1834 = vcmp.lt.s32.totalorder %v1724, 0
      %vm1835 = vcmp.lt.s32.totalorder %v1735, 0
      %vm1836 = vcmp.lt.s32.totalorder %v1746, 0
      %vm1837 = vcmp.lt.s32.totalorder %v1757, 0
      %vm1838 = vcmp.lt.s32.totalorder %v1768, 0
      %vm1839 = vcmp.lt.s32.totalorder %v1779, 0
      %vm1840 = vcmp.lt.s32.totalorder %v1790, 0
      %vm1841 = vcmp.lt.s32.totalorder %v1801, 0
      %vm1842 = vcmp.lt.s32.totalorder %v1812, 0
      %vm1843 = vcmp.lt.s32.totalorder %v1823, 0
      %vm1844 = vmand %vm1834, %vm1824
      %vm1845 = vmand %vm1835, %vm1825
      %vm1846 = vmand %vm1836, %vm1826
      %vm1847 = vmand %vm1837, %vm1827
      %vm1848 = vmand %vm1838, %vm1828
      %vm1849 = vmand %vm1839, %vm1829
      %vm1850 = vmand %vm1840, %vm1830
      %vm1851 = vmand %vm1841, %vm1831
      %vm1852 = vmand %vm1842, %vm1832
      %vm1853 = vmand %vm1843, %vm1833
      %v1854 = vadd.s32 %v1724, 10
      %v1855 = vadd.s32 %v1735, 10
      %v1856 = vadd.s32 %v1746, 10
      %v1857 = vadd.s32 %v1757, 10
      %v1858 = vadd.s32 %v1768, 10
      %v1859 = vadd.s32 %v1779, 10
      %v1860 = vadd.s32 %v1790, 10
      %v1861 = vadd.s32 %v1801, 10
      %v1862 = vadd.s32 %v1812, 10
      %v1863 = vadd.s32 %v1823, 10
      %v1864 = vsel %vm1844, %v1854, %v1724
      %v1865 = vsel %vm1845, %v1855, %v1735
      %v1866 = vsel %vm1846, %v1856, %v1746
      %v1867 = vsel %vm1847, %v1857, %v1757
      %v1868 = vsel %vm1848, %v1858, %v1768
      %v1869 = vsel %vm1849, %v1859, %v1779
      %v1870 = vsel %vm1850, %v1860, %v1790
      %v1871 = vsel %vm1851, %v1861, %v1801
      %v1872 = vsel %vm1852, %v1862, %v1812
      %v1873 = vsel %vm1853, %v1863, %v1823
      %vm1874 = vcmp.lt.s32.totalorder %v1864, 8
      %vm1875 = vcmp.lt.s32.totalorder %v1865, 8
      %vm1876 = vcmp.lt.s32.totalorder %v1866, 8
      %vm1877 = vcmp.lt.s32.totalorder %v1867, 8
      %vm1878 = vcmp.lt.s32.totalorder %v1868, 8
      %vm1879 = vcmp.lt.s32.totalorder %v1869, 8
      %vm1880 = vcmp.lt.s32.totalorder %v1870, 8
      %vm1881 = vcmp.lt.s32.totalorder %v1871, 8
      %vm1882 = vcmp.lt.s32.totalorder %v1872, 8
      %vm1883 = vcmp.lt.s32.totalorder %v1873, 8
      %v1884 = vld [vmem:[%s3] sm:$0x1]
      %v1885 = vsel %vm1874, 1, 0
      %v1886 = vsel %vm1875, 1, 0
      %v1887 = vsel %vm1876, 1, 0
      %v1888 = vsel %vm1877, 1, 0
      %v1889 = vsel %vm1878, 1, 0
      %v1890 = vsel %vm1879, 1, 0
      %v1891 = vsel %vm1880, 1, 0
      %v1892 = vsel %vm1881, 1, 0
      %v1893 = vsel %vm1882, 1, 0
      %v1894 = vsel %vm1883, 1, 0
      %vm1895 = vcmp.eq.s32.totalorder %v1885, 1
      %vm1896 = vcmp.eq.s32.totalorder %v1886, 1
      %vm1897 = vcmp.eq.s32.totalorder %v1887, 1
      %vm1898 = vcmp.eq.s32.totalorder %v1888, 1
      %vm1899 = vcmp.eq.s32.totalorder %v1889, 1
      %vm1900 = vcmp.eq.s32.totalorder %v1890, 1
      %vm1901 = vcmp.eq.s32.totalorder %v1891, 1
      %vm1902 = vcmp.eq.s32.totalorder %v1892, 1
      %vm1903 = vcmp.eq.s32.totalorder %v1893, 1
      %vm1904 = vcmp.eq.s32.totalorder %v1894, 1
      %v1905 = vsel %vm1895, %v1686, 0.0
      %v1906 = vsel %vm1896, %v1687, 0.0
      %v1907 = vsel %vm1897, %v1688, 0.0
      %v1908 = vsel %vm1898, %v1689, 0.0
      %v1909 = vsel %vm1899, %v1690, 0.0
      %v1910 = vsel %vm1900, %v1691, 0.0
      %v1911 = vsel %vm1901, %v1692, 0.0
      %v1912 = vsel %vm1902, %v1693, 0.0
      %v1913 = vsel %vm1903, %v1694, 0.0
      %v1914 = vsel %vm1904, %v1695, 0.0
      %v1915 = vsel %vm319, %v1905, 0.0
      %v1916 = vsel %vm319, %v1906, 0.0
      %v1917 = vadd.f32 %v1915, %v1916
      %v1918 = vsel %vm319, %v1907, 0.0
      %v1919 = vadd.f32 %v1917, %v1918
      %v1920 = vsel %vm319, %v1908, 0.0
      %v1921 = vadd.f32 %v1919, %v1920
      %v1922 = vsel %vm319, %v1909, 0.0
      %v1923 = vadd.f32 %v1921, %v1922
      %v1924 = vsel %vm319, %v1910, 0.0
      %v1925 = vadd.f32 %v1923, %v1924
      %v1926 = vsel %vm319, %v1911, 0.0
      %v1927 = vadd.f32 %v1925, %v1926
      %v1928 = vsel %vm319, %v1912, 0.0
      %v1929 = vadd.f32 %v1927, %v1928
      %v1930 = vsel %vm319, %v1913, 0.0
      %v1931 = vadd.f32 %v1929, %v1930
      %v1932 = vsel %vm319, %v1914, 0.0
      %v1933 = vadd.f32 %v1931, %v1932
      %v1934 = vrot.slane %v1933, 4
      %v1935 = vadd.f32 %v1933, %v1934
      %v1936 = vrot.slane %v1935, 2
      %v1937 = vadd.f32 %v1935, %v1936
      %v1938 = vrot.slane %v1937, 1
      %v1939 = vadd.f32 %v1937, %v1938
      %v1940 = vadd.f32 %v1884, %v1939
      %vm1941 = vcmask 516096
      %1942 = vst.msk [vmem:[%s3] sm:$0x1] %vm1941, %v1940
      %v1943 = vld [vmem:[%s4] sm:$0x1]
      %v1944 = vmul.f32 %v1686, %v1686
      %v1945 = vmul.f32 %v1687, %v1687
      %v1946 = vmul.f32 %v1688, %v1688
      %v1947 = vmul.f32 %v1689, %v1689
      %v1948 = vmul.f32 %v1690, %v1690
      %v1949 = vmul.f32 %v1691, %v1691
      %v1950 = vmul.f32 %v1692, %v1692
      %v1951 = vmul.f32 %v1693, %v1693
      %v1952 = vmul.f32 %v1694, %v1694
      %v1953 = vmul.f32 %v1695, %v1695
      %v1954 = vsel %vm1895, %v1944, 0.0
      %v1955 = vsel %vm1896, %v1945, 0.0
      %v1956 = vsel %vm1897, %v1946, 0.0
      %v1957 = vsel %vm1898, %v1947, 0.0
      %v1958 = vsel %vm1899, %v1948, 0.0
      %v1959 = vsel %vm1900, %v1949, 0.0
      %v1960 = vsel %vm1901, %v1950, 0.0
      %v1961 = vsel %vm1902, %v1951, 0.0
      %v1962 = vsel %vm1903, %v1952, 0.0
      %v1963 = vsel %vm1904, %v1953, 0.0
      %v1964 = vsel %vm319, %v1954, 0.0
      %v1965 = vsel %vm319, %v1955, 0.0
      %v1966 = vadd.f32 %v1964, %v1965
      %v1967 = vsel %vm319, %v1956, 0.0
      %v1968 = vadd.f32 %v1966, %v1967
      %v1969 = vsel %vm319, %v1957, 0.0
      %v1970 = vadd.f32 %v1968, %v1969
      %v1971 = vsel %vm319, %v1958, 0.0
      %v1972 = vadd.f32 %v1970, %v1971
      %v1973 = vsel %vm319, %v1959, 0.0
      %v1974 = vadd.f32 %v1972, %v1973
      %v1975 = vsel %vm319, %v1960, 0.0
      %v1976 = vadd.f32 %v1974, %v1975
      %v1977 = vsel %vm319, %v1961, 0.0
      %v1978 = vadd.f32 %v1976, %v1977
      %v1979 = vsel %vm319, %v1962, 0.0
      %v1980 = vadd.f32 %v1978, %v1979
      %v1981 = vsel %vm319, %v1963, 0.0
      %v1982 = vadd.f32 %v1980, %v1981
      %v1983 = vrot.slane %v1982, 4
      %v1984 = vadd.f32 %v1982, %v1983
      %v1985 = vrot.slane %v1984, 2
      %v1986 = vadd.f32 %v1984, %v1985
      %v1987 = vrot.slane %v1986, 1
      %v1988 = vadd.f32 %v1986, %v1987
      %v1989 = vadd.f32 %v1943, %v1988
      %1990 = vst.msk [vmem:[%s4] sm:$0x1] %vm1941, %v1989
      %v1991 = vpack.c.bf16 %v1687, %v1686
      %v1992 = vpack.c.bf16 %v1689, %v1688
      %v1993 = vpack.c.bf16 %v1691, %v1690
      %v1994 = vpack.c.bf16 %v1693, %v1692
      %v1995 = vpack.c.bf16 %v1695, %v1694
      %v2001 = vunpack.c.l.b16 %v1991
      %v2002 = vunpack.c.h.b16 %v1991
      %v2003 = vunpack.c.l.b16 %v1992
      %v2004 = vunpack.c.h.b16 %v1992
      %v2005 = vunpack.c.l.b16 %v1993
      %v2006 = vunpack.c.h.b16 %v1993
      %v2007 = vunpack.c.l.b16 %v1994
      %v2008 = vunpack.c.h.b16 %v1994
      %v2009 = vunpack.c.l.b16 %v1995
      %v2010 = vunpack.c.h.b16 %v1995
      %v2011 = vpack.c.b16 %v2001, %v2001
      %v2012 = vpack.c.b16 %v2002, %v2002
      %v2013 = vpack.c.b16 %v2003, %v2003
      %v2014 = vpack.c.b16 %v2004, %v2004
      %v2015 = vpack.c.b16 %v2005, %v2005
      %v2016 = vpack.c.b16 %v2006, %v2006
      %v2017 = vpack.c.b16 %v2007, %v2007
      %v2018 = vpack.c.b16 %v2008, %v2008
      %v2019 = vpack.c.b16 %v2009, %v2009
      %v2020 = vpack.c.b16 %v2010, %v2010
      %vm2031 = vcmask 519168
      %2032 = vst.msk [vmem:[%s192] sm:$0xf] %vm2031, %v2011
      %2033 = vst.msk [vmem:[%s192 + $0x4] sm:$0xf] %vm2031, %v2012
      %2034 = vst.msk [vmem:[%s192 + $0x8] sm:$0xf] %vm2031, %v2013
      %2035 = vst.msk [vmem:[%s192 + $0xc] sm:$0xf] %vm2031, %v2014
      %2036 = vst.msk [vmem:[%s192 + $0x10] sm:$0xf] %vm2031, %v2015
      %2037 = vst.msk [vmem:[%s192 + $0x14] sm:$0xf] %vm2031, %v2016
      %2038 = vst.msk [vmem:[%s192 + $0x18] sm:$0xf] %vm2031, %v2017
      %2039 = vst.msk [vmem:[%s192 + $0x1c] sm:$0xf] %vm2031, %v2018
      %2040 = vst.msk [vmem:[%s192 + $0x20] sm:$0xf] %vm2031, %v2019
      %2041 = vst.msk [vmem:[%s192 + $0x24] sm:$0xf] %vm2031, %v2020
      %p2042 = scmp.lt.s32.totalorder %s16, 1
      %s2043 = scalar_select %p2042, %s16, 1
      %s2044 = smul.addr %s2043, 10
      %s2045 = smul.addr %s2044, 4
      %s2046 = scalar_lea.vmem %s2, %s2045
      // Predicated region
      $region33: #{resnet_forward.14} parent=27 // pred_check
        %p2047 = pneg %p81
      $region34: #{resnet_forward.14} parent=27 // pred_check_branch
        %2049 = sbr.rel (%p2047) target = $region36
      $region35: #{resnet_forward.14} parent=27 // pred_region
        _
      $region36: #{resnet_forward.14} parent=27 // pred_fallthru
        _
      // Predicated region
      $region37: #{resnet_forward.14} parent=27 // pred_check
        %p2050 = pneg %p102
      $region38: #{resnet_forward.14} parent=27 // pred_check_branch
        %2052 = sbr.rel (%p2050) target = $region40
      $region39: #{resnet_forward.14} parent=27 // pred_region
        _
      $region40: #{resnet_forward.14} parent=27 // pred_fallthru
        _
      // Predicated region
      $region41: #{resnet_forward.14} parent=27 // pred_check
        %p2053 = pneg %p123
      $region42: #{resnet_forward.14} parent=27 // pred_check_branch
        %2055 = sbr.rel (%p2053) target = $region44
      $region43: #{resnet_forward.14} parent=27 // pred_region
        _
      $region44: #{resnet_forward.14} parent=27 // pred_fallthru
        _
      // Predicated region
      $region45: #{resnet_forward.14} parent=27 // pred_check
        %p2056 = pneg %p102
      $region46: #{resnet_forward.14} parent=27 // pred_check_branch
        %2058 = sbr.rel (%p2056) target = $region48
      $region47: #{resnet_forward.14} parent=27 // pred_region
        _
      $region48: #{resnet_forward.14} parent=27 // pred_fallthru
        _
      // Predicated region
      $region49: #{resnet_forward.14} parent=27 // pred_check
        %p2059 = pneg %p123
      $region50: #{resnet_forward.14} parent=27 // pred_check_branch
        %2061 = sbr.rel (%p2059) target = $region52
      $region51: #{resnet_forward.14} parent=27 // pred_region
        _
      $region52: #{resnet_forward.14} parent=27 // pred_fallthru
        _
    $region28: #{resnet_forward.14} parent=5 // pred_fallthru
      _
    %p2062 = scmp.le.s32.totalorder 2, %s11
    // Predicated region
    $region53: #{resnet_forward.14} parent=5 // pred_check
      %p2063 = pneg %p2062
    $region54: #{resnet_forward.14} parent=5 // pred_check_branch
      %2065 = sbr.rel (%p2063) target = $region56
    $region55: #{resnet_forward.14} parent=5 // pred_region
      %s2066 = ssub.s32 %s11, 2
      // Predicated region
      $region57: #{resnet_forward.14} parent=55 // pred_check
        %p2067 = pneg %p87
      $region58: #{resnet_forward.14} parent=55 // pred_check_branch
        %2069 = sbr.rel (%p2067) target = $region60
      $region59: #{resnet_forward.14} parent=55 // pred_region
        %p2070 = scmp.lt.s32.totalorder %s17, 1
        %s2071 = scalar_select %p2070, %s17, 1
        %s2072 = smul.addr %s2071, 10
        %s2073 = smul.addr %s2072, 4
        %s2074 = scalar_lea.vmem %s2, %s2073
      $region60: #{resnet_forward.14} parent=55 // pred_fallthru
        _
    $region56: #{resnet_forward.14} parent=5 // pred_fallthru
      _
  $region6: #{resnet_forward.14} parent=0 // loop_footer
    %s15 = sadd.s32 1, %s11
  $region7: #{resnet_forward.14} parent=0 // loop_footer_branch
    %10 = sbr.rel target = $region3
  $region8: #{resnet_forward.14} parent=0 // loop_exit
    _

</llo_original>
